<compile_context>
chip_gen: v7x
topology: tpu7x:2x2x1
jax: 0.10.0
libtpu: 0.0.40
codegen_flags: <defaults>
</compile_context>

<pallas_src>
from functools import partial

import jax
import jax.numpy as jnp
from jax.experimental import pallas as pl
from jax.experimental.pallas import tpu as pltpu

# ---- module hyperparameters (structure mirrors the PyTorch module) ----------
CLASS_NUM = 7
EMBED_DIM = 128            # 768 in the original module (scaled down)
FILTER_LAYER_NUM = 6
IS_BIDIRECTIONAL = True
LSTM_HIDDEN = 128          # 768 in the original module (scaled down)
LSTM_LAYERS = 6
NUM_DIR = 2 if IS_BIDIRECTIONAL else 1

SEQ_LEN = 8
BATCH = 2

assert IS_BIDIRECTIONAL, "this script implements the bidirectional configuration"
# Layer-0 input occupies the "forward half" of the 2H-wide layer input
# (true for both the scaled-down and the original 768/768 configuration).
assert EMBED_DIM == LSTM_HIDDEN


# ------------------------------- Pallas kernel -------------------------------
def lstm_layer_kernel(x_ref, w_ih_ref, w_hh_ref, b_ref, w_cls_ref, out_ref,
                      xs_f_ref, xs_b_ref, gates_ref, feat_ref,
                      *, seq_len, batch, hidden, layers, filt, classes):
    """One bidirectional LSTM layer per grid step; classifier on the last step.

    Grid: (layers,)  -- layer weights are streamed per grid step.
      x_ref     : (S*B, H)        f32  layer-0 input (resident, constant index)
      w_ih_ref  : (1, 2H, 8H)     bf16 [fwd|bwd] input->gate weights of layer l
      w_hh_ref  : (1, 2, H, 4H)   bf16 hidden->gate weights of layer l
      b_ref     : (1, 1, 8H)      f32  fused b_ih+b_hh of layer l, [fwd|bwd]
      w_cls_ref : (F*2, H, C)     bf16 classifier weight, one H-block per h_n slot
      out_ref   : (B, C)          f32  softmax probabilities
    Scratch (persist across grid steps):
      xs_f_ref  : (S*B, H) f32  current layer input / output, forward half
      xs_b_ref  : (S*B, H) f32  current layer input / output, backward half
      gates_ref : (S*B, 8H) f32 hoisted gate pre-activations for both directions
      feat_ref  : (2L, B, H) f32 final hidden states, PyTorch h_n ordering
    """
    H, B, S = hidden, batch, seq_len
    l = pl.program_id(0)

    # ---- layer-0 input: embeddings in the fwd half, zeros in the bwd half ----
    @pl.when(l == 0)
    def _():
        xs_f_ref[...] = x_ref[...]
        xs_b_ref[...] = jnp.zeros_like(xs_b_ref)

    # ---- hoisted input projection (both directions, all timesteps at once) ---
    # gates = [x_fwd | x_bwd] @ [[W_ih_fwd | W_ih_bwd]] + (b_ih + b_hh)
    # K is split into the two directional halves of the layer input, so no
    # per-timestep lane concatenation is ever materialized.
    x_f = xs_f_ref[...].astype(jnp.bfloat16)          # (S*B, H)
    x_b = xs_b_ref[...].astype(jnp.bfloat16)          # (S*B, H)
    w_in = w_ih_ref[0]                                # (2H, 8H) bf16
    gates_ref[...] = (
        jnp.dot(x_f, w_in[:H, :], preferred_element_type=jnp.float32)
        + jnp.dot(x_b, w_in[H:, :], preferred_element_type=jnp.float32)
        + b_ref[0])                                   # (S*B, 8H) f32

    # ---- recurrent chains: fwd and bwd interleaved (independent carries) -----
    w_hh_f = w_hh_ref[0, 0]                           # (H, 4H) bf16
    w_hh_b = w_hh_ref[0, 1]

    h_f = jnp.zeros((B, H), jnp.float32)
    c_f = jnp.zeros((B, H), jnp.float32)
    h_b = jnp.zeros((B, H), jnp.float32)
    c_b = jnp.zeros((B, H), jnp.float32)

    def cell(g, c):  # gate order i, f, g, o (PyTorch); all elementwise in f32
        i_g = jax.nn.sigmoid(g[:, 0 * H:1 * H])
        f_g = jax.nn.sigmoid(g[:, 1 * H:2 * H])
        g_g = jnp.tanh(g[:, 2 * H:3 * H])
        o_g = jax.nn.sigmoid(g[:, 3 * H:4 * H])
        c_new = f_g * c + i_g * g_g
        h_new = o_g * jnp.tanh(c_new)
        return h_new, c_new

    for t in range(S):
        tb = S - 1 - t
        # two independent recurrent dots issued back-to-back
        g_f = gates_ref[pl.ds(t * B, B), 0:4 * H] + jnp.dot(
            h_f.astype(jnp.bfloat16), w_hh_f, preferred_element_type=jnp.float32)
        g_b = gates_ref[pl.ds(tb * B, B), 4 * H:8 * H] + jnp.dot(
            h_b.astype(jnp.bfloat16), w_hh_b, preferred_element_type=jnp.float32)
        h_f, c_f = cell(g_f, c_f)
        h_b, c_b = cell(g_b, c_b)
        # next layer's input halves (overwriting is safe: gates are precomputed)
        xs_f_ref[pl.ds(t * B, B), :] = h_f
        xs_b_ref[pl.ds(tb * B, B), :] = h_b

    # final hidden states, PyTorch h_n ordering: h_n[2l]=fwd, h_n[2l+1]=bwd
    feat_ref[2 * l] = h_f
    feat_ref[2 * l + 1] = h_b

    # ---- classifier + softmax, only on the last layer ------------------------
    @pl.when(l == layers - 1)
    def _():
        acc = jnp.zeros((B, classes), jnp.float32)
        for j in range(filt * 2):
            acc = acc + jnp.dot(
                feat_ref[(layers - filt) * 2 + j].astype(jnp.bfloat16),
                w_cls_ref[j], preferred_element_type=jnp.float32)
        m = jnp.max(acc, axis=1, keepdims=True)
        e = jnp.exp(acc - m)
        out_ref[...] = e / jnp.sum(e, axis=1, keepdims=True)


# ------------------- one-time parameter re-layout (load time) ----------------
def prepare_params(w_ih, w_hh, b_ih, b_hh, w_cls):
    """PyTorch-layout params -> kernel layout. Call once, outside the jit path."""
    H = LSTM_HIDDEN
    w_ih_t = jnp.transpose(w_ih, (0, 1, 3, 2))                          # (L,D,2H,4H)
    w_ih_all = jnp.concatenate([w_ih_t[:, 0], w_ih_t[:, 1]], axis=-1)   # (L,2H,8H)
    w_hh_all = jnp.transpose(w_hh, (0, 1, 3, 2))                        # (L,D,H,4H)
    b = b_ih + b_hh                                                     # (L,D,4H)
    b_all = jnp.concatenate([b[:, 0], b[:, 1]], axis=-1)[:, None, :]    # (L,1,8H)
    w_cls_r = w_cls.T.reshape(FILTER_LAYER_NUM * NUM_DIR, H, CLASS_NUM)  # (F*2,H,C)
    return (w_ih_all.astype(jnp.bfloat16),
            w_hh_all.astype(jnp.bfloat16),
            b_all.astype(jnp.float32),
            w_cls_r.astype(jnp.bfloat16))


# --------------------------------- wrapper -----------------------------------
@jax.jit
def lstm_model_forward(x, w_ih_all, w_hh_all, b_all, w_cls_r):
    S, B, E = x.shape
    H, L, F, C = LSTM_HIDDEN, LSTM_LAYERS, FILTER_LAYER_NUM, CLASS_NUM
    x_flat = x.reshape(S * B, E).astype(jnp.float32)

    kernel = partial(lstm_layer_kernel, seq_len=S, batch=B, hidden=H,
                     layers=L, filt=F, classes=C)

    grid_spec = pltpu.PrefetchScalarGridSpec(
        num_scalar_prefetch=0,
        grid=(L,),
        in_specs=[
            pl.BlockSpec((S * B, H), lambda l: (0, 0)),               # layer-0 input
            pl.BlockSpec((1, 2 * H, 8 * H), lambda l: (l, 0, 0)),     # w_ih, streamed
            pl.BlockSpec((1, 2, H, 4 * H), lambda l: (l, 0, 0, 0)),   # w_hh, streamed
            pl.BlockSpec((1, 1, 8 * H), lambda l: (l, 0, 0)),         # bias, streamed
            pl.BlockSpec((F * 2, H, C), lambda l: (0, 0, 0)),         # classifier W
        ],
        out_specs=pl.BlockSpec((B, C), lambda l: (0, 0)),
        scratch_shapes=[
            pltpu.VMEM((S * B, H), jnp.float32),       # fwd layer input/output
            pltpu.VMEM((S * B, H), jnp.float32),       # bwd layer input/output
            pltpu.VMEM((S * B, 8 * H), jnp.float32),   # hoisted gate pre-activations
            pltpu.VMEM((2 * L, B, H), jnp.float32),    # h_n finals
        ],
    )
    # Note: at full size (H=768) the streamed per-layer weight blocks are ~19 MB
    # bf16; set vmem_limit_bytes (<= 48 MiB on v7x) and/or pipeline_mode=
    # pl.Buffered(1) on the weight specs if the default scoped VMEM is exceeded.
    return pl.pallas_call(
        kernel,
        out_shape=jax.ShapeDtypeStruct((B, C), jnp.float32),
        grid_spec=grid_spec,
        compiler_params=pltpu.CompilerParams(dimension_semantics=("arbitrary",)),
    )(x_flat, w_ih_all, w_hh_all, b_all, w_cls_r)


# ------------------------- deterministic parameter init ----------------------
def init_params(key):
    H = LSTM_HIDDEN
    DIN = NUM_DIR * H
    k = 1.0 / float(jnp.sqrt(jnp.float32(H)))
    keys = jax.random.split(key, 5)
    # Stacked LSTM weights; layer 0's true input width is EMBED_DIM (the extra
    # columns are zeroed and only ever multiplied by zero inputs in the kernel).
    w_ih = jax.random.uniform(keys[0], (LSTM_LAYERS, NUM_DIR, 4 * H, DIN),
                              jnp.float32, -k, k)
    col_mask0 = (jnp.arange(DIN)[None, :] < EMBED_DIM).astype(jnp.float32)
    w_ih = w_ih.at[0].multiply(col_mask0)
    w_hh = jax.random.uniform(keys[1], (LSTM_LAYERS, NUM_DIR, 4 * H, H),
                              jnp.float32, -k, k)
    b_ih = jax.random.uniform(keys[2], (LSTM_LAYERS, NUM_DIR, 4 * H),
                              jnp.float32, -k, k)
    b_hh = jax.random.uniform(keys[3], (LSTM_LAYERS, NUM_DIR, 4 * H),
                              jnp.float32, -k, k)
    in_feat = H * FILTER_LAYER_NUM * NUM_DIR
    kc = 1.0 / float(jnp.sqrt(jnp.float32(in_feat)))
    w_cls = jax.random.uniform(keys[4], (CLASS_NUM, in_feat), jnp.float32, -kc, kc)
    return w_ih, w_hh, b_ih, b_hh, w_cls


# --------------------------- pure-JAX reference check -------------------------
def reference_forward(x, w_ih, w_hh, b_ih, b_hh, w_cls):
    S, B, E = x.shape
    H = LSTM_HIDDEN

    def bdot(a, b):  # same arithmetic as the kernel: bf16 inputs, f32 accumulate
        return jnp.dot(a.astype(jnp.bfloat16), b.astype(jnp.bfloat16),
                       preferred_element_type=jnp.float32)

    inp = x.astype(jnp.float32)
    finals = []
    for l in range(LSTM_LAYERS):
        in_w = E if l == 0 else NUM_DIR * H
        layer_outs = []
        for d in range(NUM_DIR):
            W_ih = w_ih[l, d, :, :in_w]
            W_hh = w_hh[l, d]
            bias = b_ih[l, d] + b_hh[l, d]
            h = jnp.zeros((B, H), jnp.float32)
            c = jnp.zeros((B, H), jnp.float32)
            out_d = [None] * S
            for t in (range(S) if d == 0 else range(S - 1, -1, -1)):
                g = bdot(inp[t], W_ih.T) + bdot(h, W_hh.T) + bias
                i = jax.nn.sigmoid(g[:, :H])
                f = jax.nn.sigmoid(g[:, H:2 * H])
                gg = jnp.tanh(g[:, 2 * H:3 * H])
                o = jax.nn.sigmoid(g[:, 3 * H:])
                c = f * c + i * gg
                h = o * jnp.tanh(c)
                out_d[t] = h
            layer_outs.append(jnp.stack(out_d, axis=0))
            finals.append(h)
        inp = jnp.concatenate(layer_outs, axis=-1)
    sel = finals[(LSTM_LAYERS - FILTER_LAYER_NUM) * NUM_DIR:]
    feat = jnp.concatenate(sel, axis=-1)
    logits = bdot(feat, w_cls.T)
    return jax.nn.softmax(logits, axis=1)


if __name__ == "__main__":
    key = jax.random.PRNGKey(0)
    kx, kp = jax.random.split(key)
    x = jax.random.normal(kx, (SEQ_LEN, BATCH, EMBED_DIM), jnp.float32)
    params = init_params(kp)

    packed = prepare_params(*params)          # one-time weight re-layout
    packed = tuple(jax.block_until_ready(p) for p in packed)

    out = lstm_model_forward(x, *packed)
    out = jax.block_until_ready(out)

    ref = reference_forward(x, *params)
    assert out.shape == (BATCH, CLASS_NUM), out.shape
    assert bool(jnp.all(jnp.abs(jnp.sum(out, axis=1) - 1.0) < 1e-4))
    # bf16 matmul inputs (f32 accumulation) in both kernel and reference.
    assert bool(jnp.allclose(out, ref, rtol=2e-3, atol=2e-4)), (out, ref)
    print("KERNEL_OK")
</pallas_src>

<mosaic_0001>
module attributes {stable_mosaic.version = 11 : i64} {
  func.func @lstm_layer_kernel(%arg0: i32, %arg1: memref<16x128xf32, #tpu.memory_space<vmem>>, %arg2: memref<1x256x1024xbf16, #tpu.memory_space<vmem>>, %arg3: memref<1x2x128x512xbf16, #tpu.memory_space<vmem>>, %arg4: memref<1x1x1024xf32, #tpu.memory_space<vmem>>, %arg5: memref<12x128x7xbf16, #tpu.memory_space<vmem>>, %arg6: memref<2x7xf32, #tpu.memory_space<vmem>>, %arg7: memref<16x128xf32, #tpu.memory_space<vmem>>, %arg8: memref<16x128xf32, #tpu.memory_space<vmem>>, %arg9: memref<16x1024xf32, #tpu.memory_space<vmem>>, %arg10: memref<12x2x128xf32, #tpu.memory_space<vmem>>) attributes {dimension_semantics = [#tpu.dimension_semantics<arbitrary>], iteration_bounds = array<i64: 6>, scalar_prefetch = 0 : i64, scratch_operands = 4 : i64, tpu.core_type = #tpu.core_type<tc>, window_params = [{pipeline_mode = #tpu.pipeline_mode<synchronous>, transform_indices = @transform_0, window_bounds = array<i64: 16, 128>}, {transform_indices = @transform_1, window_bounds = array<i64: 1, 256, 1024>}, {transform_indices = @transform_2, window_bounds = array<i64: 1, 2, 128, 512>}, {transform_indices = @transform_3, window_bounds = array<i64: 1, 1, 1024>}, {pipeline_mode = #tpu.pipeline_mode<synchronous>, transform_indices = @transform_4, window_bounds = array<i64: 12, 128, 7>}, {pipeline_mode = #tpu.pipeline_mode<synchronous>, transform_indices = @transform_5, window_bounds = array<i64: 2, 7>}]} {
    %c0_i32 = arith.constant 0 : i32
    %0 = arith.cmpi eq, %arg0, %c0_i32 : i32
    %1 = arith.extui %0 : i1 to i32
    %c0_i32_0 = arith.constant 0 : i32
    %2 = arith.cmpi ne, %1, %c0_i32_0 : i32
    scf.if %2 {
      %c0_150 = arith.constant 0 : index
      %c0_151 = arith.constant 0 : index
      %521 = vector.load %arg1[%c0_150, %c0_151] : memref<16x128xf32, #tpu.memory_space<vmem>>, vector<16x128xf32>
      %c0_152 = arith.constant 0 : index
      %c0_153 = arith.constant 0 : index
      %522 = vector.load %arg7[%c0_152, %c0_153] : memref<16x128xf32, #tpu.memory_space<vmem>>, vector<16x128xf32>
      tpu.vector_store %arg7[%c0_152, %c0_153], %521 {strides = array<i32>} : memref<16x128xf32, #tpu.memory_space<vmem>>, vector<16x128xf32>,
      %cst_154 = arith.constant 0.000000e+00 : f32
      %523 = vector.broadcast %cst_154 : f32 to vector<16x128xf32>
      %c0_155 = arith.constant 0 : index
      %c0_156 = arith.constant 0 : index
      %524 = vector.load %arg8[%c0_155, %c0_156] : memref<16x128xf32, #tpu.memory_space<vmem>>, vector<16x128xf32>
      tpu.vector_store %arg8[%c0_155, %c0_156], %523 {strides = array<i32>} : memref<16x128xf32, #tpu.memory_space<vmem>>, vector<16x128xf32>,
    } else {
    }
    %c0 = arith.constant 0 : index
    %c0_1 = arith.constant 0 : index
    %3 = vector.load %arg7[%c0, %c0_1] : memref<16x128xf32, #tpu.memory_space<vmem>>, vector<16x128xf32>
    %4 = arith.truncf %3 : vector<16x128xf32> to vector<16x128xbf16>
    %c0_2 = arith.constant 0 : index
    %c0_3 = arith.constant 0 : index
    %5 = vector.load %arg8[%c0_2, %c0_3] : memref<16x128xf32, #tpu.memory_space<vmem>>, vector<16x128xf32>
    %6 = arith.truncf %5 : vector<16x128xf32> to vector<16x128xbf16>
    %c0_4 = arith.constant 0 : index
    %c0_5 = arith.constant 0 : index
    %c0_6 = arith.constant 0 : index
    %7 = vector.load %arg2[%c0_4, %c0_5, %c0_6] : memref<1x256x1024xbf16, #tpu.memory_space<vmem>>, vector<1x256x1024xbf16>
    %8 = vector.shape_cast %7 : vector<1x256x1024xbf16> to vector<256x1024xbf16>
    %9 = vector.extract_strided_slice %8 {offsets = [0, 0], sizes = [128, 1024], strides = [1, 1]} : vector<256x1024xbf16> to vector<128x1024xbf16>
    %cst = arith.constant dense<0.000000e+00> : vector<16x1024xf32>
    %10 = tpu.matmul %4, %9, %cst {dimension_numbers = #tpu.dot_dimension_numbers<[1], [0], [0], [1], [0, 0, 1, 1], [], []>} : vector<16x128xbf16>, vector<128x1024xbf16>, vector<16x1024xf32> -> vector<16x1024xf32>
    %11 = vector.extract_strided_slice %8 {offsets = [128, 0], sizes = [128, 1024], strides = [1, 1]} : vector<256x1024xbf16> to vector<128x1024xbf16>
    %cst_7 = arith.constant dense<0.000000e+00> : vector<16x1024xf32>
    %12 = tpu.matmul %6, %11, %cst_7 {dimension_numbers = #tpu.dot_dimension_numbers<[1], [0], [0], [1], [0, 0, 1, 1], [], []>} : vector<16x128xbf16>, vector<128x1024xbf16>, vector<16x1024xf32> -> vector<16x1024xf32>
    %13 = arith.addf %10, %12 : vector<16x1024xf32>
    %c0_8 = arith.constant 0 : index
    %c0_9 = arith.constant 0 : index
    %c0_10 = arith.constant 0 : index
    %14 = vector.load %arg4[%c0_8, %c0_9, %c0_10] : memref<1x1x1024xf32, #tpu.memory_space<vmem>>, vector<1x1x1024xf32>
    %15 = vector.shape_cast %14 : vector<1x1x1024xf32> to vector<1x1024xf32>
    %16 = vector.broadcast %15 : vector<1x1024xf32> to vector<16x1024xf32>
    %17 = arith.addf %13, %16 : vector<16x1024xf32>
    %c0_11 = arith.constant 0 : index
    %c0_12 = arith.constant 0 : index
    %18 = vector.load %arg9[%c0_11, %c0_12] : memref<16x1024xf32, #tpu.memory_space<vmem>>, vector<16x1024xf32>
    tpu.vector_store %arg9[%c0_11, %c0_12], %17 {strides = array<i32>} : memref<16x1024xf32, #tpu.memory_space<vmem>>, vector<16x1024xf32>,
    %c0_13 = arith.constant 0 : index
    %c0_14 = arith.constant 0 : index
    %c0_15 = arith.constant 0 : index
    %c0_16 = arith.constant 0 : index
    %19 = vector.load %arg3[%c0_13, %c0_14, %c0_15, %c0_16] : memref<1x2x128x512xbf16, #tpu.memory_space<vmem>>, vector<1x1x128x512xbf16>
    %20 = vector.shape_cast %19 : vector<1x1x128x512xbf16> to vector<128x512xbf16>
    %c0_17 = arith.constant 0 : index
    %c1 = arith.constant 1 : index
    %c0_18 = arith.constant 0 : index
    %c0_19 = arith.constant 0 : index
    %21 = vector.load %arg3[%c0_17, %c1, %c0_18, %c0_19] : memref<1x2x128x512xbf16, #tpu.memory_space<vmem>>, vector<1x1x128x512xbf16>
    %22 = vector.shape_cast %21 : vector<1x1x128x512xbf16> to vector<128x512xbf16>
    %cst_20 = arith.constant 0.000000e+00 : f32
    %23 = vector.broadcast %cst_20 : f32 to vector<2x128xf32>
    %cst_21 = arith.constant 0.000000e+00 : f32
    %24 = vector.broadcast %cst_21 : f32 to vector<2x128xf32>
    %cst_22 = arith.constant 0.000000e+00 : f32
    %25 = vector.broadcast %cst_22 : f32 to vector<2x128xf32>
    %cst_23 = arith.constant 0.000000e+00 : f32
    %26 = vector.broadcast %cst_23 : f32 to vector<2x128xf32>
    %c0_24 = arith.constant 0 : index
    %c0_25 = arith.constant 0 : index
    %27 = vector.load %arg9[%c0_24, %c0_25] : memref<16x1024xf32, #tpu.memory_space<vmem>>, vector<2x512xf32>
    %28 = arith.truncf %23 : vector<2x128xf32> to vector<2x128xbf16>
    %cst_26 = arith.constant dense<0.000000e+00> : vector<2x512xf32>
    %29 = tpu.matmul %28, %20, %cst_26 {dimension_numbers = #tpu.dot_dimension_numbers<[1], [0], [0], [1], [0, 0, 1, 1], [], []>} : vector<2x128xbf16>, vector<128x512xbf16>, vector<2x512xf32> -> vector<2x512xf32>
    %30 = arith.addf %27, %29 : vector<2x512xf32>
    %c14 = arith.constant 14 : index
    %c512 = arith.constant 512 : index
    %31 = vector.load %arg9[%c14, %c512] : memref<16x1024xf32, #tpu.memory_space<vmem>>, vector<2x512xf32>
    %32 = arith.truncf %25 : vector<2x128xf32> to vector<2x128xbf16>
    %cst_27 = arith.constant dense<0.000000e+00> : vector<2x512xf32>
    %33 = tpu.matmul %32, %22, %cst_27 {dimension_numbers = #tpu.dot_dimension_numbers<[1], [0], [0], [1], [0, 0, 1, 1], [], []>} : vector<2x128xbf16>, vector<128x512xbf16>, vector<2x512xf32> -> vector<2x512xf32>
    %34 = arith.addf %31, %33 : vector<2x512xf32>
    %35 = vector.extract_strided_slice %30 {offsets = [0, 0], sizes = [2, 128], strides = [1, 1]} : vector<2x512xf32> to vector<2x128xf32>
    %36 = arith.negf %35 : vector<2x128xf32>
    %37 = math.exp %36 : vector<2x128xf32>
    %cst_28 = arith.constant 1.000000e+00 : f32
    %38 = vector.broadcast %cst_28 : f32 to vector<2x128xf32>
    %39 = arith.addf %38, %37 : vector<2x128xf32>
    %40 = arith.divf %38, %39 : vector<2x128xf32>
    %41 = vector.extract_strided_slice %30 {offsets = [0, 128], sizes = [2, 128], strides = [1, 1]} : vector<2x512xf32> to vector<2x128xf32>
    %42 = arith.negf %41 : vector<2x128xf32>
    %43 = math.exp %42 : vector<2x128xf32>
    %cst_29 = arith.constant 1.000000e+00 : f32
    %44 = vector.broadcast %cst_29 : f32 to vector<2x128xf32>
    %45 = arith.addf %44, %43 : vector<2x128xf32>
    %46 = arith.divf %44, %45 : vector<2x128xf32>
    %47 = vector.extract_strided_slice %30 {offsets = [0, 256], sizes = [2, 128], strides = [1, 1]} : vector<2x512xf32> to vector<2x128xf32>
    %48 = math.tanh %47 : vector<2x128xf32>
    %49 = vector.extract_strided_slice %30 {offsets = [0, 384], sizes = [2, 128], strides = [1, 1]} : vector<2x512xf32> to vector<2x128xf32>
    %50 = arith.negf %49 : vector<2x128xf32>
    %51 = math.exp %50 : vector<2x128xf32>
    %cst_30 = arith.constant 1.000000e+00 : f32
    %52 = vector.broadcast %cst_30 : f32 to vector<2x128xf32>
    %53 = arith.addf %52, %51 : vector<2x128xf32>
    %54 = arith.divf %52, %53 : vector<2x128xf32>
    %55 = arith.mulf %46, %24 : vector<2x128xf32>
    %56 = arith.mulf %40, %48 : vector<2x128xf32>
    %57 = arith.addf %55, %56 : vector<2x128xf32>
    %58 = math.tanh %57 : vector<2x128xf32>
    %59 = arith.mulf %54, %58 : vector<2x128xf32>
    %60 = vector.extract_strided_slice %34 {offsets = [0, 0], sizes = [2, 128], strides = [1, 1]} : vector<2x512xf32> to vector<2x128xf32>
    %61 = arith.negf %60 : vector<2x128xf32>
    %62 = math.exp %61 : vector<2x128xf32>
    %cst_31 = arith.constant 1.000000e+00 : f32
    %63 = vector.broadcast %cst_31 : f32 to vector<2x128xf32>
    %64 = arith.addf %63, %62 : vector<2x128xf32>
    %65 = arith.divf %63, %64 : vector<2x128xf32>
    %66 = vector.extract_strided_slice %34 {offsets = [0, 128], sizes = [2, 128], strides = [1, 1]} : vector<2x512xf32> to vector<2x128xf32>
    %67 = arith.negf %66 : vector<2x128xf32>
    %68 = math.exp %67 : vector<2x128xf32>
    %cst_32 = arith.constant 1.000000e+00 : f32
    %69 = vector.broadcast %cst_32 : f32 to vector<2x128xf32>
    %70 = arith.addf %69, %68 : vector<2x128xf32>
    %71 = arith.divf %69, %70 : vector<2x128xf32>
    %72 = vector.extract_strided_slice %34 {offsets = [0, 256], sizes = [2, 128], strides = [1, 1]} : vector<2x512xf32> to vector<2x128xf32>
    %73 = math.tanh %72 : vector<2x128xf32>
    %74 = vector.extract_strided_slice %34 {offsets = [0, 384], sizes = [2, 128], strides = [1, 1]} : vector<2x512xf32> to vector<2x128xf32>
    %75 = arith.negf %74 : vector<2x128xf32>
    %76 = math.exp %75 : vector<2x128xf32>
    %cst_33 = arith.constant 1.000000e+00 : f32
    %77 = vector.broadcast %cst_33 : f32 to vector<2x128xf32>
    %78 = arith.addf %77, %76 : vector<2x128xf32>
    %79 = arith.divf %77, %78 : vector<2x128xf32>
    %80 = arith.mulf %71, %26 : vector<2x128xf32>
    %81 = arith.mulf %65, %73 : vector<2x128xf32>
    %82 = arith.addf %80, %81 : vector<2x128xf32>
    %83 = math.tanh %82 : vector<2x128xf32>
    %84 = arith.mulf %79, %83 : vector<2x128xf32>
    %c0_34 = arith.constant 0 : index
    %c0_35 = arith.constant 0 : index
    %85 = vector.load %arg7[%c0_34, %c0_35] : memref<16x128xf32, #tpu.memory_space<vmem>>, vector<2x128xf32>
    tpu.vector_store %arg7[%c0_34, %c0_35], %59 {strides = array<i32>} : memref<16x128xf32, #tpu.memory_space<vmem>>, vector<2x128xf32>,
    %c14_36 = arith.constant 14 : index
    %c0_37 = arith.constant 0 : index
    %86 = vector.load %arg8[%c14_36, %c0_37] : memref<16x128xf32, #tpu.memory_space<vmem>>, vector<2x128xf32>
    tpu.vector_store %arg8[%c14_36, %c0_37], %84 {strides = array<i32>} : memref<16x128xf32, #tpu.memory_space<vmem>>, vector<2x128xf32>,
    %c2 = arith.constant 2 : index
    %c0_38 = arith.constant 0 : index
    %87 = vector.load %arg9[%c2, %c0_38] : memref<16x1024xf32, #tpu.memory_space<vmem>>, vector<2x512xf32>
    %88 = arith.truncf %59 : vector<2x128xf32> to vector<2x128xbf16>
    %cst_39 = arith.constant dense<0.000000e+00> : vector<2x512xf32>
    %89 = tpu.matmul %88, %20, %cst_39 {dimension_numbers = #tpu.dot_dimension_numbers<[1], [0], [0], [1], [0, 0, 1, 1], [], []>} : vector<2x128xbf16>, vector<128x512xbf16>, vector<2x512xf32> -> vector<2x512xf32>
    %90 = arith.addf %87, %89 : vector<2x512xf32>
    %c12 = arith.constant 12 : index
    %c512_40 = arith.constant 512 : index
    %91 = vector.load %arg9[%c12, %c512_40] : memref<16x1024xf32, #tpu.memory_space<vmem>>, vector<2x512xf32>
    %92 = arith.truncf %84 : vector<2x128xf32> to vector<2x128xbf16>
    %cst_41 = arith.constant dense<0.000000e+00> : vector<2x512xf32>
    %93 = tpu.matmul %92, %22, %cst_41 {dimension_numbers = #tpu.dot_dimension_numbers<[1], [0], [0], [1], [0, 0, 1, 1], [], []>} : vector<2x128xbf16>, vector<128x512xbf16>, vector<2x512xf32> -> vector<2x512xf32>
    %94 = arith.addf %91, %93 : vector<2x512xf32>
    %95 = vector.extract_strided_slice %90 {offsets = [0, 0], sizes = [2, 128], strides = [1, 1]} : vector<2x512xf32> to vector<2x128xf32>
    %96 = arith.negf %95 : vector<2x128xf32>
    %97 = math.exp %96 : vector<2x128xf32>
    %cst_42 = arith.constant 1.000000e+00 : f32
    %98 = vector.broadcast %cst_42 : f32 to vector<2x128xf32>
    %99 = arith.addf %98, %97 : vector<2x128xf32>
    %100 = arith.divf %98, %99 : vector<2x128xf32>
    %101 = vector.extract_strided_slice %90 {offsets = [0, 128], sizes = [2, 128], strides = [1, 1]} : vector<2x512xf32> to vector<2x128xf32>
    %102 = arith.negf %101 : vector<2x128xf32>
    %103 = math.exp %102 : vector<2x128xf32>
    %cst_43 = arith.constant 1.000000e+00 : f32
    %104 = vector.broadcast %cst_43 : f32 to vector<2x128xf32>
    %105 = arith.addf %104, %103 : vector<2x128xf32>
    %106 = arith.divf %104, %105 : vector<2x128xf32>
    %107 = vector.extract_strided_slice %90 {offsets = [0, 256], sizes = [2, 128], strides = [1, 1]} : vector<2x512xf32> to vector<2x128xf32>
    %108 = math.tanh %107 : vector<2x128xf32>
    %109 = vector.extract_strided_slice %90 {offsets = [0, 384], sizes = [2, 128], strides = [1, 1]} : vector<2x512xf32> to vector<2x128xf32>
    %110 = arith.negf %109 : vector<2x128xf32>
    %111 = math.exp %110 : vector<2x128xf32>
    %cst_44 = arith.constant 1.000000e+00 : f32
    %112 = vector.broadcast %cst_44 : f32 to vector<2x128xf32>
    %113 = arith.addf %112, %111 : vector<2x128xf32>
    %114 = arith.divf %112, %113 : vector<2x128xf32>
    %115 = arith.mulf %106, %57 : vector<2x128xf32>
    %116 = arith.mulf %100, %108 : vector<2x128xf32>
    %117 = arith.addf %115, %116 : vector<2x128xf32>
    %118 = math.tanh %117 : vector<2x128xf32>
    %119 = arith.mulf %114, %118 : vector<2x128xf32>
    %120 = vector.extract_strided_slice %94 {offsets = [0, 0], sizes = [2, 128], strides = [1, 1]} : vector<2x512xf32> to vector<2x128xf32>
    %121 = arith.negf %120 : vector<2x128xf32>
    %122 = math.exp %121 : vector<2x128xf32>
    %cst_45 = arith.constant 1.000000e+00 : f32
    %123 = vector.broadcast %cst_45 : f32 to vector<2x128xf32>
    %124 = arith.addf %123, %122 : vector<2x128xf32>
    %125 = arith.divf %123, %124 : vector<2x128xf32>
    %126 = vector.extract_strided_slice %94 {offsets = [0, 128], sizes = [2, 128], strides = [1, 1]} : vector<2x512xf32> to vector<2x128xf32>
    %127 = arith.negf %126 : vector<2x128xf32>
    %128 = math.exp %127 : vector<2x128xf32>
    %cst_46 = arith.constant 1.000000e+00 : f32
    %129 = vector.broadcast %cst_46 : f32 to vector<2x128xf32>
    %130 = arith.addf %129, %128 : vector<2x128xf32>
    %131 = arith.divf %129, %130 : vector<2x128xf32>
    %132 = vector.extract_strided_slice %94 {offsets = [0, 256], sizes = [2, 128], strides = [1, 1]} : vector<2x512xf32> to vector<2x128xf32>
    %133 = math.tanh %132 : vector<2x128xf32>
    %134 = vector.extract_strided_slice %94 {offsets = [0, 384], sizes = [2, 128], strides = [1, 1]} : vector<2x512xf32> to vector<2x128xf32>
    %135 = arith.negf %134 : vector<2x128xf32>
    %136 = math.exp %135 : vector<2x128xf32>
    %cst_47 = arith.constant 1.000000e+00 : f32
    %137 = vector.broadcast %cst_47 : f32 to vector<2x128xf32>
    %138 = arith.addf %137, %136 : vector<2x128xf32>
    %139 = arith.divf %137, %138 : vector<2x128xf32>
    %140 = arith.mulf %131, %82 : vector<2x128xf32>
    %141 = arith.mulf %125, %133 : vector<2x128xf32>
    %142 = arith.addf %140, %141 : vector<2x128xf32>
    %143 = math.tanh %142 : vector<2x128xf32>
    %144 = arith.mulf %139, %143 : vector<2x128xf32>
    %c2_48 = arith.constant 2 : index
    %c0_49 = arith.constant 0 : index
    %145 = vector.load %arg7[%c2_48, %c0_49] : memref<16x128xf32, #tpu.memory_space<vmem>>, vector<2x128xf32>
    tpu.vector_store %arg7[%c2_48, %c0_49], %119 {strides = array<i32>} : memref<16x128xf32, #tpu.memory_space<vmem>>, vector<2x128xf32>,
    %c12_50 = arith.constant 12 : index
    %c0_51 = arith.constant 0 : index
    %146 = vector.load %arg8[%c12_50, %c0_51] : memref<16x128xf32, #tpu.memory_space<vmem>>, vector<2x128xf32>
    tpu.vector_store %arg8[%c12_50, %c0_51], %144 {strides = array<i32>} : memref<16x128xf32, #tpu.memory_space<vmem>>, vector<2x128xf32>,
    %c4 = arith.constant 4 : index
    %c0_52 = arith.constant 0 : index
    %147 = vector.load %arg9[%c4, %c0_52] : memref<16x1024xf32, #tpu.memory_space<vmem>>, vector<2x512xf32>
    %148 = arith.truncf %119 : vector<2x128xf32> to vector<2x128xbf16>
    %cst_53 = arith.constant dense<0.000000e+00> : vector<2x512xf32>
    %149 = tpu.matmul %148, %20, %cst_53 {dimension_numbers = #tpu.dot_dimension_numbers<[1], [0], [0], [1], [0, 0, 1, 1], [], []>} : vector<2x128xbf16>, vector<128x512xbf16>, vector<2x512xf32> -> vector<2x512xf32>
    %150 = arith.addf %147, %149 : vector<2x512xf32>
    %c10 = arith.constant 10 : index
    %c512_54 = arith.constant 512 : index
    %151 = vector.load %arg9[%c10, %c512_54] : memref<16x1024xf32, #tpu.memory_space<vmem>>, vector<2x512xf32>
    %152 = arith.truncf %144 : vector<2x128xf32> to vector<2x128xbf16>
    %cst_55 = arith.constant dense<0.000000e+00> : vector<2x512xf32>
    %153 = tpu.matmul %152, %22, %cst_55 {dimension_numbers = #tpu.dot_dimension_numbers<[1], [0], [0], [1], [0, 0, 1, 1], [], []>} : vector<2x128xbf16>, vector<128x512xbf16>, vector<2x512xf32> -> vector<2x512xf32>
    %154 = arith.addf %151, %153 : vector<2x512xf32>
    %155 = vector.extract_strided_slice %150 {offsets = [0, 0], sizes = [2, 128], strides = [1, 1]} : vector<2x512xf32> to vector<2x128xf32>
    %156 = arith.negf %155 : vector<2x128xf32>
    %157 = math.exp %156 : vector<2x128xf32>
    %cst_56 = arith.constant 1.000000e+00 : f32
    %158 = vector.broadcast %cst_56 : f32 to vector<2x128xf32>
    %159 = arith.addf %158, %157 : vector<2x128xf32>
    %160 = arith.divf %158, %159 : vector<2x128xf32>
    %161 = vector.extract_strided_slice %150 {offsets = [0, 128], sizes = [2, 128], strides = [1, 1]} : vector<2x512xf32> to vector<2x128xf32>
    %162 = arith.negf %161 : vector<2x128xf32>
    %163 = math.exp %162 : vector<2x128xf32>
    %cst_57 = arith.constant 1.000000e+00 : f32
    %164 = vector.broadcast %cst_57 : f32 to vector<2x128xf32>
    %165 = arith.addf %164, %163 : vector<2x128xf32>
    %166 = arith.divf %164, %165 : vector<2x128xf32>
    %167 = vector.extract_strided_slice %150 {offsets = [0, 256], sizes = [2, 128], strides = [1, 1]} : vector<2x512xf32> to vector<2x128xf32>
    %168 = math.tanh %167 : vector<2x128xf32>
    %169 = vector.extract_strided_slice %150 {offsets = [0, 384], sizes = [2, 128], strides = [1, 1]} : vector<2x512xf32> to vector<2x128xf32>
    %170 = arith.negf %169 : vector<2x128xf32>
    %171 = math.exp %170 : vector<2x128xf32>
    %cst_58 = arith.constant 1.000000e+00 : f32
    %172 = vector.broadcast %cst_58 : f32 to vector<2x128xf32>
    %173 = arith.addf %172, %171 : vector<2x128xf32>
    %174 = arith.divf %172, %173 : vector<2x128xf32>
    %175 = arith.mulf %166, %117 : vector<2x128xf32>
    %176 = arith.mulf %160, %168 : vector<2x128xf32>
    %177 = arith.addf %175, %176 : vector<2x128xf32>
    %178 = math.tanh %177 : vector<2x128xf32>
    %179 = arith.mulf %174, %178 : vector<2x128xf32>
    %180 = vector.extract_strided_slice %154 {offsets = [0, 0], sizes = [2, 128], strides = [1, 1]} : vector<2x512xf32> to vector<2x128xf32>
    %181 = arith.negf %180 : vector<2x128xf32>
    %182 = math.exp %181 : vector<2x128xf32>
    %cst_59 = arith.constant 1.000000e+00 : f32
    %183 = vector.broadcast %cst_59 : f32 to vector<2x128xf32>
    %184 = arith.addf %183, %182 : vector<2x128xf32>
    %185 = arith.divf %183, %184 : vector<2x128xf32>
    %186 = vector.extract_strided_slice %154 {offsets = [0, 128], sizes = [2, 128], strides = [1, 1]} : vector<2x512xf32> to vector<2x128xf32>
    %187 = arith.negf %186 : vector<2x128xf32>
    %188 = math.exp %187 : vector<2x128xf32>
    %cst_60 = arith.constant 1.000000e+00 : f32
    %189 = vector.broadcast %cst_60 : f32 to vector<2x128xf32>
    %190 = arith.addf %189, %188 : vector<2x128xf32>
    %191 = arith.divf %189, %190 : vector<2x128xf32>
    %192 = vector.extract_strided_slice %154 {offsets = [0, 256], sizes = [2, 128], strides = [1, 1]} : vector<2x512xf32> to vector<2x128xf32>
    %193 = math.tanh %192 : vector<2x128xf32>
    %194 = vector.extract_strided_slice %154 {offsets = [0, 384], sizes = [2, 128], strides = [1, 1]} : vector<2x512xf32> to vector<2x128xf32>
    %195 = arith.negf %194 : vector<2x128xf32>
    %196 = math.exp %195 : vector<2x128xf32>
    %cst_61 = arith.constant 1.000000e+00 : f32
    %197 = vector.broadcast %cst_61 : f32 to vector<2x128xf32>
    %198 = arith.addf %197, %196 : vector<2x128xf32>
    %199 = arith.divf %197, %198 : vector<2x128xf32>
    %200 = arith.mulf %191, %142 : vector<2x128xf32>
    %201 = arith.mulf %185, %193 : vector<2x128xf32>
    %202 = arith.addf %200, %201 : vector<2x128xf32>
    %203 = math.tanh %202 : vector<2x128xf32>
    %204 = arith.mulf %199, %203 : vector<2x128xf32>
    %c4_62 = arith.constant 4 : index
    %c0_63 = arith.constant 0 : index
    %205 = vector.load %arg7[%c4_62, %c0_63] : memref<16x128xf32, #tpu.memory_space<vmem>>, vector<2x128xf32>
    tpu.vector_store %arg7[%c4_62, %c0_63], %179 {strides = array<i32>} : memref<16x128xf32, #tpu.memory_space<vmem>>, vector<2x128xf32>,
    %c10_64 = arith.constant 10 : index
    %c0_65 = arith.constant 0 : index
    %206 = vector.load %arg8[%c10_64, %c0_65] : memref<16x128xf32, #tpu.memory_space<vmem>>, vector<2x128xf32>
    tpu.vector_store %arg8[%c10_64, %c0_65], %204 {strides = array<i32>} : memref<16x128xf32, #tpu.memory_space<vmem>>, vector<2x128xf32>,
    %c6 = arith.constant 6 : index
    %c0_66 = arith.constant 0 : index
    %207 = vector.load %arg9[%c6, %c0_66] : memref<16x1024xf32, #tpu.memory_space<vmem>>, vector<2x512xf32>
    %208 = arith.truncf %179 : vector<2x128xf32> to vector<2x128xbf16>
    %cst_67 = arith.constant dense<0.000000e+00> : vector<2x512xf32>
    %209 = tpu.matmul %208, %20, %cst_67 {dimension_numbers = #tpu.dot_dimension_numbers<[1], [0], [0], [1], [0, 0, 1, 1], [], []>} : vector<2x128xbf16>, vector<128x512xbf16>, vector<2x512xf32> -> vector<2x512xf32>
    %210 = arith.addf %207, %209 : vector<2x512xf32>
    %c8 = arith.constant 8 : index
    %c512_68 = arith.constant 512 : index
    %211 = vector.load %arg9[%c8, %c512_68] : memref<16x1024xf32, #tpu.memory_space<vmem>>, vector<2x512xf32>
    %212 = arith.truncf %204 : vector<2x128xf32> to vector<2x128xbf16>
    %cst_69 = arith.constant dense<0.000000e+00> : vector<2x512xf32>
    %213 = tpu.matmul %212, %22, %cst_69 {dimension_numbers = #tpu.dot_dimension_numbers<[1], [0], [0], [1], [0, 0, 1, 1], [], []>} : vector<2x128xbf16>, vector<128x512xbf16>, vector<2x512xf32> -> vector<2x512xf32>
    %214 = arith.addf %211, %213 : vector<2x512xf32>
    %215 = vector.extract_strided_slice %210 {offsets = [0, 0], sizes = [2, 128], strides = [1, 1]} : vector<2x512xf32> to vector<2x128xf32>
    %216 = arith.negf %215 : vector<2x128xf32>
    %217 = math.exp %216 : vector<2x128xf32>
    %cst_70 = arith.constant 1.000000e+00 : f32
    %218 = vector.broadcast %cst_70 : f32 to vector<2x128xf32>
    %219 = arith.addf %218, %217 : vector<2x128xf32>
    %220 = arith.divf %218, %219 : vector<2x128xf32>
    %221 = vector.extract_strided_slice %210 {offsets = [0, 128], sizes = [2, 128], strides = [1, 1]} : vector<2x512xf32> to vector<2x128xf32>
    %222 = arith.negf %221 : vector<2x128xf32>
    %223 = math.exp %222 : vector<2x128xf32>
    %cst_71 = arith.constant 1.000000e+00 : f32
    %224 = vector.broadcast %cst_71 : f32 to vector<2x128xf32>
    %225 = arith.addf %224, %223 : vector<2x128xf32>
    %226 = arith.divf %224, %225 : vector<2x128xf32>
    %227 = vector.extract_strided_slice %210 {offsets = [0, 256], sizes = [2, 128], strides = [1, 1]} : vector<2x512xf32> to vector<2x128xf32>
    %228 = math.tanh %227 : vector<2x128xf32>
    %229 = vector.extract_strided_slice %210 {offsets = [0, 384], sizes = [2, 128], strides = [1, 1]} : vector<2x512xf32> to vector<2x128xf32>
    %230 = arith.negf %229 : vector<2x128xf32>
    %231 = math.exp %230 : vector<2x128xf32>
    %cst_72 = arith.constant 1.000000e+00 : f32
    %232 = vector.broadcast %cst_72 : f32 to vector<2x128xf32>
    %233 = arith.addf %232, %231 : vector<2x128xf32>
    %234 = arith.divf %232, %233 : vector<2x128xf32>
    %235 = arith.mulf %226, %177 : vector<2x128xf32>
    %236 = arith.mulf %220, %228 : vector<2x128xf32>
    %237 = arith.addf %235, %236 : vector<2x128xf32>
    %238 = math.tanh %237 : vector<2x128xf32>
    %239 = arith.mulf %234, %238 : vector<2x128xf32>
    %240 = vector.extract_strided_slice %214 {offsets = [0, 0], sizes = [2, 128], strides = [1, 1]} : vector<2x512xf32> to vector<2x128xf32>
    %241 = arith.negf %240 : vector<2x128xf32>
    %242 = math.exp %241 : vector<2x128xf32>
    %cst_73 = arith.constant 1.000000e+00 : f32
    %243 = vector.broadcast %cst_73 : f32 to vector<2x128xf32>
    %244 = arith.addf %243, %242 : vector<2x128xf32>
    %245 = arith.divf %243, %244 : vector<2x128xf32>
    %246 = vector.extract_strided_slice %214 {offsets = [0, 128], sizes = [2, 128], strides = [1, 1]} : vector<2x512xf32> to vector<2x128xf32>
    %247 = arith.negf %246 : vector<2x128xf32>
    %248 = math.exp %247 : vector<2x128xf32>
    %cst_74 = arith.constant 1.000000e+00 : f32
    %249 = vector.broadcast %cst_74 : f32 to vector<2x128xf32>
    %250 = arith.addf %249, %248 : vector<2x128xf32>
    %251 = arith.divf %249, %250 : vector<2x128xf32>
    %252 = vector.extract_strided_slice %214 {offsets = [0, 256], sizes = [2, 128], strides = [1, 1]} : vector<2x512xf32> to vector<2x128xf32>
    %253 = math.tanh %252 : vector<2x128xf32>
    %254 = vector.extract_strided_slice %214 {offsets = [0, 384], sizes = [2, 128], strides = [1, 1]} : vector<2x512xf32> to vector<2x128xf32>
    %255 = arith.negf %254 : vector<2x128xf32>
    %256 = math.exp %255 : vector<2x128xf32>
    %cst_75 = arith.constant 1.000000e+00 : f32
    %257 = vector.broadcast %cst_75 : f32 to vector<2x128xf32>
    %258 = arith.addf %257, %256 : vector<2x128xf32>
    %259 = arith.divf %257, %258 : vector<2x128xf32>
    %260 = arith.mulf %251, %202 : vector<2x128xf32>
    %261 = arith.mulf %245, %253 : vector<2x128xf32>
    %262 = arith.addf %260, %261 : vector<2x128xf32>
    %263 = math.tanh %262 : vector<2x128xf32>
    %264 = arith.mulf %259, %263 : vector<2x128xf32>
    %c6_76 = arith.constant 6 : index
    %c0_77 = arith.constant 0 : index
    %265 = vector.load %arg7[%c6_76, %c0_77] : memref<16x128xf32, #tpu.memory_space<vmem>>, vector<2x128xf32>
    tpu.vector_store %arg7[%c6_76, %c0_77], %239 {strides = array<i32>} : memref<16x128xf32, #tpu.memory_space<vmem>>, vector<2x128xf32>,
    %c8_78 = arith.constant 8 : index
    %c0_79 = arith.constant 0 : index
    %266 = vector.load %arg8[%c8_78, %c0_79] : memref<16x128xf32, #tpu.memory_space<vmem>>, vector<2x128xf32>
    tpu.vector_store %arg8[%c8_78, %c0_79], %264 {strides = array<i32>} : memref<16x128xf32, #tpu.memory_space<vmem>>, vector<2x128xf32>,
    %c8_80 = arith.constant 8 : index
    %c0_81 = arith.constant 0 : index
    %267 = vector.load %arg9[%c8_80, %c0_81] : memref<16x1024xf32, #tpu.memory_space<vmem>>, vector<2x512xf32>
    %268 = arith.truncf %239 : vector<2x128xf32> to vector<2x128xbf16>
    %cst_82 = arith.constant dense<0.000000e+00> : vector<2x512xf32>
    %269 = tpu.matmul %268, %20, %cst_82 {dimension_numbers = #tpu.dot_dimension_numbers<[1], [0], [0], [1], [0, 0, 1, 1], [], []>} : vector<2x128xbf16>, vector<128x512xbf16>, vector<2x512xf32> -> vector<2x512xf32>
    %270 = arith.addf %267, %269 : vector<2x512xf32>
    %c6_83 = arith.constant 6 : index
    %c512_84 = arith.constant 512 : index
    %271 = vector.load %arg9[%c6_83, %c512_84] : memref<16x1024xf32, #tpu.memory_space<vmem>>, vector<2x512xf32>
    %272 = arith.truncf %264 : vector<2x128xf32> to vector<2x128xbf16>
    %cst_85 = arith.constant dense<0.000000e+00> : vector<2x512xf32>
    %273 = tpu.matmul %272, %22, %cst_85 {dimension_numbers = #tpu.dot_dimension_numbers<[1], [0], [0], [1], [0, 0, 1, 1], [], []>} : vector<2x128xbf16>, vector<128x512xbf16>, vector<2x512xf32> -> vector<2x512xf32>
    %274 = arith.addf %271, %273 : vector<2x512xf32>
    %275 = vector.extract_strided_slice %270 {offsets = [0, 0], sizes = [2, 128], strides = [1, 1]} : vector<2x512xf32> to vector<2x128xf32>
    %276 = arith.negf %275 : vector<2x128xf32>
    %277 = math.exp %276 : vector<2x128xf32>
    %cst_86 = arith.constant 1.000000e+00 : f32
    %278 = vector.broadcast %cst_86 : f32 to vector<2x128xf32>
    %279 = arith.addf %278, %277 : vector<2x128xf32>
    %280 = arith.divf %278, %279 : vector<2x128xf32>
    %281 = vector.extract_strided_slice %270 {offsets = [0, 128], sizes = [2, 128], strides = [1, 1]} : vector<2x512xf32> to vector<2x128xf32>
    %282 = arith.negf %281 : vector<2x128xf32>
    %283 = math.exp %282 : vector<2x128xf32>
    %cst_87 = arith.constant 1.000000e+00 : f32
    %284 = vector.broadcast %cst_87 : f32 to vector<2x128xf32>
    %285 = arith.addf %284, %283 : vector<2x128xf32>
    %286 = arith.divf %284, %285 : vector<2x128xf32>
    %287 = vector.extract_strided_slice %270 {offsets = [0, 256], sizes = [2, 128], strides = [1, 1]} : vector<2x512xf32> to vector<2x128xf32>
    %288 = math.tanh %287 : vector<2x128xf32>
    %289 = vector.extract_strided_slice %270 {offsets = [0, 384], sizes = [2, 128], strides = [1, 1]} : vector<2x512xf32> to vector<2x128xf32>
    %290 = arith.negf %289 : vector<2x128xf32>
    %291 = math.exp %290 : vector<2x128xf32>
    %cst_88 = arith.constant 1.000000e+00 : f32
    %292 = vector.broadcast %cst_88 : f32 to vector<2x128xf32>
    %293 = arith.addf %292, %291 : vector<2x128xf32>
    %294 = arith.divf %292, %293 : vector<2x128xf32>
    %295 = arith.mulf %286, %237 : vector<2x128xf32>
    %296 = arith.mulf %280, %288 : vector<2x128xf32>
    %297 = arith.addf %295, %296 : vector<2x128xf32>
    %298 = math.tanh %297 : vector<2x128xf32>
    %299 = arith.mulf %294, %298 : vector<2x128xf32>
    %300 = vector.extract_strided_slice %274 {offsets = [0, 0], sizes = [2, 128], strides = [1, 1]} : vector<2x512xf32> to vector<2x128xf32>
    %301 = arith.negf %300 : vector<2x128xf32>
    %302 = math.exp %301 : vector<2x128xf32>
    %cst_89 = arith.constant 1.000000e+00 : f32
    %303 = vector.broadcast %cst_89 : f32 to vector<2x128xf32>
    %304 = arith.addf %303, %302 : vector<2x128xf32>
    %305 = arith.divf %303, %304 : vector<2x128xf32>
    %306 = vector.extract_strided_slice %274 {offsets = [0, 128], sizes = [2, 128], strides = [1, 1]} : vector<2x512xf32> to vector<2x128xf32>
    %307 = arith.negf %306 : vector<2x128xf32>
    %308 = math.exp %307 : vector<2x128xf32>
    %cst_90 = arith.constant 1.000000e+00 : f32
    %309 = vector.broadcast %cst_90 : f32 to vector<2x128xf32>
    %310 = arith.addf %309, %308 : vector<2x128xf32>
    %311 = arith.divf %309, %310 : vector<2x128xf32>
    %312 = vector.extract_strided_slice %274 {offsets = [0, 256], sizes = [2, 128], strides = [1, 1]} : vector<2x512xf32> to vector<2x128xf32>
    %313 = math.tanh %312 : vector<2x128xf32>
    %314 = vector.extract_strided_slice %274 {offsets = [0, 384], sizes = [2, 128], strides = [1, 1]} : vector<2x512xf32> to vector<2x128xf32>
    %315 = arith.negf %314 : vector<2x128xf32>
    %316 = math.exp %315 : vector<2x128xf32>
    %cst_91 = arith.constant 1.000000e+00 : f32
    %317 = vector.broadcast %cst_91 : f32 to vector<2x128xf32>
    %318 = arith.addf %317, %316 : vector<2x128xf32>
    %319 = arith.divf %317, %318 : vector<2x128xf32>
    %320 = arith.mulf %311, %262 : vector<2x128xf32>
    %321 = arith.mulf %305, %313 : vector<2x128xf32>
    %322 = arith.addf %320, %321 : vector<2x128xf32>
    %323 = math.tanh %322 : vector<2x128xf32>
    %324 = arith.mulf %319, %323 : vector<2x128xf32>
    %c8_92 = arith.constant 8 : index
    %c0_93 = arith.constant 0 : index
    %325 = vector.load %arg7[%c8_92, %c0_93] : memref<16x128xf32, #tpu.memory_space<vmem>>, vector<2x128xf32>
    tpu.vector_store %arg7[%c8_92, %c0_93], %299 {strides = array<i32>} : memref<16x128xf32, #tpu.memory_space<vmem>>, vector<2x128xf32>,
    %c6_94 = arith.constant 6 : index
    %c0_95 = arith.constant 0 : index
    %326 = vector.load %arg8[%c6_94, %c0_95] : memref<16x128xf32, #tpu.memory_space<vmem>>, vector<2x128xf32>
    tpu.vector_store %arg8[%c6_94, %c0_95], %324 {strides = array<i32>} : memref<16x128xf32, #tpu.memory_space<vmem>>, vector<2x128xf32>,
    %c10_96 = arith.constant 10 : index
    %c0_97 = arith.constant 0 : index
    %327 = vector.load %arg9[%c10_96, %c0_97] : memref<16x1024xf32, #tpu.memory_space<vmem>>, vector<2x512xf32>
    %328 = arith.truncf %299 : vector<2x128xf32> to vector<2x128xbf16>
    %cst_98 = arith.constant dense<0.000000e+00> : vector<2x512xf32>
    %329 = tpu.matmul %328, %20, %cst_98 {dimension_numbers = #tpu.dot_dimension_numbers<[1], [0], [0], [1], [0, 0, 1, 1], [], []>} : vector<2x128xbf16>, vector<128x512xbf16>, vector<2x512xf32> -> vector<2x512xf32>
    %330 = arith.addf %327, %329 : vector<2x512xf32>
    %c4_99 = arith.constant 4 : index
    %c512_100 = arith.constant 512 : index
    %331 = vector.load %arg9[%c4_99, %c512_100] : memref<16x1024xf32, #tpu.memory_space<vmem>>, vector<2x512xf32>
    %332 = arith.truncf %324 : vector<2x128xf32> to vector<2x128xbf16>
    %cst_101 = arith.constant dense<0.000000e+00> : vector<2x512xf32>
    %333 = tpu.matmul %332, %22, %cst_101 {dimension_numbers = #tpu.dot_dimension_numbers<[1], [0], [0], [1], [0, 0, 1, 1], [], []>} : vector<2x128xbf16>, vector<128x512xbf16>, vector<2x512xf32> -> vector<2x512xf32>
    %334 = arith.addf %331, %333 : vector<2x512xf32>
    %335 = vector.extract_strided_slice %330 {offsets = [0, 0], sizes = [2, 128], strides = [1, 1]} : vector<2x512xf32> to vector<2x128xf32>
    %336 = arith.negf %335 : vector<2x128xf32>
    %337 = math.exp %336 : vector<2x128xf32>
    %cst_102 = arith.constant 1.000000e+00 : f32
    %338 = vector.broadcast %cst_102 : f32 to vector<2x128xf32>
    %339 = arith.addf %338, %337 : vector<2x128xf32>
    %340 = arith.divf %338, %339 : vector<2x128xf32>
    %341 = vector.extract_strided_slice %330 {offsets = [0, 128], sizes = [2, 128], strides = [1, 1]} : vector<2x512xf32> to vector<2x128xf32>
    %342 = arith.negf %341 : vector<2x128xf32>
    %343 = math.exp %342 : vector<2x128xf32>
    %cst_103 = arith.constant 1.000000e+00 : f32
    %344 = vector.broadcast %cst_103 : f32 to vector<2x128xf32>
    %345 = arith.addf %344, %343 : vector<2x128xf32>
    %346 = arith.divf %344, %345 : vector<2x128xf32>
    %347 = vector.extract_strided_slice %330 {offsets = [0, 256], sizes = [2, 128], strides = [1, 1]} : vector<2x512xf32> to vector<2x128xf32>
    %348 = math.tanh %347 : vector<2x128xf32>
    %349 = vector.extract_strided_slice %330 {offsets = [0, 384], sizes = [2, 128], strides = [1, 1]} : vector<2x512xf32> to vector<2x128xf32>
    %350 = arith.negf %349 : vector<2x128xf32>
    %351 = math.exp %350 : vector<2x128xf32>
    %cst_104 = arith.constant 1.000000e+00 : f32
    %352 = vector.broadcast %cst_104 : f32 to vector<2x128xf32>
    %353 = arith.addf %352, %351 : vector<2x128xf32>
    %354 = arith.divf %352, %353 : vector<2x128xf32>
    %355 = arith.mulf %346, %297 : vector<2x128xf32>
    %356 = arith.mulf %340, %348 : vector<2x128xf32>
    %357 = arith.addf %355, %356 : vector<2x128xf32>
    %358 = math.tanh %357 : vector<2x128xf32>
    %359 = arith.mulf %354, %358 : vector<2x128xf32>
    %360 = vector.extract_strided_slice %334 {offsets = [0, 0], sizes = [2, 128], strides = [1, 1]} : vector<2x512xf32> to vector<2x128xf32>
    %361 = arith.negf %360 : vector<2x128xf32>
    %362 = math.exp %361 : vector<2x128xf32>
    %cst_105 = arith.constant 1.000000e+00 : f32
    %363 = vector.broadcast %cst_105 : f32 to vector<2x128xf32>
    %364 = arith.addf %363, %362 : vector<2x128xf32>
    %365 = arith.divf %363, %364 : vector<2x128xf32>
    %366 = vector.extract_strided_slice %334 {offsets = [0, 128], sizes = [2, 128], strides = [1, 1]} : vector<2x512xf32> to vector<2x128xf32>
    %367 = arith.negf %366 : vector<2x128xf32>
    %368 = math.exp %367 : vector<2x128xf32>
    %cst_106 = arith.constant 1.000000e+00 : f32
    %369 = vector.broadcast %cst_106 : f32 to vector<2x128xf32>
    %370 = arith.addf %369, %368 : vector<2x128xf32>
    %371 = arith.divf %369, %370 : vector<2x128xf32>
    %372 = vector.extract_strided_slice %334 {offsets = [0, 256], sizes = [2, 128], strides = [1, 1]} : vector<2x512xf32> to vector<2x128xf32>
    %373 = math.tanh %372 : vector<2x128xf32>
    %374 = vector.extract_strided_slice %334 {offsets = [0, 384], sizes = [2, 128], strides = [1, 1]} : vector<2x512xf32> to vector<2x128xf32>
    %375 = arith.negf %374 : vector<2x128xf32>
    %376 = math.exp %375 : vector<2x128xf32>
    %cst_107 = arith.constant 1.000000e+00 : f32
    %377 = vector.broadcast %cst_107 : f32 to vector<2x128xf32>
    %378 = arith.addf %377, %376 : vector<2x128xf32>
    %379 = arith.divf %377, %378 : vector<2x128xf32>
    %380 = arith.mulf %371, %322 : vector<2x128xf32>
    %381 = arith.mulf %365, %373 : vector<2x128xf32>
    %382 = arith.addf %380, %381 : vector<2x128xf32>
    %383 = math.tanh %382 : vector<2x128xf32>
    %384 = arith.mulf %379, %383 : vector<2x128xf32>
    %c10_108 = arith.constant 10 : index
    %c0_109 = arith.constant 0 : index
    %385 = vector.load %arg7[%c10_108, %c0_109] : memref<16x128xf32, #tpu.memory_space<vmem>>, vector<2x128xf32>
    tpu.vector_store %arg7[%c10_108, %c0_109], %359 {strides = array<i32>} : memref<16x128xf32, #tpu.memory_space<vmem>>, vector<2x128xf32>,
    %c4_110 = arith.constant 4 : index
    %c0_111 = arith.constant 0 : index
    %386 = vector.load %arg8[%c4_110, %c0_111] : memref<16x128xf32, #tpu.memory_space<vmem>>, vector<2x128xf32>
    tpu.vector_store %arg8[%c4_110, %c0_111], %384 {strides = array<i32>} : memref<16x128xf32, #tpu.memory_space<vmem>>, vector<2x128xf32>,
    %c12_112 = arith.constant 12 : index
    %c0_113 = arith.constant 0 : index
    %387 = vector.load %arg9[%c12_112, %c0_113] : memref<16x1024xf32, #tpu.memory_space<vmem>>, vector<2x512xf32>
    %388 = arith.truncf %359 : vector<2x128xf32> to vector<2x128xbf16>
    %cst_114 = arith.constant dense<0.000000e+00> : vector<2x512xf32>
    %389 = tpu.matmul %388, %20, %cst_114 {dimension_numbers = #tpu.dot_dimension_numbers<[1], [0], [0], [1], [0, 0, 1, 1], [], []>} : vector<2x128xbf16>, vector<128x512xbf16>, vector<2x512xf32> -> vector<2x512xf32>
    %390 = arith.addf %387, %389 : vector<2x512xf32>
    %c2_115 = arith.constant 2 : index
    %c512_116 = arith.constant 512 : index
    %391 = vector.load %arg9[%c2_115, %c512_116] : memref<16x1024xf32, #tpu.memory_space<vmem>>, vector<2x512xf32>
    %392 = arith.truncf %384 : vector<2x128xf32> to vector<2x128xbf16>
    %cst_117 = arith.constant dense<0.000000e+00> : vector<2x512xf32>
    %393 = tpu.matmul %392, %22, %cst_117 {dimension_numbers = #tpu.dot_dimension_numbers<[1], [0], [0], [1], [0, 0, 1, 1], [], []>} : vector<2x128xbf16>, vector<128x512xbf16>, vector<2x512xf32> -> vector<2x512xf32>
    %394 = arith.addf %391, %393 : vector<2x512xf32>
    %395 = vector.extract_strided_slice %390 {offsets = [0, 0], sizes = [2, 128], strides = [1, 1]} : vector<2x512xf32> to vector<2x128xf32>
    %396 = arith.negf %395 : vector<2x128xf32>
    %397 = math.exp %396 : vector<2x128xf32>
    %cst_118 = arith.constant 1.000000e+00 : f32
    %398 = vector.broadcast %cst_118 : f32 to vector<2x128xf32>
    %399 = arith.addf %398, %397 : vector<2x128xf32>
    %400 = arith.divf %398, %399 : vector<2x128xf32>
    %401 = vector.extract_strided_slice %390 {offsets = [0, 128], sizes = [2, 128], strides = [1, 1]} : vector<2x512xf32> to vector<2x128xf32>
    %402 = arith.negf %401 : vector<2x128xf32>
    %403 = math.exp %402 : vector<2x128xf32>
    %cst_119 = arith.constant 1.000000e+00 : f32
    %404 = vector.broadcast %cst_119 : f32 to vector<2x128xf32>
    %405 = arith.addf %404, %403 : vector<2x128xf32>
    %406 = arith.divf %404, %405 : vector<2x128xf32>
    %407 = vector.extract_strided_slice %390 {offsets = [0, 256], sizes = [2, 128], strides = [1, 1]} : vector<2x512xf32> to vector<2x128xf32>
    %408 = math.tanh %407 : vector<2x128xf32>
    %409 = vector.extract_strided_slice %390 {offsets = [0, 384], sizes = [2, 128], strides = [1, 1]} : vector<2x512xf32> to vector<2x128xf32>
    %410 = arith.negf %409 : vector<2x128xf32>
    %411 = math.exp %410 : vector<2x128xf32>
    %cst_120 = arith.constant 1.000000e+00 : f32
    %412 = vector.broadcast %cst_120 : f32 to vector<2x128xf32>
    %413 = arith.addf %412, %411 : vector<2x128xf32>
    %414 = arith.divf %412, %413 : vector<2x128xf32>
    %415 = arith.mulf %406, %357 : vector<2x128xf32>
    %416 = arith.mulf %400, %408 : vector<2x128xf32>
    %417 = arith.addf %415, %416 : vector<2x128xf32>
    %418 = math.tanh %417 : vector<2x128xf32>
    %419 = arith.mulf %414, %418 : vector<2x128xf32>
    %420 = vector.extract_strided_slice %394 {offsets = [0, 0], sizes = [2, 128], strides = [1, 1]} : vector<2x512xf32> to vector<2x128xf32>
    %421 = arith.negf %420 : vector<2x128xf32>
    %422 = math.exp %421 : vector<2x128xf32>
    %cst_121 = arith.constant 1.000000e+00 : f32
    %423 = vector.broadcast %cst_121 : f32 to vector<2x128xf32>
    %424 = arith.addf %423, %422 : vector<2x128xf32>
    %425 = arith.divf %423, %424 : vector<2x128xf32>
    %426 = vector.extract_strided_slice %394 {offsets = [0, 128], sizes = [2, 128], strides = [1, 1]} : vector<2x512xf32> to vector<2x128xf32>
    %427 = arith.negf %426 : vector<2x128xf32>
    %428 = math.exp %427 : vector<2x128xf32>
    %cst_122 = arith.constant 1.000000e+00 : f32
    %429 = vector.broadcast %cst_122 : f32 to vector<2x128xf32>
    %430 = arith.addf %429, %428 : vector<2x128xf32>
    %431 = arith.divf %429, %430 : vector<2x128xf32>
    %432 = vector.extract_strided_slice %394 {offsets = [0, 256], sizes = [2, 128], strides = [1, 1]} : vector<2x512xf32> to vector<2x128xf32>
    %433 = math.tanh %432 : vector<2x128xf32>
    %434 = vector.extract_strided_slice %394 {offsets = [0, 384], sizes = [2, 128], strides = [1, 1]} : vector<2x512xf32> to vector<2x128xf32>
    %435 = arith.negf %434 : vector<2x128xf32>
    %436 = math.exp %435 : vector<2x128xf32>
    %cst_123 = arith.constant 1.000000e+00 : f32
    %437 = vector.broadcast %cst_123 : f32 to vector<2x128xf32>
    %438 = arith.addf %437, %436 : vector<2x128xf32>
    %439 = arith.divf %437, %438 : vector<2x128xf32>
    %440 = arith.mulf %431, %382 : vector<2x128xf32>
    %441 = arith.mulf %425, %433 : vector<2x128xf32>
    %442 = arith.addf %440, %441 : vector<2x128xf32>
    %443 = math.tanh %442 : vector<2x128xf32>
    %444 = arith.mulf %439, %443 : vector<2x128xf32>
    %c12_124 = arith.constant 12 : index
    %c0_125 = arith.constant 0 : index
    %445 = vector.load %arg7[%c12_124, %c0_125] : memref<16x128xf32, #tpu.memory_space<vmem>>, vector<2x128xf32>
    tpu.vector_store %arg7[%c12_124, %c0_125], %419 {strides = array<i32>} : memref<16x128xf32, #tpu.memory_space<vmem>>, vector<2x128xf32>,
    %c2_126 = arith.constant 2 : index
    %c0_127 = arith.constant 0 : index
    %446 = vector.load %arg8[%c2_126, %c0_127] : memref<16x128xf32, #tpu.memory_space<vmem>>, vector<2x128xf32>
    tpu.vector_store %arg8[%c2_126, %c0_127], %444 {strides = array<i32>} : memref<16x128xf32, #tpu.memory_space<vmem>>, vector<2x128xf32>,
    %c14_128 = arith.constant 14 : index
    %c0_129 = arith.constant 0 : index
    %447 = vector.load %arg9[%c14_128, %c0_129] : memref<16x1024xf32, #tpu.memory_space<vmem>>, vector<2x512xf32>
    %448 = arith.truncf %419 : vector<2x128xf32> to vector<2x128xbf16>
    %cst_130 = arith.constant dense<0.000000e+00> : vector<2x512xf32>
    %449 = tpu.matmul %448, %20, %cst_130 {dimension_numbers = #tpu.dot_dimension_numbers<[1], [0], [0], [1], [0, 0, 1, 1], [], []>} : vector<2x128xbf16>, vector<128x512xbf16>, vector<2x512xf32> -> vector<2x512xf32>
    %450 = arith.addf %447, %449 : vector<2x512xf32>
    %c0_131 = arith.constant 0 : index
    %c512_132 = arith.constant 512 : index
    %451 = vector.load %arg9[%c0_131, %c512_132] : memref<16x1024xf32, #tpu.memory_space<vmem>>, vector<2x512xf32>
    %452 = arith.truncf %444 : vector<2x128xf32> to vector<2x128xbf16>
    %cst_133 = arith.constant dense<0.000000e+00> : vector<2x512xf32>
    %453 = tpu.matmul %452, %22, %cst_133 {dimension_numbers = #tpu.dot_dimension_numbers<[1], [0], [0], [1], [0, 0, 1, 1], [], []>} : vector<2x128xbf16>, vector<128x512xbf16>, vector<2x512xf32> -> vector<2x512xf32>
    %454 = arith.addf %451, %453 : vector<2x512xf32>
    %455 = vector.extract_strided_slice %450 {offsets = [0, 0], sizes = [2, 128], strides = [1, 1]} : vector<2x512xf32> to vector<2x128xf32>
    %456 = arith.negf %455 : vector<2x128xf32>
    %457 = math.exp %456 : vector<2x128xf32>
    %cst_134 = arith.constant 1.000000e+00 : f32
    %458 = vector.broadcast %cst_134 : f32 to vector<2x128xf32>
    %459 = arith.addf %458, %457 : vector<2x128xf32>
    %460 = arith.divf %458, %459 : vector<2x128xf32>
    %461 = vector.extract_strided_slice %450 {offsets = [0, 128], sizes = [2, 128], strides = [1, 1]} : vector<2x512xf32> to vector<2x128xf32>
    %462 = arith.negf %461 : vector<2x128xf32>
    %463 = math.exp %462 : vector<2x128xf32>
    %cst_135 = arith.constant 1.000000e+00 : f32
    %464 = vector.broadcast %cst_135 : f32 to vector<2x128xf32>
    %465 = arith.addf %464, %463 : vector<2x128xf32>
    %466 = arith.divf %464, %465 : vector<2x128xf32>
    %467 = vector.extract_strided_slice %450 {offsets = [0, 256], sizes = [2, 128], strides = [1, 1]} : vector<2x512xf32> to vector<2x128xf32>
    %468 = math.tanh %467 : vector<2x128xf32>
    %469 = vector.extract_strided_slice %450 {offsets = [0, 384], sizes = [2, 128], strides = [1, 1]} : vector<2x512xf32> to vector<2x128xf32>
    %470 = arith.negf %469 : vector<2x128xf32>
    %471 = math.exp %470 : vector<2x128xf32>
    %cst_136 = arith.constant 1.000000e+00 : f32
    %472 = vector.broadcast %cst_136 : f32 to vector<2x128xf32>
    %473 = arith.addf %472, %471 : vector<2x128xf32>
    %474 = arith.divf %472, %473 : vector<2x128xf32>
    %475 = arith.mulf %466, %417 : vector<2x128xf32>
    %476 = arith.mulf %460, %468 : vector<2x128xf32>
    %477 = arith.addf %475, %476 : vector<2x128xf32>
    %478 = math.tanh %477 : vector<2x128xf32>
    %479 = arith.mulf %474, %478 : vector<2x128xf32>
    %480 = vector.extract_strided_slice %454 {offsets = [0, 0], sizes = [2, 128], strides = [1, 1]} : vector<2x512xf32> to vector<2x128xf32>
    %481 = arith.negf %480 : vector<2x128xf32>
    %482 = math.exp %481 : vector<2x128xf32>
    %cst_137 = arith.constant 1.000000e+00 : f32
    %483 = vector.broadcast %cst_137 : f32 to vector<2x128xf32>
    %484 = arith.addf %483, %482 : vector<2x128xf32>
    %485 = arith.divf %483, %484 : vector<2x128xf32>
    %486 = vector.extract_strided_slice %454 {offsets = [0, 128], sizes = [2, 128], strides = [1, 1]} : vector<2x512xf32> to vector<2x128xf32>
    %487 = arith.negf %486 : vector<2x128xf32>
    %488 = math.exp %487 : vector<2x128xf32>
    %cst_138 = arith.constant 1.000000e+00 : f32
    %489 = vector.broadcast %cst_138 : f32 to vector<2x128xf32>
    %490 = arith.addf %489, %488 : vector<2x128xf32>
    %491 = arith.divf %489, %490 : vector<2x128xf32>
    %492 = vector.extract_strided_slice %454 {offsets = [0, 256], sizes = [2, 128], strides = [1, 1]} : vector<2x512xf32> to vector<2x128xf32>
    %493 = math.tanh %492 : vector<2x128xf32>
    %494 = vector.extract_strided_slice %454 {offsets = [0, 384], sizes = [2, 128], strides = [1, 1]} : vector<2x512xf32> to vector<2x128xf32>
    %495 = arith.negf %494 : vector<2x128xf32>
    %496 = math.exp %495 : vector<2x128xf32>
    %cst_139 = arith.constant 1.000000e+00 : f32
    %497 = vector.broadcast %cst_139 : f32 to vector<2x128xf32>
    %498 = arith.addf %497, %496 : vector<2x128xf32>
    %499 = arith.divf %497, %498 : vector<2x128xf32>
    %500 = arith.mulf %491, %442 : vector<2x128xf32>
    %501 = arith.mulf %485, %493 : vector<2x128xf32>
    %502 = arith.addf %500, %501 : vector<2x128xf32>
    %503 = math.tanh %502 : vector<2x128xf32>
    %504 = arith.mulf %499, %503 : vector<2x128xf32>
    %c14_140 = arith.constant 14 : index
    %c0_141 = arith.constant 0 : index
    %505 = vector.load %arg7[%c14_140, %c0_141] : memref<16x128xf32, #tpu.memory_space<vmem>>, vector<2x128xf32>
    tpu.vector_store %arg7[%c14_140, %c0_141], %479 {strides = array<i32>} : memref<16x128xf32, #tpu.memory_space<vmem>>, vector<2x128xf32>,
    %c0_142 = arith.constant 0 : index
    %c0_143 = arith.constant 0 : index
    %506 = vector.load %arg8[%c0_142, %c0_143] : memref<16x128xf32, #tpu.memory_space<vmem>>, vector<2x128xf32>
    tpu.vector_store %arg8[%c0_142, %c0_143], %504 {strides = array<i32>} : memref<16x128xf32, #tpu.memory_space<vmem>>, vector<2x128xf32>,
    %c2_i32 = arith.constant 2 : i32
    %507 = arith.muli %c2_i32, %arg0 : i32
    %508 = arith.index_cast %507 : i32 to index
    %c0_144 = arith.constant 0 : index
    %c0_145 = arith.constant 0 : index
    %509 = vector.load %arg10[%508, %c0_144, %c0_145] : memref<12x2x128xf32, #tpu.memory_space<vmem>>, vector<1x2x128xf32>
    %510 = vector.shape_cast %509 : vector<1x2x128xf32> to vector<2x128xf32>
    %511 = vector.shape_cast %479 : vector<2x128xf32> to vector<1x2x128xf32>
    tpu.vector_store %arg10[%508, %c0_144, %c0_145], %511 {strides = array<i32>} : memref<12x2x128xf32, #tpu.memory_space<vmem>>, vector<1x2x128xf32>,
    %c2_i32_146 = arith.constant 2 : i32
    %512 = arith.muli %c2_i32_146, %arg0 : i32
    %c1_i32 = arith.constant 1 : i32
    %513 = arith.addi %512, %c1_i32 : i32
    %514 = arith.index_cast %513 : i32 to index
    %c0_147 = arith.constant 0 : index
    %c0_148 = arith.constant 0 : index
    %515 = vector.load %arg10[%514, %c0_147, %c0_148] : memref<12x2x128xf32, #tpu.memory_space<vmem>>, vector<1x2x128xf32>
    %516 = vector.shape_cast %515 : vector<1x2x128xf32> to vector<2x128xf32>
    %517 = vector.shape_cast %504 : vector<2x128xf32> to vector<1x2x128xf32>
    tpu.vector_store %arg10[%514, %c0_147, %c0_148], %517 {strides = array<i32>} : memref<12x2x128xf32, #tpu.memory_space<vmem>>, vector<1x2x128xf32>,
    %c5_i32 = arith.constant 5 : i32
    %518 = arith.cmpi eq, %arg0, %c5_i32 : i32
    %519 = arith.extui %518 : i1 to i32
    %c0_i32_149 = arith.constant 0 : i32
    %520 = arith.cmpi ne, %519, %c0_i32_149 : i32
    scf.if %520 {
      %cst_150 = arith.constant 0.000000e+00 : f32
      %521 = vector.broadcast %cst_150 : f32 to vector<2x7xf32>
      %c0_151 = arith.constant 0 : index
      %c0_152 = arith.constant 0 : index
      %c0_153 = arith.constant 0 : index
      %522 = vector.load %arg10[%c0_151, %c0_152, %c0_153] : memref<12x2x128xf32, #tpu.memory_space<vmem>>, vector<1x2x128xf32>
      %523 = vector.shape_cast %522 : vector<1x2x128xf32> to vector<2x128xf32>
      %524 = arith.truncf %523 : vector<2x128xf32> to vector<2x128xbf16>
      %c0_154 = arith.constant 0 : index
      %c0_155 = arith.constant 0 : index
      %c0_156 = arith.constant 0 : index
      %525 = vector.load %arg5[%c0_154, %c0_155, %c0_156] : memref<12x128x7xbf16, #tpu.memory_space<vmem>>, vector<1x128x7xbf16>
      %526 = vector.shape_cast %525 : vector<1x128x7xbf16> to vector<128x7xbf16>
      %cst_157 = arith.constant dense<0.000000e+00> : vector<2x7xf32>
      %527 = tpu.matmul %524, %526, %cst_157 {dimension_numbers = #tpu.dot_dimension_numbers<[1], [0], [0], [1], [0, 0, 1, 1], [], []>} : vector<2x128xbf16>, vector<128x7xbf16>, vector<2x7xf32> -> vector<2x7xf32>
      %528 = arith.addf %521, %527 : vector<2x7xf32>
      %c1_158 = arith.constant 1 : index
      %c0_159 = arith.constant 0 : index
      %c0_160 = arith.constant 0 : index
      %529 = vector.load %arg10[%c1_158, %c0_159, %c0_160] : memref<12x2x128xf32, #tpu.memory_space<vmem>>, vector<1x2x128xf32>
      %530 = vector.shape_cast %529 : vector<1x2x128xf32> to vector<2x128xf32>
      %531 = arith.truncf %530 : vector<2x128xf32> to vector<2x128xbf16>
      %c1_161 = arith.constant 1 : index
      %c0_162 = arith.constant 0 : index
      %c0_163 = arith.constant 0 : index
      %532 = vector.load %arg5[%c1_161, %c0_162, %c0_163] : memref<12x128x7xbf16, #tpu.memory_space<vmem>>, vector<1x128x7xbf16>
      %533 = vector.shape_cast %532 : vector<1x128x7xbf16> to vector<128x7xbf16>
      %cst_164 = arith.constant dense<0.000000e+00> : vector<2x7xf32>
      %534 = tpu.matmul %531, %533, %cst_164 {dimension_numbers = #tpu.dot_dimension_numbers<[1], [0], [0], [1], [0, 0, 1, 1], [], []>} : vector<2x128xbf16>, vector<128x7xbf16>, vector<2x7xf32> -> vector<2x7xf32>
      %535 = arith.addf %528, %534 : vector<2x7xf32>
      %c2_165 = arith.constant 2 : index
      %c0_166 = arith.constant 0 : index
      %c0_167 = arith.constant 0 : index
      %536 = vector.load %arg10[%c2_165, %c0_166, %c0_167] : memref<12x2x128xf32, #tpu.memory_space<vmem>>, vector<1x2x128xf32>
      %537 = vector.shape_cast %536 : vector<1x2x128xf32> to vector<2x128xf32>
      %538 = arith.truncf %537 : vector<2x128xf32> to vector<2x128xbf16>
      %c2_168 = arith.constant 2 : index
      %c0_169 = arith.constant 0 : index
      %c0_170 = arith.constant 0 : index
      %539 = vector.load %arg5[%c2_168, %c0_169, %c0_170] : memref<12x128x7xbf16, #tpu.memory_space<vmem>>, vector<1x128x7xbf16>
      %540 = vector.shape_cast %539 : vector<1x128x7xbf16> to vector<128x7xbf16>
      %cst_171 = arith.constant dense<0.000000e+00> : vector<2x7xf32>
      %541 = tpu.matmul %538, %540, %cst_171 {dimension_numbers = #tpu.dot_dimension_numbers<[1], [0], [0], [1], [0, 0, 1, 1], [], []>} : vector<2x128xbf16>, vector<128x7xbf16>, vector<2x7xf32> -> vector<2x7xf32>
      %542 = arith.addf %535, %541 : vector<2x7xf32>
      %c3 = arith.constant 3 : index
      %c0_172 = arith.constant 0 : index
      %c0_173 = arith.constant 0 : index
      %543 = vector.load %arg10[%c3, %c0_172, %c0_173] : memref<12x2x128xf32, #tpu.memory_space<vmem>>, vector<1x2x128xf32>
      %544 = vector.shape_cast %543 : vector<1x2x128xf32> to vector<2x128xf32>
      %545 = arith.truncf %544 : vector<2x128xf32> to vector<2x128xbf16>
      %c3_174 = arith.constant 3 : index
      %c0_175 = arith.constant 0 : index
      %c0_176 = arith.constant 0 : index
      %546 = vector.load %arg5[%c3_174, %c0_175, %c0_176] : memref<12x128x7xbf16, #tpu.memory_space<vmem>>, vector<1x128x7xbf16>
      %547 = vector.shape_cast %546 : vector<1x128x7xbf16> to vector<128x7xbf16>
      %cst_177 = arith.constant dense<0.000000e+00> : vector<2x7xf32>
      %548 = tpu.matmul %545, %547, %cst_177 {dimension_numbers = #tpu.dot_dimension_numbers<[1], [0], [0], [1], [0, 0, 1, 1], [], []>} : vector<2x128xbf16>, vector<128x7xbf16>, vector<2x7xf32> -> vector<2x7xf32>
      %549 = arith.addf %542, %548 : vector<2x7xf32>
      %c4_178 = arith.constant 4 : index
      %c0_179 = arith.constant 0 : index
      %c0_180 = arith.constant 0 : index
      %550 = vector.load %arg10[%c4_178, %c0_179, %c0_180] : memref<12x2x128xf32, #tpu.memory_space<vmem>>, vector<1x2x128xf32>
      %551 = vector.shape_cast %550 : vector<1x2x128xf32> to vector<2x128xf32>
      %552 = arith.truncf %551 : vector<2x128xf32> to vector<2x128xbf16>
      %c4_181 = arith.constant 4 : index
      %c0_182 = arith.constant 0 : index
      %c0_183 = arith.constant 0 : index
      %553 = vector.load %arg5[%c4_181, %c0_182, %c0_183] : memref<12x128x7xbf16, #tpu.memory_space<vmem>>, vector<1x128x7xbf16>
      %554 = vector.shape_cast %553 : vector<1x128x7xbf16> to vector<128x7xbf16>
      %cst_184 = arith.constant dense<0.000000e+00> : vector<2x7xf32>
      %555 = tpu.matmul %552, %554, %cst_184 {dimension_numbers = #tpu.dot_dimension_numbers<[1], [0], [0], [1], [0, 0, 1, 1], [], []>} : vector<2x128xbf16>, vector<128x7xbf16>, vector<2x7xf32> -> vector<2x7xf32>
      %556 = arith.addf %549, %555 : vector<2x7xf32>
      %c5 = arith.constant 5 : index
      %c0_185 = arith.constant 0 : index
      %c0_186 = arith.constant 0 : index
      %557 = vector.load %arg10[%c5, %c0_185, %c0_186] : memref<12x2x128xf32, #tpu.memory_space<vmem>>, vector<1x2x128xf32>
      %558 = vector.shape_cast %557 : vector<1x2x128xf32> to vector<2x128xf32>
      %559 = arith.truncf %558 : vector<2x128xf32> to vector<2x128xbf16>
      %c5_187 = arith.constant 5 : index
      %c0_188 = arith.constant 0 : index
      %c0_189 = arith.constant 0 : index
      %560 = vector.load %arg5[%c5_187, %c0_188, %c0_189] : memref<12x128x7xbf16, #tpu.memory_space<vmem>>, vector<1x128x7xbf16>
      %561 = vector.shape_cast %560 : vector<1x128x7xbf16> to vector<128x7xbf16>
      %cst_190 = arith.constant dense<0.000000e+00> : vector<2x7xf32>
      %562 = tpu.matmul %559, %561, %cst_190 {dimension_numbers = #tpu.dot_dimension_numbers<[1], [0], [0], [1], [0, 0, 1, 1], [], []>} : vector<2x128xbf16>, vector<128x7xbf16>, vector<2x7xf32> -> vector<2x7xf32>
      %563 = arith.addf %556, %562 : vector<2x7xf32>
      %c6_191 = arith.constant 6 : index
      %c0_192 = arith.constant 0 : index
      %c0_193 = arith.constant 0 : index
      %564 = vector.load %arg10[%c6_191, %c0_192, %c0_193] : memref<12x2x128xf32, #tpu.memory_space<vmem>>, vector<1x2x128xf32>
      %565 = vector.shape_cast %564 : vector<1x2x128xf32> to vector<2x128xf32>
      %566 = arith.truncf %565 : vector<2x128xf32> to vector<2x128xbf16>
      %c6_194 = arith.constant 6 : index
      %c0_195 = arith.constant 0 : index
      %c0_196 = arith.constant 0 : index
      %567 = vector.load %arg5[%c6_194, %c0_195, %c0_196] : memref<12x128x7xbf16, #tpu.memory_space<vmem>>, vector<1x128x7xbf16>
      %568 = vector.shape_cast %567 : vector<1x128x7xbf16> to vector<128x7xbf16>
      %cst_197 = arith.constant dense<0.000000e+00> : vector<2x7xf32>
      %569 = tpu.matmul %566, %568, %cst_197 {dimension_numbers = #tpu.dot_dimension_numbers<[1], [0], [0], [1], [0, 0, 1, 1], [], []>} : vector<2x128xbf16>, vector<128x7xbf16>, vector<2x7xf32> -> vector<2x7xf32>
      %570 = arith.addf %563, %569 : vector<2x7xf32>
      %c7 = arith.constant 7 : index
      %c0_198 = arith.constant 0 : index
      %c0_199 = arith.constant 0 : index
      %571 = vector.load %arg10[%c7, %c0_198, %c0_199] : memref<12x2x128xf32, #tpu.memory_space<vmem>>, vector<1x2x128xf32>
      %572 = vector.shape_cast %571 : vector<1x2x128xf32> to vector<2x128xf32>
      %573 = arith.truncf %572 : vector<2x128xf32> to vector<2x128xbf16>
      %c7_200 = arith.constant 7 : index
      %c0_201 = arith.constant 0 : index
      %c0_202 = arith.constant 0 : index
      %574 = vector.load %arg5[%c7_200, %c0_201, %c0_202] : memref<12x128x7xbf16, #tpu.memory_space<vmem>>, vector<1x128x7xbf16>
      %575 = vector.shape_cast %574 : vector<1x128x7xbf16> to vector<128x7xbf16>
      %cst_203 = arith.constant dense<0.000000e+00> : vector<2x7xf32>
      %576 = tpu.matmul %573, %575, %cst_203 {dimension_numbers = #tpu.dot_dimension_numbers<[1], [0], [0], [1], [0, 0, 1, 1], [], []>} : vector<2x128xbf16>, vector<128x7xbf16>, vector<2x7xf32> -> vector<2x7xf32>
      %577 = arith.addf %570, %576 : vector<2x7xf32>
      %c8_204 = arith.constant 8 : index
      %c0_205 = arith.constant 0 : index
      %c0_206 = arith.constant 0 : index
      %578 = vector.load %arg10[%c8_204, %c0_205, %c0_206] : memref<12x2x128xf32, #tpu.memory_space<vmem>>, vector<1x2x128xf32>
      %579 = vector.shape_cast %578 : vector<1x2x128xf32> to vector<2x128xf32>
      %580 = arith.truncf %579 : vector<2x128xf32> to vector<2x128xbf16>
      %c8_207 = arith.constant 8 : index
      %c0_208 = arith.constant 0 : index
      %c0_209 = arith.constant 0 : index
      %581 = vector.load %arg5[%c8_207, %c0_208, %c0_209] : memref<12x128x7xbf16, #tpu.memory_space<vmem>>, vector<1x128x7xbf16>
      %582 = vector.shape_cast %581 : vector<1x128x7xbf16> to vector<128x7xbf16>
      %cst_210 = arith.constant dense<0.000000e+00> : vector<2x7xf32>
      %583 = tpu.matmul %580, %582, %cst_210 {dimension_numbers = #tpu.dot_dimension_numbers<[1], [0], [0], [1], [0, 0, 1, 1], [], []>} : vector<2x128xbf16>, vector<128x7xbf16>, vector<2x7xf32> -> vector<2x7xf32>
      %584 = arith.addf %577, %583 : vector<2x7xf32>
      %c9 = arith.constant 9 : index
      %c0_211 = arith.constant 0 : index
      %c0_212 = arith.constant 0 : index
      %585 = vector.load %arg10[%c9, %c0_211, %c0_212] : memref<12x2x128xf32, #tpu.memory_space<vmem>>, vector<1x2x128xf32>
      %586 = vector.shape_cast %585 : vector<1x2x128xf32> to vector<2x128xf32>
      %587 = arith.truncf %586 : vector<2x128xf32> to vector<2x128xbf16>
      %c9_213 = arith.constant 9 : index
      %c0_214 = arith.constant 0 : index
      %c0_215 = arith.constant 0 : index
      %588 = vector.load %arg5[%c9_213, %c0_214, %c0_215] : memref<12x128x7xbf16, #tpu.memory_space<vmem>>, vector<1x128x7xbf16>
      %589 = vector.shape_cast %588 : vector<1x128x7xbf16> to vector<128x7xbf16>
      %cst_216 = arith.constant dense<0.000000e+00> : vector<2x7xf32>
      %590 = tpu.matmul %587, %589, %cst_216 {dimension_numbers = #tpu.dot_dimension_numbers<[1], [0], [0], [1], [0, 0, 1, 1], [], []>} : vector<2x128xbf16>, vector<128x7xbf16>, vector<2x7xf32> -> vector<2x7xf32>
      %591 = arith.addf %584, %590 : vector<2x7xf32>
      %c10_217 = arith.constant 10 : index
      %c0_218 = arith.constant 0 : index
      %c0_219 = arith.constant 0 : index
      %592 = vector.load %arg10[%c10_217, %c0_218, %c0_219] : memref<12x2x128xf32, #tpu.memory_space<vmem>>, vector<1x2x128xf32>
      %593 = vector.shape_cast %592 : vector<1x2x128xf32> to vector<2x128xf32>
      %594 = arith.truncf %593 : vector<2x128xf32> to vector<2x128xbf16>
      %c10_220 = arith.constant 10 : index
      %c0_221 = arith.constant 0 : index
      %c0_222 = arith.constant 0 : index
      %595 = vector.load %arg5[%c10_220, %c0_221, %c0_222] : memref<12x128x7xbf16, #tpu.memory_space<vmem>>, vector<1x128x7xbf16>
      %596 = vector.shape_cast %595 : vector<1x128x7xbf16> to vector<128x7xbf16>
      %cst_223 = arith.constant dense<0.000000e+00> : vector<2x7xf32>
      %597 = tpu.matmul %594, %596, %cst_223 {dimension_numbers = #tpu.dot_dimension_numbers<[1], [0], [0], [1], [0, 0, 1, 1], [], []>} : vector<2x128xbf16>, vector<128x7xbf16>, vector<2x7xf32> -> vector<2x7xf32>
      %598 = arith.addf %591, %597 : vector<2x7xf32>
      %c11 = arith.constant 11 : index
      %c0_224 = arith.constant 0 : index
      %c0_225 = arith.constant 0 : index
      %599 = vector.load %arg10[%c11, %c0_224, %c0_225] : memref<12x2x128xf32, #tpu.memory_space<vmem>>, vector<1x2x128xf32>
      %600 = vector.shape_cast %599 : vector<1x2x128xf32> to vector<2x128xf32>
      %601 = arith.truncf %600 : vector<2x128xf32> to vector<2x128xbf16>
      %c11_226 = arith.constant 11 : index
      %c0_227 = arith.constant 0 : index
      %c0_228 = arith.constant 0 : index
      %602 = vector.load %arg5[%c11_226, %c0_227, %c0_228] : memref<12x128x7xbf16, #tpu.memory_space<vmem>>, vector<1x128x7xbf16>
      %603 = vector.shape_cast %602 : vector<1x128x7xbf16> to vector<128x7xbf16>
      %cst_229 = arith.constant dense<0.000000e+00> : vector<2x7xf32>
      %604 = tpu.matmul %601, %603, %cst_229 {dimension_numbers = #tpu.dot_dimension_numbers<[1], [0], [0], [1], [0, 0, 1, 1], [], []>} : vector<2x128xbf16>, vector<128x7xbf16>, vector<2x7xf32> -> vector<2x7xf32>
      %605 = arith.addf %598, %604 : vector<2x7xf32>
      %cst_230 = arith.constant dense<0xFF800000> : vector<2xf32>
      %606 = vector.multi_reduction <maximumf>, %605, %cst_230 [1] : vector<2x7xf32> to vector<2xf32>
      %607 = vector.shape_cast %606 : vector<2xf32> to vector<2x1xf32>
      %608 = vector.broadcast %607 : vector<2x1xf32> to vector<2x7xf32>
      %609 = arith.subf %605, %608 : vector<2x7xf32>
      %610 = math.exp %609 : vector<2x7xf32>
      %cst_231 = arith.constant dense<0.000000e+00> : vector<2xf32>
      %611 = vector.multi_reduction <add>, %610, %cst_231 [1] : vector<2x7xf32> to vector<2xf32>
      %612 = vector.shape_cast %611 : vector<2xf32> to vector<2x1xf32>
      %613 = vector.broadcast %612 : vector<2x1xf32> to vector<2x7xf32>
      %614 = arith.divf %610, %613 : vector<2x7xf32>
      %c0_232 = arith.constant 0 : index
      %c0_233 = arith.constant 0 : index
      %615 = vector.load %arg6[%c0_232, %c0_233] : memref<2x7xf32, #tpu.memory_space<vmem>>, vector<2x7xf32>
      tpu.vector_store %arg6[%c0_232, %c0_233], %614 {strides = array<i32>} : memref<2x7xf32, #tpu.memory_space<vmem>>, vector<2x7xf32>,
    } else {
    }
    return
  }
  func.func @transform_0(%arg0: i32) -> (i32, i32) {
    %c0_i32 = arith.constant 0 : i32
    %c0_i32_0 = arith.constant 0 : i32
    %c0_i32_1 = arith.constant 0 : i32
    return %c0_i32, %c0_i32_0 : i32, i32
  }
  func.func @transform_1(%arg0: i32) -> (i32, i32, i32) {
    %c0_i32 = arith.constant 0 : i32
    %c0_i32_0 = arith.constant 0 : i32
    %c0_i32_1 = arith.constant 0 : i32
    return %arg0, %c0_i32, %c0_i32_0 : i32, i32, i32
  }
  func.func @transform_2(%arg0: i32) -> (i32, i32, i32, i32) {
    %c0_i32 = arith.constant 0 : i32
    %c0_i32_0 = arith.constant 0 : i32
    %c0_i32_1 = arith.constant 0 : i32
    %c0_i32_2 = arith.constant 0 : i32
    return %arg0, %c0_i32, %c0_i32_0, %c0_i32_1 : i32, i32, i32, i32
  }
  func.func @transform_3(%arg0: i32) -> (i32, i32, i32) {
    %c0_i32 = arith.constant 0 : i32
    %c0_i32_0 = arith.constant 0 : i32
    %c0_i32_1 = arith.constant 0 : i32
    return %arg0, %c0_i32, %c0_i32_0 : i32, i32, i32
  }
  func.func @transform_4(%arg0: i32) -> (i32, i32, i32) {
    %c0_i32 = arith.constant 0 : i32
    %c0_i32_0 = arith.constant 0 : i32
    %c0_i32_1 = arith.constant 0 : i32
    %c0_i32_2 = arith.constant 0 : i32
    return %c0_i32, %c0_i32_0, %c0_i32_1 : i32, i32, i32
  }
  func.func @transform_5(%arg0: i32) -> (i32, i32) {
    %c0_i32 = arith.constant 0 : i32
    %c0_i32_0 = arith.constant 0 : i32
    %c0_i32_1 = arith.constant 0 : i32
    return %c0_i32, %c0_i32_0 : i32, i32
  }
}

</mosaic_0001>

<llo_original>
// kernel: lstm_model_forward.1
$region0: #{lstm_model_forward.1}
  #allocation0 [shape = 'u32[]', space=smem, size = 0x4, offset = 0x4, fixed_abs, tag = 'smem constant byte address 0x4 - core index']
  #allocation1 [shape = 'u32[144,128]{1,0:T(1,128)}', space=vmem, size = 0x12000, scoped, tag = 'internal scratch']
  #allocation2 [shape = 'f32[16,128]{1,0:T(8,128)}', space=vmem, size = 0x2000, scoped, tag = 'scratch operand']
  #allocation3 [shape = 'f32[16,128]{1,0:T(8,128)}', space=vmem, size = 0x2000, scoped, tag = 'scratch operand']
  #allocation4 [shape = 'f32[16,1024]{1,0:T(8,128)}', space=vmem, size = 0x10000, scoped, tag = 'scratch operand']
  #allocation5 [shape = 'f32[12,2,128]{2,1,0:T(2,128)}', space=vmem, size = 0x3000, scoped, tag = 'scratch operand']
  %s0 = inlined_call_operand.hbm [shape: f32[16,128], index: 0, kind: input, shape index: {}]
  %s1 = inlined_call_operand.hbm [shape: bf16[6,256,1024], index: 1, kind: input, shape index: {}]
  %s2 = inlined_call_operand.hbm [shape: bf16[6,2,128,512], index: 2, kind: input, shape index: {}]
  %s3 = inlined_call_operand.hbm [shape: f32[6,1,1024], index: 3, kind: input, shape index: {}]
  %s4 = inlined_call_operand.vmem [shape: bf16[12,128,7], index: 4, kind: input, shape index: {}]
  %s5 = inlined_call_operand.hbm [shape: f32[2,7], index: 5, kind: output, shape index: {}]
  %s6 = sld [smem:[#allocation0]]
  $region77: #{lstm_model_forward.1} parent=0
    _
  %s8 = ssub.s32 1, %s6
  %s9 = scalar_select 0, %s8, %s6
  $region1: #{lstm_model_forward.1} parent=0
    #allocation6 [shape = 'u8[8192]{0}', space=vmem, size = 0x2000, scoped, tag = 'input window, operand 0, single buffered']
    #allocation7 [shape = 's32[2]{0}', space=sflag, size = 0x8, scoped, tag = 'scoped memory for lstm_model_forward.1']
    #allocation8 [shape = 's32[2]{0}', space=sflag, size = 0x8, scoped, tag = 'scoped memory for lstm_model_forward.1']
    #allocation9 [shape = 'u8[1048576]{0}', space=vmem, size = 0x100000, scoped, tag = 'input window, operand 1']
    #allocation10 [shape = 's32[2]{0}', space=sflag, size = 0x8, scoped, tag = 'scoped memory for lstm_model_forward.1']
    #allocation11 [shape = 'u8[524288]{0}', space=vmem, size = 0x80000, scoped, tag = 'input window, operand 2']
    #allocation12 [shape = 'u8[8192]{0}', space=vmem, size = 0x2000, scoped, tag = 'input window, operand 3']
    #allocation13 [shape = 's32[2]{0}', space=sflag, size = 0x8, scoped, tag = 'scoped memory for lstm_model_forward.1']
    #allocation14 [shape = 'u8[1024]{0}', space=vmem, size = 0x400, scoped, tag = 'output window, operand 0, single buffered']
    %10 = vsyncpa [#allocation7], 0
    %11 = vsyncpa [#allocation10], 0
    %s12 = scalar_lea.sflag [#allocation10], 1
    %13 = vsyncpa %s12, 0
    %14 = vsyncpa [#allocation13], 0
    %s15 = scalar_lea.sflag [#allocation13], 1
    %16 = vsyncpa %s15, 0
    %17 = vsyncpa [#allocation8], 0
    loop: start=0, step=1, limit=8
    $region2: #{lstm_model_forward.1} parent=1 // loop_pre_header
      _
    $region3: #{lstm_model_forward.1} parent=1 // loop_header
      %s19 = sphi 0, %s23
      %p20 = scmp.ge.s32.totalorder %s19, 8
      %s27 = sphi 0, %s27
      %s29 = sphi 0, %s27
      %s30 = sphi 0, %s29
      %s44 = sphi 0, %s30
      %s50 = sphi 0, %s52
      %s53 = sphi 0, %s50
      %s54 = sphi 0, %s53
      %s70 = sphi 0, %s54
      %s76 = sphi 0, %s78
      %s79 = sphi 0, %s76
      %s80 = sphi 0, %s79
      %s96 = sphi 0, %s80
      %s102 = sphi 0, %s104
      %s105 = sphi 0, %s102
      %s106 = sphi 0, %s105
      %s122 = sphi 0, %s106
      %s126 = sphi 0, %s126
      %s128 = sphi 0, %s126
      %s129 = sphi 0, %s128
      %s143 = sphi 0, %s129
      %s147 = sphi 0, %s147
      %s149 = sphi 0, %s147
      %s150 = sphi 0, %s149
      %s164 = sphi 0, %s150
    $region4: #{lstm_model_forward.1} parent=1 // loop_header_branch
      %22 = sbr.rel (%p20) target = $region8
    $region5: #{lstm_model_forward.1} parent=1 // loop_body
      %s24 = ssub.s32 %s19, 1
      %s25 = ssub.s32 %s19, 2
      %s26 = sadd.s32 %s19, 1
      %s28 = sadd.s32 %s27, 1
      %p31 = scmp.eq.s32.totalorder %s19, 5
      %p32 = scmp.ne.s32.totalorder %s27, %s29
      %p33 = scmp.eq.s32.totalorder %s19, 0
      %p34 = por %p32, %p33
      %p35 = scmp.ne.s32.totalorder %s27, %s29
      %p36 = scmp.eq.s32.totalorder %s24, 5
      %p37 = por %p35, %p36
      %p38 = scmp.ne.s32.totalorder %s29, %s30
      %p39 = scmp.eq.s32.totalorder %s24, 0
      %p40 = por %p38, %p39
      %p41 = scmp.ne.s32.totalorder %s29, %s30
      %p42 = scmp.eq.s32.totalorder %s25, 5
      %p43 = por %p41, %p42
      %p45 = scmp.ne.s32.totalorder %s30, %s44
      %p46 = scmp.eq.s32.totalorder %s25, 0
      %p47 = por %p45, %p46
      %s48 = ssub.s32 %s19, %s26
      %p49 = scmp.eq.s32.totalorder %s48, 0
      %s51 = sadd.s32 %s50, 1
      %s52 = scalar_select %p49, %s50, %s51
      %p55 = pneg %p49
      %p56 = scmp.eq.s32.totalorder %s19, 5
      %p57 = por %p55, %p56
      %p58 = scmp.ne.s32.totalorder %s50, %s53
      %p59 = scmp.eq.s32.totalorder %s19, 0
      %p60 = por %p58, %p59
      %p61 = scmp.ne.s32.totalorder %s50, %s53
      %p62 = scmp.eq.s32.totalorder %s24, 5
      %p63 = por %p61, %p62
      %p64 = scmp.ne.s32.totalorder %s53, %s54
      %p65 = scmp.eq.s32.totalorder %s24, 0
      %p66 = por %p64, %p65
      %p67 = scmp.ne.s32.totalorder %s53, %s54
      %p68 = scmp.eq.s32.totalorder %s25, 5
      %p69 = por %p67, %p68
      %p71 = scmp.ne.s32.totalorder %s54, %s70
      %p72 = scmp.eq.s32.totalorder %s25, 0
      %p73 = por %p71, %p72
      %s74 = ssub.s32 %s19, %s26
      %p75 = scmp.eq.s32.totalorder %s74, 0
      %s77 = sadd.s32 %s76, 1
      %s78 = scalar_select %p75, %s76, %s77
      %p81 = pneg %p75
      %p82 = scmp.eq.s32.totalorder %s19, 5
      %p83 = por %p81, %p82
      %p84 = scmp.ne.s32.totalorder %s76, %s79
      %p85 = scmp.eq.s32.totalorder %s19, 0
      %p86 = por %p84, %p85
      %p87 = scmp.ne.s32.totalorder %s76, %s79
      %p88 = scmp.eq.s32.totalorder %s24, 5
      %p89 = por %p87, %p88
      %p90 = scmp.ne.s32.totalorder %s79, %s80
      %p91 = scmp.eq.s32.totalorder %s24, 0
      %p92 = por %p90, %p91
      %p93 = scmp.ne.s32.totalorder %s79, %s80
      %p94 = scmp.eq.s32.totalorder %s25, 5
      %p95 = por %p93, %p94
      %p97 = scmp.ne.s32.totalorder %s80, %s96
      %p98 = scmp.eq.s32.totalorder %s25, 0
      %p99 = por %p97, %p98
      %s100 = ssub.s32 %s19, %s26
      %p101 = scmp.eq.s32.totalorder %s100, 0
      %s103 = sadd.s32 %s102, 1
      %s104 = scalar_select %p101, %s102, %s103
      %p107 = pneg %p101
      %p108 = scmp.eq.s32.totalorder %s19, 5
      %p109 = por %p107, %p108
      %p110 = scmp.ne.s32.totalorder %s102, %s105
      %p111 = scmp.eq.s32.totalorder %s19, 0
      %p112 = por %p110, %p111
      %p113 = scmp.ne.s32.totalorder %s102, %s105
      %p114 = scmp.eq.s32.totalorder %s24, 5
      %p115 = por %p113, %p114
      %p116 = scmp.ne.s32.totalorder %s105, %s106
      %p117 = scmp.eq.s32.totalorder %s24, 0
      %p118 = por %p116, %p117
      %p119 = scmp.ne.s32.totalorder %s105, %s106
      %p120 = scmp.eq.s32.totalorder %s25, 5
      %p121 = por %p119, %p120
      %p123 = scmp.ne.s32.totalorder %s106, %s122
      %p124 = scmp.eq.s32.totalorder %s25, 0
      %p125 = por %p123, %p124
      %s127 = sadd.s32 %s126, 1
      %p130 = scmp.eq.s32.totalorder %s19, 5
      %p131 = scmp.ne.s32.totalorder %s126, %s128
      %p132 = scmp.eq.s32.totalorder %s19, 0
      %p133 = por %p131, %p132
      %p134 = scmp.ne.s32.totalorder %s126, %s128
      %p135 = scmp.eq.s32.totalorder %s24, 5
      %p136 = por %p134, %p135
      %p137 = scmp.ne.s32.totalorder %s128, %s129
      %p138 = scmp.eq.s32.totalorder %s24, 0
      %p139 = por %p137, %p138
      %p140 = scmp.ne.s32.totalorder %s128, %s129
      %p141 = scmp.eq.s32.totalorder %s25, 5
      %p142 = por %p140, %p141
      %p144 = scmp.ne.s32.totalorder %s129, %s143
      %p145 = scmp.eq.s32.totalorder %s25, 0
      %p146 = por %p144, %p145
      %s148 = sadd.s32 %s147, 1
      %p151 = scmp.eq.s32.totalorder %s19, 5
      %p152 = scmp.ne.s32.totalorder %s147, %s149
      %p153 = scmp.eq.s32.totalorder %s19, 0
      %p154 = por %p152, %p153
      %p155 = scmp.ne.s32.totalorder %s147, %s149
      %p156 = scmp.eq.s32.totalorder %s24, 5
      %p157 = por %p155, %p156
      %p158 = scmp.ne.s32.totalorder %s149, %s150
      %p159 = scmp.eq.s32.totalorder %s24, 0
      %p160 = por %p158, %p159
      %p161 = scmp.ne.s32.totalorder %s149, %s150
      %p162 = scmp.eq.s32.totalorder %s25, 5
      %p163 = por %p161, %p162
      %p165 = scmp.ne.s32.totalorder %s150, %s164
      %p166 = scmp.eq.s32.totalorder %s25, 0
      %p167 = por %p165, %p166
      %p168 = scmp.le.s32.totalorder 1, %s19
      %p169 = scmp.lt.s32.totalorder %s19, 7
      %p170 = pnand %p168, %p169
      %p171 = pneg %p170
      // Predicated region
      $region9: #{lstm_model_forward.1} parent=5 // pred_check
        _
      $region10: #{lstm_model_forward.1} parent=5 // pred_check_branch
        %173 = sbr.rel (%p170) target = $region12
      $region11: #{lstm_model_forward.1} parent=5 // pred_region
        %s174 = ssub.s32 %s19, 1
        // Predicated region
        $region13: #{lstm_model_forward.1} parent=11 // pred_check
          %p175 = pneg %p40
        $region14: #{lstm_model_forward.1} parent=11 // pred_check_branch
          %177 = sbr.rel (%p175) target = $region16
        $region15: #{lstm_model_forward.1} parent=11 // pred_region
          %s179 = ssub.s32 256, 256
          %180 = vsyncadd [#allocation7], %s179
          %s181 = sshll.u32 [#allocation6], 4
          %s182 = int_to_ptr.vmem [resolvable:$true] %s181
          %187 = dma.hbm_to_vmem [thread:$0]  %s0, 256, %s182, [#allocation7], 128, 128, 8
        $region16: #{lstm_model_forward.1} parent=11 // pred_fallthru
          _
        // Predicated region
        $region17: #{lstm_model_forward.1} parent=11 // pred_check
          %p188 = pneg %p139
        $region18: #{lstm_model_forward.1} parent=11 // pred_check_branch
          %190 = sbr.rel (%p188) target = $region20
        $region19: #{lstm_model_forward.1} parent=11 // pred_region
          _
        $region20: #{lstm_model_forward.1} parent=11 // pred_fallthru
          _
      $region12: #{lstm_model_forward.1} parent=5 // pred_fallthru
        _
      %p191 = scmp.lt.s32.totalorder %s19, 6
      // Predicated region
      $region21: #{lstm_model_forward.1} parent=5 // pred_check
        %p192 = pneg %p191
      $region22: #{lstm_model_forward.1} parent=5 // pred_check_branch
        %194 = sbr.rel (%p192) target = $region24
      $region23: #{lstm_model_forward.1} parent=5 // pred_region
        // Predicated region
        $region25: #{lstm_model_forward.1} parent=23 // pred_check
          %p195 = pneg %p60
        $region26: #{lstm_model_forward.1} parent=23 // pred_check_branch
          %197 = sbr.rel (%p195) target = $region28
        $region27: #{lstm_model_forward.1} parent=23 // pred_region
          %s198 = sand.u32 %s19, 1
          %s199 = scalar_lea.sflag [#allocation10], %s198
          %s200 = sand.u32 %s50, 1
          %s201 = smul.addr %s200, 1024
          %s202 = scalar_lea.vmem [#allocation9], %s201
          %s204 = ssub.s32 16384, 16384
          %205 = vsyncadd %s199, %s204
          %s206 = smul.addr %s19, 256
          %s207 = smul.addr %s206, 64
          %s208 = scalar_lea.hbm %s1, %s207
          %s209 = sshll.u32 %s202, 4
          %s210 = int_to_ptr.vmem [resolvable:$true] %s209
          %215 = dma.hbm_to_vmem [thread:$0]  %s208, 16384, %s210, %s199, 512, 512, 32
        $region28: #{lstm_model_forward.1} parent=23 // pred_fallthru
          _
        // Predicated region
        $region29: #{lstm_model_forward.1} parent=23 // pred_check
          %p216 = pneg %p86
        $region30: #{lstm_model_forward.1} parent=23 // pred_check_branch
          %218 = sbr.rel (%p216) target = $region32
        $region31: #{lstm_model_forward.1} parent=23 // pred_region
          %s219 = sand.u32 %s19, 1
          %s220 = scalar_lea.sflag [#allocation10], %s219
          %s221 = sand.u32 %s76, 1
          %s222 = smul.addr %s221, 512
          %s223 = scalar_lea.vmem [#allocation11], %s222
          %s225 = ssub.s32 8192, 8192
          %226 = vsyncadd %s220, %s225
          %s227 = smul.addr %s19, 128
          %s228 = smul.addr %s227, 64
          %s229 = scalar_lea.hbm %s2, %s228
          %s230 = sshll.u32 %s223, 4
          %s231 = int_to_ptr.vmem [resolvable:$true] %s230
          %236 = dma.hbm_to_vmem [thread:$0]  %s229, 8192, %s231, %s220, 256, 256, 16
        $region32: #{lstm_model_forward.1} parent=23 // pred_fallthru
          _
        // Predicated region
        $region33: #{lstm_model_forward.1} parent=23 // pred_check
          %p237 = pneg %p112
        $region34: #{lstm_model_forward.1} parent=23 // pred_check_branch
          %239 = sbr.rel (%p237) target = $region36
        $region35: #{lstm_model_forward.1} parent=23 // pred_region
          %s240 = sand.u32 %s102, 1
          %s241 = scalar_lea.sflag [#allocation13], %s240
          %s242 = sand.u32 %s102, 1
          %s243 = smul.addr %s242, 8
          %s244 = scalar_lea.vmem [#allocation12], %s243
          %s246 = ssub.s32 128, 128
          %247 = vsyncadd %s241, %s246
          %s248 = smul.addr %s19, 8
          %s249 = smul.addr %s248, 16
          %s250 = scalar_lea.hbm %s3, %s249
          %s252 = sshll.u32 %s244, 4
          %s253 = int_to_ptr.vmem [resolvable:$true] %s252
          %255 = dma.hbm_to_vmem [thread:$0]  %s250, 128, %s253, %s241
        $region36: #{lstm_model_forward.1} parent=23 // pred_fallthru
          _
      $region24: #{lstm_model_forward.1} parent=5 // pred_fallthru
        _
      %p256 = scmp.le.s32.totalorder 1, %s19
      %p257 = scmp.lt.s32.totalorder %s19, 7
      %p258 = pnand %p256, %p257
      %p259 = pneg %p258
      // Predicated region
      $region37: #{lstm_model_forward.1} parent=5 // pred_check
        _
      $region38: #{lstm_model_forward.1} parent=5 // pred_check_branch
        %261 = sbr.rel (%p258) target = $region40
      $region39: #{lstm_model_forward.1} parent=5 // pred_region
        %s262 = ssub.s32 %s19, 1
        // Predicated region
        $region41: #{lstm_model_forward.1} parent=39 // pred_check
          %p263 = pneg %p40
        $region42: #{lstm_model_forward.1} parent=39 // pred_check_branch
          %265 = sbr.rel (%p263) target = $region44
        $region43: #{lstm_model_forward.1} parent=39 // pred_region
          %266 = dma.done [#allocation7], 256
        $region44: #{lstm_model_forward.1} parent=39 // pred_fallthru
          _
        %s267 = sand.u32 %s24, 1
        %s268 = scalar_lea.sflag [#allocation10], %s267
        %s269 = sand.u32 %s53, 1
        %s270 = smul.addr %s269, 1024
        %s271 = scalar_lea.vmem [#allocation9], %s270
        // Predicated region
        $region45: #{lstm_model_forward.1} parent=39 // pred_check
          %p272 = pneg %p66
        $region46: #{lstm_model_forward.1} parent=39 // pred_check_branch
          %274 = sbr.rel (%p272) target = $region48
        $region47: #{lstm_model_forward.1} parent=39 // pred_region
          %275 = dma.done %s268, 16384
        $region48: #{lstm_model_forward.1} parent=39 // pred_fallthru
          _
        %s276 = sand.u32 %s24, 1
        %s277 = scalar_lea.sflag [#allocation10], %s276
        %s278 = sand.u32 %s79, 1
        %s279 = smul.addr %s278, 512
        %s280 = scalar_lea.vmem [#allocation11], %s279
        // Predicated region
        $region49: #{lstm_model_forward.1} parent=39 // pred_check
          %p281 = pneg %p92
        $region50: #{lstm_model_forward.1} parent=39 // pred_check_branch
          %283 = sbr.rel (%p281) target = $region52
        $region51: #{lstm_model_forward.1} parent=39 // pred_region
          %284 = dma.done %s277, 8192
        $region52: #{lstm_model_forward.1} parent=39 // pred_fallthru
          _
        %s285 = sand.u32 %s105, 1
        %s286 = scalar_lea.sflag [#allocation13], %s285
        %s287 = sand.u32 %s105, 1
        %s288 = smul.addr %s287, 8
        %s289 = scalar_lea.vmem [#allocation12], %s288
        // Predicated region
        $region53: #{lstm_model_forward.1} parent=39 // pred_check
          %p290 = pneg %p118
        $region54: #{lstm_model_forward.1} parent=39 // pred_check_branch
          %292 = sbr.rel (%p290) target = $region56
        $region55: #{lstm_model_forward.1} parent=39 // pred_region
          %293 = dma.done %s286, 128
        $region56: #{lstm_model_forward.1} parent=39 // pred_fallthru
          _
        %p294 = pneg %p40
        %p295 = pneg %p37
        %s296 = sand.u32 %s24, 1
        %s297 = scalar_lea.sflag [#allocation10], %s296
        %s298 = sand.u32 %s53, 1
        %s299 = smul.addr %s298, 1024
        %s300 = scalar_lea.vmem [#allocation9], %s299
        %p301 = pneg %p66
        %p302 = pneg %p63
        %s303 = sand.u32 %s24, 1
        %s304 = scalar_lea.sflag [#allocation10], %s303
        %s305 = sand.u32 %s79, 1
        %s306 = smul.addr %s305, 512
        %s307 = scalar_lea.vmem [#allocation11], %s306
        %p308 = pneg %p92
        %p309 = pneg %p89
        %s310 = sand.u32 %s105, 1
        %s311 = scalar_lea.sflag [#allocation13], %s310
        %s312 = sand.u32 %s105, 1
        %s313 = smul.addr %s312, 8
        %s314 = scalar_lea.vmem [#allocation12], %s313
        %p315 = pneg %p118
        %p316 = pneg %p115
        %p317 = pneg %p139
        %p318 = pneg %p136
        %p319 = pneg %p160
        %p320 = pneg %p157
        %p322 = scmp.eq.s32.totalorder %s24, 0
        // Predicated region
        $region57: #{lstm_model_forward.1} parent=39 // pred_check
          %p323 = pneg %p322
        $region58: #{lstm_model_forward.1} parent=39 // pred_check_branch
          %325 = sbr.rel (%p323) target = $region60
        $region59: #{lstm_model_forward.1} parent=39 // pred_region
          %v326 = vld [vmem:[#allocation6] sm:$0xff]
          %v327 = vld [vmem:[#allocation6 + $0x8] sm:$0xff]
          %328 = vst [vmem:[#allocation2] sm:$0xff] %v326
          %329 = vst [vmem:[#allocation2 + $0x8] sm:$0xff] %v327
          %330 = vst [vmem:[#allocation3] sm:$0xff] 0.0
          %331 = vst [vmem:[#allocation3 + $0x8] sm:$0xff] 0.0
        $region60: #{lstm_model_forward.1} parent=39 // pred_fallthru
          _
        %v332 = vld [vmem:[#allocation2] sm:$0xff]
        %v333 = vld [vmem:[#allocation2 + $0x8] sm:$0xff]
        %v334 = vpack.c.bf16 %v333, %v332
        %v335 = vld [vmem:[#allocation3] sm:$0xff]
        %v336 = vld [vmem:[#allocation3 + $0x8] sm:$0xff]
        %v337 = vpack.c.bf16 %v336, %v335
        %v338 = vld [vmem:[%s271] sm:$0xff]
        %v339 = vld [vmem:[%s271 + $0x8] sm:$0xff]
        %v340 = vld [vmem:[%s271 + $0x10] sm:$0xff]
        %v341 = vld [vmem:[%s271 + $0x18] sm:$0xff]
        %v342 = vld [vmem:[%s271 + $0x20] sm:$0xff]
        %v343 = vld [vmem:[%s271 + $0x28] sm:$0xff]
        %v344 = vld [vmem:[%s271 + $0x30] sm:$0xff]
        %v345 = vld [vmem:[%s271 + $0x38] sm:$0xff]
        %v346 = vld [vmem:[%s271 + $0x40] sm:$0xff]
        %v347 = vld [vmem:[%s271 + $0x48] sm:$0xff]
        %v348 = vld [vmem:[%s271 + $0x50] sm:$0xff]
        %v349 = vld [vmem:[%s271 + $0x58] sm:$0xff]
        %v350 = vld [vmem:[%s271 + $0x60] sm:$0xff]
        %v351 = vld [vmem:[%s271 + $0x68] sm:$0xff]
        %v352 = vld [vmem:[%s271 + $0x70] sm:$0xff]
        %v353 = vld [vmem:[%s271 + $0x78] sm:$0xff]
        %v354 = vld [vmem:[%s271 + $0x80] sm:$0xff]
        %v355 = vld [vmem:[%s271 + $0x88] sm:$0xff]
        %v356 = vld [vmem:[%s271 + $0x90] sm:$0xff]
        %v357 = vld [vmem:[%s271 + $0x98] sm:$0xff]
        %v358 = vld [vmem:[%s271 + $0xa0] sm:$0xff]
        %v359 = vld [vmem:[%s271 + $0xa8] sm:$0xff]
        %v360 = vld [vmem:[%s271 + $0xb0] sm:$0xff]
        %v361 = vld [vmem:[%s271 + $0xb8] sm:$0xff]
        %v362 = vld [vmem:[%s271 + $0xc0] sm:$0xff]
        %v363 = vld [vmem:[%s271 + $0xc8] sm:$0xff]
        %v364 = vld [vmem:[%s271 + $0xd0] sm:$0xff]
        %v365 = vld [vmem:[%s271 + $0xd8] sm:$0xff]
        %v366 = vld [vmem:[%s271 + $0xe0] sm:$0xff]
        %v367 = vld [vmem:[%s271 + $0xe8] sm:$0xff]
        %v368 = vld [vmem:[%s271 + $0xf0] sm:$0xff]
        %v369 = vld [vmem:[%s271 + $0xf8] sm:$0xff]
        %v370 = vld [vmem:[%s271 + $0x100] sm:$0xff]
        %v371 = vld [vmem:[%s271 + $0x108] sm:$0xff]
        %v372 = vld [vmem:[%s271 + $0x110] sm:$0xff]
        %v373 = vld [vmem:[%s271 + $0x118] sm:$0xff]
        %v374 = vld [vmem:[%s271 + $0x120] sm:$0xff]
        %v375 = vld [vmem:[%s271 + $0x128] sm:$0xff]
        %v376 = vld [vmem:[%s271 + $0x130] sm:$0xff]
        %v377 = vld [vmem:[%s271 + $0x138] sm:$0xff]
        %v378 = vld [vmem:[%s271 + $0x140] sm:$0xff]
        %v379 = vld [vmem:[%s271 + $0x148] sm:$0xff]
        %v380 = vld [vmem:[%s271 + $0x150] sm:$0xff]
        %v381 = vld [vmem:[%s271 + $0x158] sm:$0xff]
        %v382 = vld [vmem:[%s271 + $0x160] sm:$0xff]
        %v383 = vld [vmem:[%s271 + $0x168] sm:$0xff]
        %v384 = vld [vmem:[%s271 + $0x170] sm:$0xff]
        %v385 = vld [vmem:[%s271 + $0x178] sm:$0xff]
        %v386 = vld [vmem:[%s271 + $0x180] sm:$0xff]
        %v387 = vld [vmem:[%s271 + $0x188] sm:$0xff]
        %v388 = vld [vmem:[%s271 + $0x190] sm:$0xff]
        %v389 = vld [vmem:[%s271 + $0x198] sm:$0xff]
        %v390 = vld [vmem:[%s271 + $0x1a0] sm:$0xff]
        %v391 = vld [vmem:[%s271 + $0x1a8] sm:$0xff]
        %v392 = vld [vmem:[%s271 + $0x1b0] sm:$0xff]
        %v393 = vld [vmem:[%s271 + $0x1b8] sm:$0xff]
        %v394 = vld [vmem:[%s271 + $0x1c0] sm:$0xff]
        %v395 = vld [vmem:[%s271 + $0x1c8] sm:$0xff]
        %v396 = vld [vmem:[%s271 + $0x1d0] sm:$0xff]
        %v397 = vld [vmem:[%s271 + $0x1d8] sm:$0xff]
        %v398 = vld [vmem:[%s271 + $0x1e0] sm:$0xff]
        %v399 = vld [vmem:[%s271 + $0x1e8] sm:$0xff]
        %v400 = vld [vmem:[%s271 + $0x1f0] sm:$0xff]
        %v401 = vld [vmem:[%s271 + $0x1f8] sm:$0xff]
        %v402 = vld [vmem:[%s271 + $0x200] sm:$0xff]
        %v403 = vld [vmem:[%s271 + $0x208] sm:$0xff]
        %v404 = vld [vmem:[%s271 + $0x210] sm:$0xff]
        %v405 = vld [vmem:[%s271 + $0x218] sm:$0xff]
        %v406 = vld [vmem:[%s271 + $0x220] sm:$0xff]
        %v407 = vld [vmem:[%s271 + $0x228] sm:$0xff]
        %v408 = vld [vmem:[%s271 + $0x230] sm:$0xff]
        %v409 = vld [vmem:[%s271 + $0x238] sm:$0xff]
        %v410 = vld [vmem:[%s271 + $0x240] sm:$0xff]
        %v411 = vld [vmem:[%s271 + $0x248] sm:$0xff]
        %v412 = vld [vmem:[%s271 + $0x250] sm:$0xff]
        %v413 = vld [vmem:[%s271 + $0x258] sm:$0xff]
        %v414 = vld [vmem:[%s271 + $0x260] sm:$0xff]
        %v415 = vld [vmem:[%s271 + $0x268] sm:$0xff]
        %v416 = vld [vmem:[%s271 + $0x270] sm:$0xff]
        %v417 = vld [vmem:[%s271 + $0x278] sm:$0xff]
        %v418 = vld [vmem:[%s271 + $0x280] sm:$0xff]
        %v419 = vld [vmem:[%s271 + $0x288] sm:$0xff]
        %v420 = vld [vmem:[%s271 + $0x290] sm:$0xff]
        %v421 = vld [vmem:[%s271 + $0x298] sm:$0xff]
        %v422 = vld [vmem:[%s271 + $0x2a0] sm:$0xff]
        %v423 = vld [vmem:[%s271 + $0x2a8] sm:$0xff]
        %v424 = vld [vmem:[%s271 + $0x2b0] sm:$0xff]
        %v425 = vld [vmem:[%s271 + $0x2b8] sm:$0xff]
        %v426 = vld [vmem:[%s271 + $0x2c0] sm:$0xff]
        %v427 = vld [vmem:[%s271 + $0x2c8] sm:$0xff]
        %v428 = vld [vmem:[%s271 + $0x2d0] sm:$0xff]
        %v429 = vld [vmem:[%s271 + $0x2d8] sm:$0xff]
        %v430 = vld [vmem:[%s271 + $0x2e0] sm:$0xff]
        %v431 = vld [vmem:[%s271 + $0x2e8] sm:$0xff]
        %v432 = vld [vmem:[%s271 + $0x2f0] sm:$0xff]
        %v433 = vld [vmem:[%s271 + $0x2f8] sm:$0xff]
        %v434 = vld [vmem:[%s271 + $0x300] sm:$0xff]
        %v435 = vld [vmem:[%s271 + $0x308] sm:$0xff]
        %v436 = vld [vmem:[%s271 + $0x310] sm:$0xff]
        %v437 = vld [vmem:[%s271 + $0x318] sm:$0xff]
        %v438 = vld [vmem:[%s271 + $0x320] sm:$0xff]
        %v439 = vld [vmem:[%s271 + $0x328] sm:$0xff]
        %v440 = vld [vmem:[%s271 + $0x330] sm:$0xff]
        %v441 = vld [vmem:[%s271 + $0x338] sm:$0xff]
        %v442 = vld [vmem:[%s271 + $0x340] sm:$0xff]
        %v443 = vld [vmem:[%s271 + $0x348] sm:$0xff]
        %v444 = vld [vmem:[%s271 + $0x350] sm:$0xff]
        %v445 = vld [vmem:[%s271 + $0x358] sm:$0xff]
        %v446 = vld [vmem:[%s271 + $0x360] sm:$0xff]
        %v447 = vld [vmem:[%s271 + $0x368] sm:$0xff]
        %v448 = vld [vmem:[%s271 + $0x370] sm:$0xff]
        %v449 = vld [vmem:[%s271 + $0x378] sm:$0xff]
        %v450 = vld [vmem:[%s271 + $0x380] sm:$0xff]
        %v451 = vld [vmem:[%s271 + $0x388] sm:$0xff]
        %v452 = vld [vmem:[%s271 + $0x390] sm:$0xff]
        %v453 = vld [vmem:[%s271 + $0x398] sm:$0xff]
        %v454 = vld [vmem:[%s271 + $0x3a0] sm:$0xff]
        %v455 = vld [vmem:[%s271 + $0x3a8] sm:$0xff]
        %v456 = vld [vmem:[%s271 + $0x3b0] sm:$0xff]
        %v457 = vld [vmem:[%s271 + $0x3b8] sm:$0xff]
        %v458 = vld [vmem:[%s271 + $0x3c0] sm:$0xff]
        %v459 = vld [vmem:[%s271 + $0x3c8] sm:$0xff]
        %v460 = vld [vmem:[%s271 + $0x3d0] sm:$0xff]
        %v461 = vld [vmem:[%s271 + $0x3d8] sm:$0xff]
        %v462 = vld [vmem:[%s271 + $0x3e0] sm:$0xff]
        %v463 = vld [vmem:[%s271 + $0x3e8] sm:$0xff]
        %v464 = vld [vmem:[%s271 + $0x3f0] sm:$0xff]
        %v465 = vld [vmem:[%s271 + $0x3f8] sm:$0xff]
        %v530 = vunpack.c.l.b16 %v402
        %v531 = vunpack.c.h.b16 %v402
        %v532 = vunpack.c.l.b16 %v403
        %v533 = vunpack.c.h.b16 %v403
        %v534 = vunpack.c.l.b16 %v404
        %v535 = vunpack.c.h.b16 %v404
        %v536 = vunpack.c.l.b16 %v405
        %v537 = vunpack.c.h.b16 %v405
        %v538 = vunpack.c.l.b16 %v406
        %v539 = vunpack.c.h.b16 %v406
        %v540 = vunpack.c.l.b16 %v407
        %v541 = vunpack.c.h.b16 %v407
        %v542 = vunpack.c.l.b16 %v408
        %v543 = vunpack.c.h.b16 %v408
        %v544 = vunpack.c.l.b16 %v409
        %v545 = vunpack.c.h.b16 %v409
        %v546 = vunpack.c.l.b16 %v410
        %v547 = vunpack.c.h.b16 %v410
        %v548 = vunpack.c.l.b16 %v411
        %v549 = vunpack.c.h.b16 %v411
        %v550 = vunpack.c.l.b16 %v412
        %v551 = vunpack.c.h.b16 %v412
        %v552 = vunpack.c.l.b16 %v413
        %v553 = vunpack.c.h.b16 %v413
        %v554 = vunpack.c.l.b16 %v414
        %v555 = vunpack.c.h.b16 %v414
        %v556 = vunpack.c.l.b16 %v415
        %v557 = vunpack.c.h.b16 %v415
        %v558 = vunpack.c.l.b16 %v416
        %v559 = vunpack.c.h.b16 %v416
        %v560 = vunpack.c.l.b16 %v417
        %v561 = vunpack.c.h.b16 %v417
        %v562 = vunpack.c.l.b16 %v418
        %v563 = vunpack.c.h.b16 %v418
        %v564 = vunpack.c.l.b16 %v419
        %v565 = vunpack.c.h.b16 %v419
        %v566 = vunpack.c.l.b16 %v420
        %v567 = vunpack.c.h.b16 %v420
        %v568 = vunpack.c.l.b16 %v421
        %v569 = vunpack.c.h.b16 %v421
        %v570 = vunpack.c.l.b16 %v422
        %v571 = vunpack.c.h.b16 %v422
        %v572 = vunpack.c.l.b16 %v423
        %v573 = vunpack.c.h.b16 %v423
        %v574 = vunpack.c.l.b16 %v424
        %v575 = vunpack.c.h.b16 %v424
        %v576 = vunpack.c.l.b16 %v425
        %v577 = vunpack.c.h.b16 %v425
        %v578 = vunpack.c.l.b16 %v426
        %v579 = vunpack.c.h.b16 %v426
        %v580 = vunpack.c.l.b16 %v427
        %v581 = vunpack.c.h.b16 %v427
        %v582 = vunpack.c.l.b16 %v428
        %v583 = vunpack.c.h.b16 %v428
        %v584 = vunpack.c.l.b16 %v429
        %v585 = vunpack.c.h.b16 %v429
        %v586 = vunpack.c.l.b16 %v430
        %v587 = vunpack.c.h.b16 %v430
        %v588 = vunpack.c.l.b16 %v431
        %v589 = vunpack.c.h.b16 %v431
        %v590 = vunpack.c.l.b16 %v432
        %v591 = vunpack.c.h.b16 %v432
        %v592 = vunpack.c.l.b16 %v433
        %v593 = vunpack.c.h.b16 %v433
        %v594 = vunpack.c.l.b16 %v434
        %v595 = vunpack.c.h.b16 %v434
        %v596 = vunpack.c.l.b16 %v435
        %v597 = vunpack.c.h.b16 %v435
        %v598 = vunpack.c.l.b16 %v436
        %v599 = vunpack.c.h.b16 %v436
        %v600 = vunpack.c.l.b16 %v437
        %v601 = vunpack.c.h.b16 %v437
        %v602 = vunpack.c.l.b16 %v438
        %v603 = vunpack.c.h.b16 %v438
        %v604 = vunpack.c.l.b16 %v439
        %v605 = vunpack.c.h.b16 %v439
        %v606 = vunpack.c.l.b16 %v440
        %v607 = vunpack.c.h.b16 %v440
        %v608 = vunpack.c.l.b16 %v441
        %v609 = vunpack.c.h.b16 %v441
        %v610 = vunpack.c.l.b16 %v442
        %v611 = vunpack.c.h.b16 %v442
        %v612 = vunpack.c.l.b16 %v443
        %v613 = vunpack.c.h.b16 %v443
        %v614 = vunpack.c.l.b16 %v444
        %v615 = vunpack.c.h.b16 %v444
        %v616 = vunpack.c.l.b16 %v445
        %v617 = vunpack.c.h.b16 %v445
        %v618 = vunpack.c.l.b16 %v446
        %v619 = vunpack.c.h.b16 %v446
        %v620 = vunpack.c.l.b16 %v447
        %v621 = vunpack.c.h.b16 %v447
        %v622 = vunpack.c.l.b16 %v448
        %v623 = vunpack.c.h.b16 %v448
        %v624 = vunpack.c.l.b16 %v449
        %v625 = vunpack.c.h.b16 %v449
        %v626 = vunpack.c.l.b16 %v450
        %v627 = vunpack.c.h.b16 %v450
        %v628 = vunpack.c.l.b16 %v451
        %v629 = vunpack.c.h.b16 %v451
        %v630 = vunpack.c.l.b16 %v452
        %v631 = vunpack.c.h.b16 %v452
        %v632 = vunpack.c.l.b16 %v453
        %v633 = vunpack.c.h.b16 %v453
        %v634 = vunpack.c.l.b16 %v454
        %v635 = vunpack.c.h.b16 %v454
        %v636 = vunpack.c.l.b16 %v455
        %v637 = vunpack.c.h.b16 %v455
        %v638 = vunpack.c.l.b16 %v456
        %v639 = vunpack.c.h.b16 %v456
        %v640 = vunpack.c.l.b16 %v457
        %v641 = vunpack.c.h.b16 %v457
        %v642 = vunpack.c.l.b16 %v458
        %v643 = vunpack.c.h.b16 %v458
        %v644 = vunpack.c.l.b16 %v459
        %v645 = vunpack.c.h.b16 %v459
        %v646 = vunpack.c.l.b16 %v460
        %v647 = vunpack.c.h.b16 %v460
        %v648 = vunpack.c.l.b16 %v461
        %v649 = vunpack.c.h.b16 %v461
        %v650 = vunpack.c.l.b16 %v462
        %v651 = vunpack.c.h.b16 %v462
        %v652 = vunpack.c.l.b16 %v463
        %v653 = vunpack.c.h.b16 %v463
        %v654 = vunpack.c.l.b16 %v464
        %v655 = vunpack.c.h.b16 %v464
        %v656 = vunpack.c.l.b16 %v465
        %v657 = vunpack.c.h.b16 %v465
        %v658 = vpack.c.b16 %v538, %v530
        %v659 = vpack.c.b16 %v539, %v531
        %v660 = vpack.c.b16 %v540, %v532
        %v661 = vpack.c.b16 %v541, %v533
        %v662 = vpack.c.b16 %v542, %v534
        %v663 = vpack.c.b16 %v543, %v535
        %v664 = vpack.c.b16 %v544, %v536
        %v665 = vpack.c.b16 %v545, %v537
        %v666 = vpack.c.b16 %v554, %v546
        %v667 = vpack.c.b16 %v555, %v547
        %v668 = vpack.c.b16 %v556, %v548
        %v669 = vpack.c.b16 %v557, %v549
        %v670 = vpack.c.b16 %v558, %v550
        %v671 = vpack.c.b16 %v559, %v551
        %v672 = vpack.c.b16 %v560, %v552
        %v673 = vpack.c.b16 %v561, %v553
        %v674 = vpack.c.b16 %v570, %v562
        %v675 = vpack.c.b16 %v571, %v563
        %v676 = vpack.c.b16 %v572, %v564
        %v677 = vpack.c.b16 %v573, %v565
        %v678 = vpack.c.b16 %v574, %v566
        %v679 = vpack.c.b16 %v575, %v567
        %v680 = vpack.c.b16 %v576, %v568
        %v681 = vpack.c.b16 %v577, %v569
        %v682 = vpack.c.b16 %v586, %v578
        %v683 = vpack.c.b16 %v587, %v579
        %v684 = vpack.c.b16 %v588, %v580
        %v685 = vpack.c.b16 %v589, %v581
        %v686 = vpack.c.b16 %v590, %v582
        %v687 = vpack.c.b16 %v591, %v583
        %v688 = vpack.c.b16 %v592, %v584
        %v689 = vpack.c.b16 %v593, %v585
        %v690 = vpack.c.b16 %v602, %v594
        %v691 = vpack.c.b16 %v603, %v595
        %v692 = vpack.c.b16 %v604, %v596
        %v693 = vpack.c.b16 %v605, %v597
        %v694 = vpack.c.b16 %v606, %v598
        %v695 = vpack.c.b16 %v607, %v599
        %v696 = vpack.c.b16 %v608, %v600
        %v697 = vpack.c.b16 %v609, %v601
        %v698 = vpack.c.b16 %v618, %v610
        %v699 = vpack.c.b16 %v619, %v611
        %v700 = vpack.c.b16 %v620, %v612
        %v701 = vpack.c.b16 %v621, %v613
        %v702 = vpack.c.b16 %v622, %v614
        %v703 = vpack.c.b16 %v623, %v615
        %v704 = vpack.c.b16 %v624, %v616
        %v705 = vpack.c.b16 %v625, %v617
        %v706 = vpack.c.b16 %v634, %v626
        %v707 = vpack.c.b16 %v635, %v627
        %v708 = vpack.c.b16 %v636, %v628
        %v709 = vpack.c.b16 %v637, %v629
        %v710 = vpack.c.b16 %v638, %v630
        %v711 = vpack.c.b16 %v639, %v631
        %v712 = vpack.c.b16 %v640, %v632
        %v713 = vpack.c.b16 %v641, %v633
        %v714 = vpack.c.b16 %v650, %v642
        %v715 = vpack.c.b16 %v651, %v643
        %v716 = vpack.c.b16 %v652, %v644
        %v717 = vpack.c.b16 %v653, %v645
        %v718 = vpack.c.b16 %v654, %v646
        %v719 = vpack.c.b16 %v655, %v647
        %v720 = vpack.c.b16 %v656, %v648
        %v721 = vpack.c.b16 %v657, %v649
        %786 = vmatprep.subr.bf16.mxu0 %v659
        %787 = vmatpush1.bf16.msra.mxu0 %v658
        %788 = vmatprep.subr.bf16.mxu0 %v667
        %789 = vmatpush1.bf16.msra.mxu0 %v666
        %790 = vmatprep.subr.bf16.mxu0 %v675
        %791 = vmatpush1.bf16.msra.mxu0 %v674
        %792 = vmatprep.subr.bf16.mxu0 %v683
        %793 = vmatpush1.bf16.msra.mxu0 %v682
        %794 = vmatprep.subr.bf16.mxu0 %v691
        %795 = vmatpush1.bf16.msra.mxu0 %v690
        %796 = vmatprep.subr.bf16.mxu0 %v699
        %797 = vmatpush1.bf16.msra.mxu0 %v698
        %798 = vmatprep.subr.bf16.mxu0 %v707
        %799 = vmatpush1.bf16.msra.mxu0 %v706
        %800 = vmatprep.subr.bf16.mxu0 %v715
        %801 = vmatpush1.bf16.msra.mxu0 %v714
        %802 = vmatprep.subr.bf16.mxu0 0
        %803 = vmatpush1.bf16.msra.mxu0 0
        %804 = vmatprep.subr.bf16.mxu0 0
        %805 = vmatpush1.bf16.msra.mxu0 0
        %806 = vmatprep.subr.bf16.mxu0 0
        %807 = vmatpush1.bf16.msra.mxu0 0
        %808 = vmatprep.subr.bf16.mxu0 0
        %809 = vmatpush1.bf16.msra.mxu0 0
        %810 = vmatprep.subr.bf16.mxu0 0
        %811 = vmatpush1.bf16.msra.mxu0 0
        %812 = vmatprep.subr.bf16.mxu0 0
        %813 = vmatpush1.bf16.msra.mxu0 0
        %814 = vmatprep.subr.bf16.mxu0 0
        %815 = vmatpush1.bf16.msra.mxu0 0
        %816 = vmatprep.subr.bf16.mxu0 0
        %817 = vmatpush1.bf16.msra.mxu0 0
        %818 = vmatprep.mubr.bf16.mxu0 0
        %819 = vmatmul.mubr.bf16.gmra.mrb[0].mxu0 %v337
        %v820 = vpop.f32.mrb[0].mxu0
        %v821 = vadd.f32 0.0, %v820
        %v822 = vpop.f32.mrb[0].mxu0
        %v823 = vadd.f32 0.0, %v822
        %v824 = vpop.f32.mrb[0].mxu0
        %v825 = vadd.f32 0.0, %v824
        %v826 = vpop.f32.mrb[0].mxu0
        %v827 = vadd.f32 0.0, %v826
        %828 = vdwg.mxu0
        %829 = vmatprep.subr.bf16.mxu0 %v661
        %830 = vmatpush1.bf16.msra.mxu0 %v660
        %831 = vmatprep.subr.bf16.mxu0 %v669
        %832 = vmatpush1.bf16.msra.mxu0 %v668
        %833 = vmatprep.subr.bf16.mxu0 %v677
        %834 = vmatpush1.bf16.msra.mxu0 %v676
        %835 = vmatprep.subr.bf16.mxu0 %v685
        %836 = vmatpush1.bf16.msra.mxu0 %v684
        %837 = vmatprep.subr.bf16.mxu0 %v693
        %838 = vmatpush1.bf16.msra.mxu0 %v692
        %839 = vmatprep.subr.bf16.mxu0 %v701
        %840 = vmatpush1.bf16.msra.mxu0 %v700
        %841 = vmatprep.subr.bf16.mxu0 %v709
        %842 = vmatpush1.bf16.msra.mxu0 %v708
        %843 = vmatprep.subr.bf16.mxu0 %v717
        %844 = vmatpush1.bf16.msra.mxu0 %v716
        %845 = vmatprep.subr.bf16.mxu0 0
        %846 = vmatpush1.bf16.msra.mxu0 0
        %847 = vmatprep.subr.bf16.mxu0 0
        %848 = vmatpush1.bf16.msra.mxu0 0
        %849 = vmatprep.subr.bf16.mxu0 0
        %850 = vmatpush1.bf16.msra.mxu0 0
        %851 = vmatprep.subr.bf16.mxu0 0
        %852 = vmatpush1.bf16.msra.mxu0 0
        %853 = vmatprep.subr.bf16.mxu0 0
        %854 = vmatpush1.bf16.msra.mxu0 0
        %855 = vmatprep.subr.bf16.mxu0 0
        %856 = vmatpush1.bf16.msra.mxu0 0
        %857 = vmatprep.subr.bf16.mxu0 0
        %858 = vmatpush1.bf16.msra.mxu0 0
        %859 = vmatprep.subr.bf16.mxu0 0
        %860 = vmatpush1.bf16.msra.mxu0 0
        %861 = vmatprep.mubr.bf16.mxu0 0
        %862 = vmatmul.mubr.bf16.gmra.mrb[0].mxu0 %v337
        %v863 = vpop.f32.mrb[0].mxu0
        %v864 = vadd.f32 0.0, %v863
        %v865 = vpop.f32.mrb[0].mxu0
        %v866 = vadd.f32 0.0, %v865
        %v867 = vpop.f32.mrb[0].mxu0
        %v868 = vadd.f32 0.0, %v867
        %v869 = vpop.f32.mrb[0].mxu0
        %v870 = vadd.f32 0.0, %v869
        %871 = vdwg.mxu0
        %872 = vmatprep.subr.bf16.mxu0 %v663
        %873 = vmatpush1.bf16.msra.mxu0 %v662
        %874 = vmatprep.subr.bf16.mxu0 %v671
        %875 = vmatpush1.bf16.msra.mxu0 %v670
        %876 = vmatprep.subr.bf16.mxu0 %v679
        %877 = vmatpush1.bf16.msra.mxu0 %v678
        %878 = vmatprep.subr.bf16.mxu0 %v687
        %879 = vmatpush1.bf16.msra.mxu0 %v686
        %880 = vmatprep.subr.bf16.mxu0 %v695
        %881 = vmatpush1.bf16.msra.mxu0 %v694
        %882 = vmatprep.subr.bf16.mxu0 %v703
        %883 = vmatpush1.bf16.msra.mxu0 %v702
        %884 = vmatprep.subr.bf16.mxu0 %v711
        %885 = vmatpush1.bf16.msra.mxu0 %v710
        %886 = vmatprep.subr.bf16.mxu0 %v719
        %887 = vmatpush1.bf16.msra.mxu0 %v718
        %888 = vmatprep.subr.bf16.mxu0 0
        %889 = vmatpush1.bf16.msra.mxu0 0
        %890 = vmatprep.subr.bf16.mxu0 0
        %891 = vmatpush1.bf16.msra.mxu0 0
        %892 = vmatprep.subr.bf16.mxu0 0
        %893 = vmatpush1.bf16.msra.mxu0 0
        %894 = vmatprep.subr.bf16.mxu0 0
        %895 = vmatpush1.bf16.msra.mxu0 0
        %896 = vmatprep.subr.bf16.mxu0 0
        %897 = vmatpush1.bf16.msra.mxu0 0
        %898 = vmatprep.subr.bf16.mxu0 0
        %899 = vmatpush1.bf16.msra.mxu0 0
        %900 = vmatprep.subr.bf16.mxu0 0
        %901 = vmatpush1.bf16.msra.mxu0 0
        %902 = vmatprep.subr.bf16.mxu0 0
        %903 = vmatpush1.bf16.msra.mxu0 0
        %904 = vmatprep.mubr.bf16.mxu0 0
        %905 = vmatmul.mubr.bf16.gmra.mrb[0].mxu0 %v337
        %v906 = vpop.f32.mrb[0].mxu0
        %v907 = vadd.f32 0.0, %v906
        %v908 = vpop.f32.mrb[0].mxu0
        %v909 = vadd.f32 0.0, %v908
        %v910 = vpop.f32.mrb[0].mxu0
        %v911 = vadd.f32 0.0, %v910
        %v912 = vpop.f32.mrb[0].mxu0
        %v913 = vadd.f32 0.0, %v912
        %914 = vdwg.mxu0
        %915 = vmatprep.subr.bf16.mxu0 %v665
        %916 = vmatpush1.bf16.msra.mxu0 %v664
        %917 = vmatprep.subr.bf16.mxu0 %v673
        %918 = vmatpush1.bf16.msra.mxu0 %v672
        %919 = vmatprep.subr.bf16.mxu0 %v681
        %920 = vmatpush1.bf16.msra.mxu0 %v680
        %921 = vmatprep.subr.bf16.mxu0 %v689
        %922 = vmatpush1.bf16.msra.mxu0 %v688
        %923 = vmatprep.subr.bf16.mxu0 %v697
        %924 = vmatpush1.bf16.msra.mxu0 %v696
        %925 = vmatprep.subr.bf16.mxu0 %v705
        %926 = vmatpush1.bf16.msra.mxu0 %v704
        %927 = vmatprep.subr.bf16.mxu0 %v713
        %928 = vmatpush1.bf16.msra.mxu0 %v712
        %929 = vmatprep.subr.bf16.mxu0 %v721
        %930 = vmatpush1.bf16.msra.mxu0 %v720
        %931 = vmatprep.subr.bf16.mxu0 0
        %932 = vmatpush1.bf16.msra.mxu0 0
        %933 = vmatprep.subr.bf16.mxu0 0
        %934 = vmatpush1.bf16.msra.mxu0 0
        %935 = vmatprep.subr.bf16.mxu0 0
        %936 = vmatpush1.bf16.msra.mxu0 0
        %937 = vmatprep.subr.bf16.mxu0 0
        %938 = vmatpush1.bf16.msra.mxu0 0
        %939 = vmatprep.subr.bf16.mxu0 0
        %940 = vmatpush1.bf16.msra.mxu0 0
        %941 = vmatprep.subr.bf16.mxu0 0
        %942 = vmatpush1.bf16.msra.mxu0 0
        %943 = vmatprep.subr.bf16.mxu0 0
        %944 = vmatpush1.bf16.msra.mxu0 0
        %945 = vmatprep.subr.bf16.mxu0 0
        %946 = vmatpush1.bf16.msra.mxu0 0
        %947 = vmatprep.mubr.bf16.mxu0 0
        %948 = vmatmul.mubr.bf16.gmra.mrb[0].mxu0 %v337
        %v949 = vpop.f32.mrb[0].mxu0
        %v950 = vadd.f32 0.0, %v949
        %v951 = vpop.f32.mrb[0].mxu0
        %v952 = vadd.f32 0.0, %v951
        %v953 = vpop.f32.mrb[0].mxu0
        %v954 = vadd.f32 0.0, %v953
        %v955 = vpop.f32.mrb[0].mxu0
        %v956 = vadd.f32 0.0, %v955
        %957 = vdwg.mxu0
        %v1022 = vunpack.c.l.b16 %v338
        %v1023 = vunpack.c.h.b16 %v338
        %v1024 = vunpack.c.l.b16 %v339
        %v1025 = vunpack.c.h.b16 %v339
        %v1026 = vunpack.c.l.b16 %v340
        %v1027 = vunpack.c.h.b16 %v340
        %v1028 = vunpack.c.l.b16 %v341
        %v1029 = vunpack.c.h.b16 %v341
        %v1030 = vunpack.c.l.b16 %v342
        %v1031 = vunpack.c.h.b16 %v342
        %v1032 = vunpack.c.l.b16 %v343
        %v1033 = vunpack.c.h.b16 %v343
        %v1034 = vunpack.c.l.b16 %v344
        %v1035 = vunpack.c.h.b16 %v344
        %v1036 = vunpack.c.l.b16 %v345
        %v1037 = vunpack.c.h.b16 %v345
        %v1038 = vunpack.c.l.b16 %v346
        %v1039 = vunpack.c.h.b16 %v346
        %v1040 = vunpack.c.l.b16 %v347
        %v1041 = vunpack.c.h.b16 %v347
        %v1042 = vunpack.c.l.b16 %v348
        %v1043 = vunpack.c.h.b16 %v348
        %v1044 = vunpack.c.l.b16 %v349
        %v1045 = vunpack.c.h.b16 %v349
        %v1046 = vunpack.c.l.b16 %v350
        %v1047 = vunpack.c.h.b16 %v350
        %v1048 = vunpack.c.l.b16 %v351
        %v1049 = vunpack.c.h.b16 %v351
        %v1050 = vunpack.c.l.b16 %v352
        %v1051 = vunpack.c.h.b16 %v352
        %v1052 = vunpack.c.l.b16 %v353
        %v1053 = vunpack.c.h.b16 %v353
        %v1054 = vunpack.c.l.b16 %v354
        %v1055 = vunpack.c.h.b16 %v354
        %v1056 = vunpack.c.l.b16 %v355
        %v1057 = vunpack.c.h.b16 %v355
        %v1058 = vunpack.c.l.b16 %v356
        %v1059 = vunpack.c.h.b16 %v356
        %v1060 = vunpack.c.l.b16 %v357
        %v1061 = vunpack.c.h.b16 %v357
        %v1062 = vunpack.c.l.b16 %v358
        %v1063 = vunpack.c.h.b16 %v358
        %v1064 = vunpack.c.l.b16 %v359
        %v1065 = vunpack.c.h.b16 %v359
        %v1066 = vunpack.c.l.b16 %v360
        %v1067 = vunpack.c.h.b16 %v360
        %v1068 = vunpack.c.l.b16 %v361
        %v1069 = vunpack.c.h.b16 %v361
        %v1070 = vunpack.c.l.b16 %v362
        %v1071 = vunpack.c.h.b16 %v362
        %v1072 = vunpack.c.l.b16 %v363
        %v1073 = vunpack.c.h.b16 %v363
        %v1074 = vunpack.c.l.b16 %v364
        %v1075 = vunpack.c.h.b16 %v364
        %v1076 = vunpack.c.l.b16 %v365
        %v1077 = vunpack.c.h.b16 %v365
        %v1078 = vunpack.c.l.b16 %v366
        %v1079 = vunpack.c.h.b16 %v366
        %v1080 = vunpack.c.l.b16 %v367
        %v1081 = vunpack.c.h.b16 %v367
        %v1082 = vunpack.c.l.b16 %v368
        %v1083 = vunpack.c.h.b16 %v368
        %v1084 = vunpack.c.l.b16 %v369
        %v1085 = vunpack.c.h.b16 %v369
        %v1086 = vunpack.c.l.b16 %v370
        %v1087 = vunpack.c.h.b16 %v370
        %v1088 = vunpack.c.l.b16 %v371
        %v1089 = vunpack.c.h.b16 %v371
        %v1090 = vunpack.c.l.b16 %v372
        %v1091 = vunpack.c.h.b16 %v372
        %v1092 = vunpack.c.l.b16 %v373
        %v1093 = vunpack.c.h.b16 %v373
        %v1094 = vunpack.c.l.b16 %v374
        %v1095 = vunpack.c.h.b16 %v374
        %v1096 = vunpack.c.l.b16 %v375
        %v1097 = vunpack.c.h.b16 %v375
        %v1098 = vunpack.c.l.b16 %v376
        %v1099 = vunpack.c.h.b16 %v376
        %v1100 = vunpack.c.l.b16 %v377
        %v1101 = vunpack.c.h.b16 %v377
        %v1102 = vunpack.c.l.b16 %v378
        %v1103 = vunpack.c.h.b16 %v378
        %v1104 = vunpack.c.l.b16 %v379
        %v1105 = vunpack.c.h.b16 %v379
        %v1106 = vunpack.c.l.b16 %v380
        %v1107 = vunpack.c.h.b16 %v380
        %v1108 = vunpack.c.l.b16 %v381
        %v1109 = vunpack.c.h.b16 %v381
        %v1110 = vunpack.c.l.b16 %v382
        %v1111 = vunpack.c.h.b16 %v382
        %v1112 = vunpack.c.l.b16 %v383
        %v1113 = vunpack.c.h.b16 %v383
        %v1114 = vunpack.c.l.b16 %v384
        %v1115 = vunpack.c.h.b16 %v384
        %v1116 = vunpack.c.l.b16 %v385
        %v1117 = vunpack.c.h.b16 %v385
        %v1118 = vunpack.c.l.b16 %v386
        %v1119 = vunpack.c.h.b16 %v386
        %v1120 = vunpack.c.l.b16 %v387
        %v1121 = vunpack.c.h.b16 %v387
        %v1122 = vunpack.c.l.b16 %v388
        %v1123 = vunpack.c.h.b16 %v388
        %v1124 = vunpack.c.l.b16 %v389
        %v1125 = vunpack.c.h.b16 %v389
        %v1126 = vunpack.c.l.b16 %v390
        %v1127 = vunpack.c.h.b16 %v390
        %v1128 = vunpack.c.l.b16 %v391
        %v1129 = vunpack.c.h.b16 %v391
        %v1130 = vunpack.c.l.b16 %v392
        %v1131 = vunpack.c.h.b16 %v392
        %v1132 = vunpack.c.l.b16 %v393
        %v1133 = vunpack.c.h.b16 %v393
        %v1134 = vunpack.c.l.b16 %v394
        %v1135 = vunpack.c.h.b16 %v394
        %v1136 = vunpack.c.l.b16 %v395
        %v1137 = vunpack.c.h.b16 %v395
        %v1138 = vunpack.c.l.b16 %v396
        %v1139 = vunpack.c.h.b16 %v396
        %v1140 = vunpack.c.l.b16 %v397
        %v1141 = vunpack.c.h.b16 %v397
        %v1142 = vunpack.c.l.b16 %v398
        %v1143 = vunpack.c.h.b16 %v398
        %v1144 = vunpack.c.l.b16 %v399
        %v1145 = vunpack.c.h.b16 %v399
        %v1146 = vunpack.c.l.b16 %v400
        %v1147 = vunpack.c.h.b16 %v400
        %v1148 = vunpack.c.l.b16 %v401
        %v1149 = vunpack.c.h.b16 %v401
        %v1150 = vpack.c.b16 %v1030, %v1022
        %v1151 = vpack.c.b16 %v1031, %v1023
        %v1152 = vpack.c.b16 %v1032, %v1024
        %v1153 = vpack.c.b16 %v1033, %v1025
        %v1154 = vpack.c.b16 %v1034, %v1026
        %v1155 = vpack.c.b16 %v1035, %v1027
        %v1156 = vpack.c.b16 %v1036, %v1028
        %v1157 = vpack.c.b16 %v1037, %v1029
        %v1158 = vpack.c.b16 %v1046, %v1038
        %v1159 = vpack.c.b16 %v1047, %v1039
        %v1160 = vpack.c.b16 %v1048, %v1040
        %v1161 = vpack.c.b16 %v1049, %v1041
        %v1162 = vpack.c.b16 %v1050, %v1042
        %v1163 = vpack.c.b16 %v1051, %v1043
        %v1164 = vpack.c.b16 %v1052, %v1044
        %v1165 = vpack.c.b16 %v1053, %v1045
        %v1166 = vpack.c.b16 %v1062, %v1054
        %v1167 = vpack.c.b16 %v1063, %v1055
        %v1168 = vpack.c.b16 %v1064, %v1056
        %v1169 = vpack.c.b16 %v1065, %v1057
        %v1170 = vpack.c.b16 %v1066, %v1058
        %v1171 = vpack.c.b16 %v1067, %v1059
        %v1172 = vpack.c.b16 %v1068, %v1060
        %v1173 = vpack.c.b16 %v1069, %v1061
        %v1174 = vpack.c.b16 %v1078, %v1070
        %v1175 = vpack.c.b16 %v1079, %v1071
        %v1176 = vpack.c.b16 %v1080, %v1072
        %v1177 = vpack.c.b16 %v1081, %v1073
        %v1178 = vpack.c.b16 %v1082, %v1074
        %v1179 = vpack.c.b16 %v1083, %v1075
        %v1180 = vpack.c.b16 %v1084, %v1076
        %v1181 = vpack.c.b16 %v1085, %v1077
        %v1182 = vpack.c.b16 %v1094, %v1086
        %v1183 = vpack.c.b16 %v1095, %v1087
        %v1184 = vpack.c.b16 %v1096, %v1088
        %v1185 = vpack.c.b16 %v1097, %v1089
        %v1186 = vpack.c.b16 %v1098, %v1090
        %v1187 = vpack.c.b16 %v1099, %v1091
        %v1188 = vpack.c.b16 %v1100, %v1092
        %v1189 = vpack.c.b16 %v1101, %v1093
        %v1190 = vpack.c.b16 %v1110, %v1102
        %v1191 = vpack.c.b16 %v1111, %v1103
        %v1192 = vpack.c.b16 %v1112, %v1104
        %v1193 = vpack.c.b16 %v1113, %v1105
        %v1194 = vpack.c.b16 %v1114, %v1106
        %v1195 = vpack.c.b16 %v1115, %v1107
        %v1196 = vpack.c.b16 %v1116, %v1108
        %v1197 = vpack.c.b16 %v1117, %v1109
        %v1198 = vpack.c.b16 %v1126, %v1118
        %v1199 = vpack.c.b16 %v1127, %v1119
        %v1200 = vpack.c.b16 %v1128, %v1120
        %v1201 = vpack.c.b16 %v1129, %v1121
        %v1202 = vpack.c.b16 %v1130, %v1122
        %v1203 = vpack.c.b16 %v1131, %v1123
        %v1204 = vpack.c.b16 %v1132, %v1124
        %v1205 = vpack.c.b16 %v1133, %v1125
        %v1206 = vpack.c.b16 %v1142, %v1134
        %v1207 = vpack.c.b16 %v1143, %v1135
        %v1208 = vpack.c.b16 %v1144, %v1136
        %v1209 = vpack.c.b16 %v1145, %v1137
        %v1210 = vpack.c.b16 %v1146, %v1138
        %v1211 = vpack.c.b16 %v1147, %v1139
        %v1212 = vpack.c.b16 %v1148, %v1140
        %v1213 = vpack.c.b16 %v1149, %v1141
        %1278 = vmatprep.subr.bf16.mxu0 %v1151
        %1279 = vmatpush1.bf16.msra.mxu0 %v1150
        %1280 = vmatprep.subr.bf16.mxu0 %v1159
        %1281 = vmatpush1.bf16.msra.mxu0 %v1158
        %1282 = vmatprep.subr.bf16.mxu0 %v1167
        %1283 = vmatpush1.bf16.msra.mxu0 %v1166
        %1284 = vmatprep.subr.bf16.mxu0 %v1175
        %1285 = vmatpush1.bf16.msra.mxu0 %v1174
        %1286 = vmatprep.subr.bf16.mxu0 %v1183
        %1287 = vmatpush1.bf16.msra.mxu0 %v1182
        %1288 = vmatprep.subr.bf16.mxu0 %v1191
        %1289 = vmatpush1.bf16.msra.mxu0 %v1190
        %1290 = vmatprep.subr.bf16.mxu0 %v1199
        %1291 = vmatpush1.bf16.msra.mxu0 %v1198
        %1292 = vmatprep.subr.bf16.mxu0 %v1207
        %1293 = vmatpush1.bf16.msra.mxu0 %v1206
        %1294 = vmatprep.subr.bf16.mxu0 0
        %1295 = vmatpush1.bf16.msra.mxu0 0
        %1296 = vmatprep.subr.bf16.mxu0 0
        %1297 = vmatpush1.bf16.msra.mxu0 0
        %1298 = vmatprep.subr.bf16.mxu0 0
        %1299 = vmatpush1.bf16.msra.mxu0 0
        %1300 = vmatprep.subr.bf16.mxu0 0
        %1301 = vmatpush1.bf16.msra.mxu0 0
        %1302 = vmatprep.subr.bf16.mxu0 0
        %1303 = vmatpush1.bf16.msra.mxu0 0
        %1304 = vmatprep.subr.bf16.mxu0 0
        %1305 = vmatpush1.bf16.msra.mxu0 0
        %1306 = vmatprep.subr.bf16.mxu0 0
        %1307 = vmatpush1.bf16.msra.mxu0 0
        %1308 = vmatprep.subr.bf16.mxu0 0
        %1309 = vmatpush1.bf16.msra.mxu0 0
        %1310 = vmatprep.mubr.bf16.mxu0 0
        %1311 = vmatmul.mubr.bf16.gmra.mrb[0].mxu0 %v334
        %v1312 = vpop.f32.mrb[0].mxu0
        %v1313 = vadd.f32 %v821, %v1312
        %v1314 = vpop.f32.mrb[0].mxu0
        %v1315 = vadd.f32 %v823, %v1314
        %v1316 = vpop.f32.mrb[0].mxu0
        %v1317 = vadd.f32 %v825, %v1316
        %v1318 = vpop.f32.mrb[0].mxu0
        %v1319 = vadd.f32 %v827, %v1318
        %1320 = vdwg.mxu0
        %1321 = vmatprep.subr.bf16.mxu0 %v1153
        %1322 = vmatpush1.bf16.msra.mxu0 %v1152
        %1323 = vmatprep.subr.bf16.mxu0 %v1161
        %1324 = vmatpush1.bf16.msra.mxu0 %v1160
        %1325 = vmatprep.subr.bf16.mxu0 %v1169
        %1326 = vmatpush1.bf16.msra.mxu0 %v1168
        %1327 = vmatprep.subr.bf16.mxu0 %v1177
        %1328 = vmatpush1.bf16.msra.mxu0 %v1176
        %1329 = vmatprep.subr.bf16.mxu0 %v1185
        %1330 = vmatpush1.bf16.msra.mxu0 %v1184
        %1331 = vmatprep.subr.bf16.mxu0 %v1193
        %1332 = vmatpush1.bf16.msra.mxu0 %v1192
        %1333 = vmatprep.subr.bf16.mxu0 %v1201
        %1334 = vmatpush1.bf16.msra.mxu0 %v1200
        %1335 = vmatprep.subr.bf16.mxu0 %v1209
        %1336 = vmatpush1.bf16.msra.mxu0 %v1208
        %1337 = vmatprep.subr.bf16.mxu0 0
        %1338 = vmatpush1.bf16.msra.mxu0 0
        %1339 = vmatprep.subr.bf16.mxu0 0
        %1340 = vmatpush1.bf16.msra.mxu0 0
        %1341 = vmatprep.subr.bf16.mxu0 0
        %1342 = vmatpush1.bf16.msra.mxu0 0
        %1343 = vmatprep.subr.bf16.mxu0 0
        %1344 = vmatpush1.bf16.msra.mxu0 0
        %1345 = vmatprep.subr.bf16.mxu0 0
        %1346 = vmatpush1.bf16.msra.mxu0 0
        %1347 = vmatprep.subr.bf16.mxu0 0
        %1348 = vmatpush1.bf16.msra.mxu0 0
        %1349 = vmatprep.subr.bf16.mxu0 0
        %1350 = vmatpush1.bf16.msra.mxu0 0
        %1351 = vmatprep.subr.bf16.mxu0 0
        %1352 = vmatpush1.bf16.msra.mxu0 0
        %1353 = vmatprep.mubr.bf16.mxu0 0
        %1354 = vmatmul.mubr.bf16.gmra.mrb[0].mxu0 %v334
        %v1355 = vpop.f32.mrb[0].mxu0
        %v1356 = vadd.f32 %v864, %v1355
        %v1357 = vpop.f32.mrb[0].mxu0
        %v1358 = vadd.f32 %v866, %v1357
        %v1359 = vpop.f32.mrb[0].mxu0
        %v1360 = vadd.f32 %v868, %v1359
        %v1361 = vpop.f32.mrb[0].mxu0
        %v1362 = vadd.f32 %v870, %v1361
        %1363 = vdwg.mxu0
        %1364 = vmatprep.subr.bf16.mxu0 %v1155
        %1365 = vmatpush1.bf16.msra.mxu0 %v1154
        %1366 = vmatprep.subr.bf16.mxu0 %v1163
        %1367 = vmatpush1.bf16.msra.mxu0 %v1162
        %1368 = vmatprep.subr.bf16.mxu0 %v1171
        %1369 = vmatpush1.bf16.msra.mxu0 %v1170
        %1370 = vmatprep.subr.bf16.mxu0 %v1179
        %1371 = vmatpush1.bf16.msra.mxu0 %v1178
        %1372 = vmatprep.subr.bf16.mxu0 %v1187
        %1373 = vmatpush1.bf16.msra.mxu0 %v1186
        %1374 = vmatprep.subr.bf16.mxu0 %v1195
        %1375 = vmatpush1.bf16.msra.mxu0 %v1194
        %1376 = vmatprep.subr.bf16.mxu0 %v1203
        %1377 = vmatpush1.bf16.msra.mxu0 %v1202
        %1378 = vmatprep.subr.bf16.mxu0 %v1211
        %1379 = vmatpush1.bf16.msra.mxu0 %v1210
        %1380 = vmatprep.subr.bf16.mxu0 0
        %1381 = vmatpush1.bf16.msra.mxu0 0
        %1382 = vmatprep.subr.bf16.mxu0 0
        %1383 = vmatpush1.bf16.msra.mxu0 0
        %1384 = vmatprep.subr.bf16.mxu0 0
        %1385 = vmatpush1.bf16.msra.mxu0 0
        %1386 = vmatprep.subr.bf16.mxu0 0
        %1387 = vmatpush1.bf16.msra.mxu0 0
        %1388 = vmatprep.subr.bf16.mxu0 0
        %1389 = vmatpush1.bf16.msra.mxu0 0
        %1390 = vmatprep.subr.bf16.mxu0 0
        %1391 = vmatpush1.bf16.msra.mxu0 0
        %1392 = vmatprep.subr.bf16.mxu0 0
        %1393 = vmatpush1.bf16.msra.mxu0 0
        %1394 = vmatprep.subr.bf16.mxu0 0
        %1395 = vmatpush1.bf16.msra.mxu0 0
        %1396 = vmatprep.mubr.bf16.mxu0 0
        %1397 = vmatmul.mubr.bf16.gmra.mrb[0].mxu0 %v334
        %v1398 = vpop.f32.mrb[0].mxu0
        %v1399 = vadd.f32 %v907, %v1398
        %v1400 = vpop.f32.mrb[0].mxu0
        %v1401 = vadd.f32 %v909, %v1400
        %v1402 = vpop.f32.mrb[0].mxu0
        %v1403 = vadd.f32 %v911, %v1402
        %v1404 = vpop.f32.mrb[0].mxu0
        %v1405 = vadd.f32 %v913, %v1404
        %1406 = vdwg.mxu0
        %1407 = vmatprep.subr.bf16.mxu0 %v1157
        %1408 = vmatpush1.bf16.msra.mxu0 %v1156
        %1409 = vmatprep.subr.bf16.mxu0 %v1165
        %1410 = vmatpush1.bf16.msra.mxu0 %v1164
        %1411 = vmatprep.subr.bf16.mxu0 %v1173
        %1412 = vmatpush1.bf16.msra.mxu0 %v1172
        %1413 = vmatprep.subr.bf16.mxu0 %v1181
        %1414 = vmatpush1.bf16.msra.mxu0 %v1180
        %1415 = vmatprep.subr.bf16.mxu0 %v1189
        %1416 = vmatpush1.bf16.msra.mxu0 %v1188
        %1417 = vmatprep.subr.bf16.mxu0 %v1197
        %1418 = vmatpush1.bf16.msra.mxu0 %v1196
        %1419 = vmatprep.subr.bf16.mxu0 %v1205
        %1420 = vmatpush1.bf16.msra.mxu0 %v1204
        %1421 = vmatprep.subr.bf16.mxu0 %v1213
        %1422 = vmatpush1.bf16.msra.mxu0 %v1212
        %1423 = vmatprep.subr.bf16.mxu0 0
        %1424 = vmatpush1.bf16.msra.mxu0 0
        %1425 = vmatprep.subr.bf16.mxu0 0
        %1426 = vmatpush1.bf16.msra.mxu0 0
        %1427 = vmatprep.subr.bf16.mxu0 0
        %1428 = vmatpush1.bf16.msra.mxu0 0
        %1429 = vmatprep.subr.bf16.mxu0 0
        %1430 = vmatpush1.bf16.msra.mxu0 0
        %1431 = vmatprep.subr.bf16.mxu0 0
        %1432 = vmatpush1.bf16.msra.mxu0 0
        %1433 = vmatprep.subr.bf16.mxu0 0
        %1434 = vmatpush1.bf16.msra.mxu0 0
        %1435 = vmatprep.subr.bf16.mxu0 0
        %1436 = vmatpush1.bf16.msra.mxu0 0
        %1437 = vmatprep.subr.bf16.mxu0 0
        %1438 = vmatpush1.bf16.msra.mxu0 0
        %1439 = vmatprep.mubr.bf16.mxu0 0
        %1440 = vmatmul.mubr.bf16.gmra.mrb[0].mxu0 %v334
        %v1441 = vpop.f32.mrb[0].mxu0
        %v1442 = vadd.f32 %v950, %v1441
        %v1443 = vpop.f32.mrb[0].mxu0
        %v1444 = vadd.f32 %v952, %v1443
        %v1445 = vpop.f32.mrb[0].mxu0
        %v1446 = vadd.f32 %v954, %v1445
        %v1447 = vpop.f32.mrb[0].mxu0
        %v1448 = vadd.f32 %v956, %v1447
        %1449 = vdwg.mxu0
        %v1450 = vld [vmem:[%s289] sm:$0xff]
        %v1452 = vlaneseq
        %v1453 = vshrl.u32 %v1452, 7
        %v1454 = vsub.s32 0, %v1453
        %v1455 = vrot.slane %v1450, %v1454
        %v1456 = vlaneseq
        %v1457 = vshrl.u32 %v1456, 7
        %v1458 = vsub.s32 1, %v1457
        %v1459 = vrot.slane %v1450, %v1458
        %v1460 = vlaneseq
        %v1461 = vshrl.u32 %v1460, 7
        %v1462 = vsub.s32 2, %v1461
        %v1463 = vrot.slane %v1450, %v1462
        %v1464 = vlaneseq
        %v1465 = vshrl.u32 %v1464, 7
        %v1466 = vsub.s32 3, %v1465
        %v1467 = vrot.slane %v1450, %v1466
        %v1468 = vlaneseq
        %v1469 = vshrl.u32 %v1468, 7
        %v1470 = vsub.s32 4, %v1469
        %v1471 = vrot.slane %v1450, %v1470
        %v1472 = vlaneseq
        %v1473 = vshrl.u32 %v1472, 7
        %v1474 = vsub.s32 5, %v1473
        %v1475 = vrot.slane %v1450, %v1474
        %v1476 = vlaneseq
        %v1477 = vshrl.u32 %v1476, 7
        %v1478 = vsub.s32 6, %v1477
        %v1479 = vrot.slane %v1450, %v1478
        %v1480 = vlaneseq
        %v1481 = vshrl.u32 %v1480, 7
        %v1482 = vsub.s32 7, %v1481
        %v1483 = vrot.slane %v1450, %v1482
        %v1492 = vadd.f32 %v1313, %v1455
        %v1493 = vadd.f32 %v1315, %v1459
        %v1494 = vadd.f32 %v1356, %v1463
        %v1495 = vadd.f32 %v1358, %v1467
        %v1496 = vadd.f32 %v1399, %v1471
        %v1497 = vadd.f32 %v1401, %v1475
        %v1498 = vadd.f32 %v1442, %v1479
        %v1499 = vadd.f32 %v1444, %v1483
        %v1500 = vadd.f32 %v1317, %v1455
        %v1501 = vadd.f32 %v1319, %v1459
        %v1502 = vadd.f32 %v1360, %v1463
        %v1503 = vadd.f32 %v1362, %v1467
        %v1504 = vadd.f32 %v1403, %v1471
        %v1505 = vadd.f32 %v1405, %v1475
        %v1506 = vadd.f32 %v1446, %v1479
        %v1507 = vadd.f32 %v1448, %v1483
        %1508 = vst [vmem:[#allocation4] sm:$0xff] %v1492
        %1509 = vst [vmem:[#allocation4 + $0x8] sm:$0xff] %v1493
        %1510 = vst [vmem:[#allocation4 + $0x10] sm:$0xff] %v1494
        %1511 = vst [vmem:[#allocation4 + $0x18] sm:$0xff] %v1495
        %1512 = vst [vmem:[#allocation4 + $0x20] sm:$0xff] %v1496
        %1513 = vst [vmem:[#allocation4 + $0x28] sm:$0xff] %v1497
        %1514 = vst [vmem:[#allocation4 + $0x30] sm:$0xff] %v1498
        %1515 = vst [vmem:[#allocation4 + $0x38] sm:$0xff] %v1499
        %1516 = vst [vmem:[#allocation4 + $0x40] sm:$0xff] %v1500
        %1517 = vst [vmem:[#allocation4 + $0x48] sm:$0xff] %v1501
        %1518 = vst [vmem:[#allocation4 + $0x50] sm:$0xff] %v1502
        %1519 = vst [vmem:[#allocation4 + $0x58] sm:$0xff] %v1503
        %1520 = vst [vmem:[#allocation4 + $0x60] sm:$0xff] %v1504
        %1521 = vst [vmem:[#allocation4 + $0x68] sm:$0xff] %v1505
        %1522 = vst [vmem:[#allocation4 + $0x70] sm:$0xff] %v1506
        %1523 = vst [vmem:[#allocation4 + $0x78] sm:$0xff] %v1507
        %v1524 = vld [vmem:[%s280] sm:$0xff]
        %v1525 = vld [vmem:[%s280 + $0x8] sm:$0xff]
        %v1526 = vld [vmem:[%s280 + $0x10] sm:$0xff]
        %v1527 = vld [vmem:[%s280 + $0x18] sm:$0xff]
        %v1528 = vld [vmem:[%s280 + $0x20] sm:$0xff]
        %v1529 = vld [vmem:[%s280 + $0x28] sm:$0xff]
        %v1530 = vld [vmem:[%s280 + $0x30] sm:$0xff]
        %v1531 = vld [vmem:[%s280 + $0x38] sm:$0xff]
        %v1532 = vld [vmem:[%s280 + $0x40] sm:$0xff]
        %v1533 = vld [vmem:[%s280 + $0x48] sm:$0xff]
        %v1534 = vld [vmem:[%s280 + $0x50] sm:$0xff]
        %v1535 = vld [vmem:[%s280 + $0x58] sm:$0xff]
        %v1536 = vld [vmem:[%s280 + $0x60] sm:$0xff]
        %v1537 = vld [vmem:[%s280 + $0x68] sm:$0xff]
        %v1538 = vld [vmem:[%s280 + $0x70] sm:$0xff]
        %v1539 = vld [vmem:[%s280 + $0x78] sm:$0xff]
        %v1540 = vld [vmem:[%s280 + $0x80] sm:$0xff]
        %v1541 = vld [vmem:[%s280 + $0x88] sm:$0xff]
        %v1542 = vld [vmem:[%s280 + $0x90] sm:$0xff]
        %v1543 = vld [vmem:[%s280 + $0x98] sm:$0xff]
        %v1544 = vld [vmem:[%s280 + $0xa0] sm:$0xff]
        %v1545 = vld [vmem:[%s280 + $0xa8] sm:$0xff]
        %v1546 = vld [vmem:[%s280 + $0xb0] sm:$0xff]
        %v1547 = vld [vmem:[%s280 + $0xb8] sm:$0xff]
        %v1548 = vld [vmem:[%s280 + $0xc0] sm:$0xff]
        %v1549 = vld [vmem:[%s280 + $0xc8] sm:$0xff]
        %v1550 = vld [vmem:[%s280 + $0xd0] sm:$0xff]
        %v1551 = vld [vmem:[%s280 + $0xd8] sm:$0xff]
        %v1552 = vld [vmem:[%s280 + $0xe0] sm:$0xff]
        %v1553 = vld [vmem:[%s280 + $0xe8] sm:$0xff]
        %v1554 = vld [vmem:[%s280 + $0xf0] sm:$0xff]
        %v1555 = vld [vmem:[%s280 + $0xf8] sm:$0xff]
        %s1556 = scalar_lea.vmem %s280, 256 [#allocation11]
        %v1557 = vld [vmem:[%s1556] sm:$0xff]
        %v1558 = vld [vmem:[%s1556 + $0x8] sm:$0xff]
        %v1559 = vld [vmem:[%s1556 + $0x10] sm:$0xff]
        %v1560 = vld [vmem:[%s1556 + $0x18] sm:$0xff]
        %v1561 = vld [vmem:[%s1556 + $0x20] sm:$0xff]
        %v1562 = vld [vmem:[%s1556 + $0x28] sm:$0xff]
        %v1563 = vld [vmem:[%s1556 + $0x30] sm:$0xff]
        %v1564 = vld [vmem:[%s1556 + $0x38] sm:$0xff]
        %v1565 = vld [vmem:[%s1556 + $0x40] sm:$0xff]
        %v1566 = vld [vmem:[%s1556 + $0x48] sm:$0xff]
        %v1567 = vld [vmem:[%s1556 + $0x50] sm:$0xff]
        %v1568 = vld [vmem:[%s1556 + $0x58] sm:$0xff]
        %v1569 = vld [vmem:[%s1556 + $0x60] sm:$0xff]
        %v1570 = vld [vmem:[%s1556 + $0x68] sm:$0xff]
        %v1571 = vld [vmem:[%s1556 + $0x70] sm:$0xff]
        %v1572 = vld [vmem:[%s1556 + $0x78] sm:$0xff]
        %v1573 = vld [vmem:[%s1556 + $0x80] sm:$0xff]
        %v1574 = vld [vmem:[%s1556 + $0x88] sm:$0xff]
        %v1575 = vld [vmem:[%s1556 + $0x90] sm:$0xff]
        %v1576 = vld [vmem:[%s1556 + $0x98] sm:$0xff]
        %v1577 = vld [vmem:[%s1556 + $0xa0] sm:$0xff]
        %v1578 = vld [vmem:[%s1556 + $0xa8] sm:$0xff]
        %v1579 = vld [vmem:[%s1556 + $0xb0] sm:$0xff]
        %v1580 = vld [vmem:[%s1556 + $0xb8] sm:$0xff]
        %v1581 = vld [vmem:[%s1556 + $0xc0] sm:$0xff]
        %v1582 = vld [vmem:[%s1556 + $0xc8] sm:$0xff]
        %v1583 = vld [vmem:[%s1556 + $0xd0] sm:$0xff]
        %v1584 = vld [vmem:[%s1556 + $0xd8] sm:$0xff]
        %v1585 = vld [vmem:[%s1556 + $0xe0] sm:$0xff]
        %v1586 = vld [vmem:[%s1556 + $0xe8] sm:$0xff]
        %v1587 = vld [vmem:[%s1556 + $0xf0] sm:$0xff]
        %v1588 = vld [vmem:[%s1556 + $0xf8] sm:$0xff]
        %v1589 = vld [vmem:[#allocation4] sm:$0x3]
        %v1590 = vld [vmem:[#allocation4 + $0x8] sm:$0x3]
        %v1591 = vld [vmem:[#allocation4 + $0x10] sm:$0x3]
        %v1592 = vld [vmem:[#allocation4 + $0x18] sm:$0x3]
        %v1625 = vunpack.c.l.b16 %v1524
        %v1626 = vunpack.c.h.b16 %v1524
        %v1627 = vunpack.c.l.b16 %v1525
        %v1628 = vunpack.c.h.b16 %v1525
        %v1629 = vunpack.c.l.b16 %v1526
        %v1630 = vunpack.c.h.b16 %v1526
        %v1631 = vunpack.c.l.b16 %v1527
        %v1632 = vunpack.c.h.b16 %v1527
        %v1633 = vunpack.c.l.b16 %v1528
        %v1634 = vunpack.c.h.b16 %v1528
        %v1635 = vunpack.c.l.b16 %v1529
        %v1636 = vunpack.c.h.b16 %v1529
        %v1637 = vunpack.c.l.b16 %v1530
        %v1638 = vunpack.c.h.b16 %v1530
        %v1639 = vunpack.c.l.b16 %v1531
        %v1640 = vunpack.c.h.b16 %v1531
        %v1641 = vunpack.c.l.b16 %v1532
        %v1642 = vunpack.c.h.b16 %v1532
        %v1643 = vunpack.c.l.b16 %v1533
        %v1644 = vunpack.c.h.b16 %v1533
        %v1645 = vunpack.c.l.b16 %v1534
        %v1646 = vunpack.c.h.b16 %v1534
        %v1647 = vunpack.c.l.b16 %v1535
        %v1648 = vunpack.c.h.b16 %v1535
        %v1649 = vunpack.c.l.b16 %v1536
        %v1650 = vunpack.c.h.b16 %v1536
        %v1651 = vunpack.c.l.b16 %v1537
        %v1652 = vunpack.c.h.b16 %v1537
        %v1653 = vunpack.c.l.b16 %v1538
        %v1654 = vunpack.c.h.b16 %v1538
        %v1655 = vunpack.c.l.b16 %v1539
        %v1656 = vunpack.c.h.b16 %v1539
        %v1657 = vunpack.c.l.b16 %v1540
        %v1658 = vunpack.c.h.b16 %v1540
        %v1659 = vunpack.c.l.b16 %v1541
        %v1660 = vunpack.c.h.b16 %v1541
        %v1661 = vunpack.c.l.b16 %v1542
        %v1662 = vunpack.c.h.b16 %v1542
        %v1663 = vunpack.c.l.b16 %v1543
        %v1664 = vunpack.c.h.b16 %v1543
        %v1665 = vunpack.c.l.b16 %v1544
        %v1666 = vunpack.c.h.b16 %v1544
        %v1667 = vunpack.c.l.b16 %v1545
        %v1668 = vunpack.c.h.b16 %v1545
        %v1669 = vunpack.c.l.b16 %v1546
        %v1670 = vunpack.c.h.b16 %v1546
        %v1671 = vunpack.c.l.b16 %v1547
        %v1672 = vunpack.c.h.b16 %v1547
        %v1673 = vunpack.c.l.b16 %v1548
        %v1674 = vunpack.c.h.b16 %v1548
        %v1675 = vunpack.c.l.b16 %v1549
        %v1676 = vunpack.c.h.b16 %v1549
        %v1677 = vunpack.c.l.b16 %v1550
        %v1678 = vunpack.c.h.b16 %v1550
        %v1679 = vunpack.c.l.b16 %v1551
        %v1680 = vunpack.c.h.b16 %v1551
        %v1681 = vunpack.c.l.b16 %v1552
        %v1682 = vunpack.c.h.b16 %v1552
        %v1683 = vunpack.c.l.b16 %v1553
        %v1684 = vunpack.c.h.b16 %v1553
        %v1685 = vunpack.c.l.b16 %v1554
        %v1686 = vunpack.c.h.b16 %v1554
        %v1687 = vunpack.c.l.b16 %v1555
        %v1688 = vunpack.c.h.b16 %v1555
        %v1689 = vpack.c.b16 %v1629, %v1625
        %v1690 = vpack.c.b16 %v1630, %v1626
        %v1691 = vpack.c.b16 %v1631, %v1627
        %v1692 = vpack.c.b16 %v1632, %v1628
        %v1693 = vpack.c.b16 %v1637, %v1633
        %v1694 = vpack.c.b16 %v1638, %v1634
        %v1695 = vpack.c.b16 %v1639, %v1635
        %v1696 = vpack.c.b16 %v1640, %v1636
        %v1697 = vpack.c.b16 %v1645, %v1641
        %v1698 = vpack.c.b16 %v1646, %v1642
        %v1699 = vpack.c.b16 %v1647, %v1643
        %v1700 = vpack.c.b16 %v1648, %v1644
        %v1701 = vpack.c.b16 %v1653, %v1649
        %v1702 = vpack.c.b16 %v1654, %v1650
        %v1703 = vpack.c.b16 %v1655, %v1651
        %v1704 = vpack.c.b16 %v1656, %v1652
        %v1705 = vpack.c.b16 %v1661, %v1657
        %v1706 = vpack.c.b16 %v1662, %v1658
        %v1707 = vpack.c.b16 %v1663, %v1659
        %v1708 = vpack.c.b16 %v1664, %v1660
        %v1709 = vpack.c.b16 %v1669, %v1665
        %v1710 = vpack.c.b16 %v1670, %v1666
        %v1711 = vpack.c.b16 %v1671, %v1667
        %v1712 = vpack.c.b16 %v1672, %v1668
        %v1713 = vpack.c.b16 %v1677, %v1673
        %v1714 = vpack.c.b16 %v1678, %v1674
        %v1715 = vpack.c.b16 %v1679, %v1675
        %v1716 = vpack.c.b16 %v1680, %v1676
        %v1717 = vpack.c.b16 %v1685, %v1681
        %v1718 = vpack.c.b16 %v1686, %v1682
        %v1719 = vpack.c.b16 %v1687, %v1683
        %v1720 = vpack.c.b16 %v1688, %v1684
        %1753 = vmatprep.subr.bf16.mxu0 %v1690
        %1754 = vmatpush1.bf16.msra.mxu0 %v1689
        %1755 = vmatprep.subr.bf16.mxu0 %v1694
        %1756 = vmatpush1.bf16.msra.mxu0 %v1693
        %1757 = vmatprep.subr.bf16.mxu0 %v1698
        %1758 = vmatpush1.bf16.msra.mxu0 %v1697
        %1759 = vmatprep.subr.bf16.mxu0 %v1702
        %1760 = vmatpush1.bf16.msra.mxu0 %v1701
        %1761 = vmatprep.subr.bf16.mxu0 %v1706
        %1762 = vmatpush1.bf16.msra.mxu0 %v1705
        %1763 = vmatprep.subr.bf16.mxu0 %v1710
        %1764 = vmatpush1.bf16.msra.mxu0 %v1709
        %1765 = vmatprep.subr.bf16.mxu0 %v1714
        %1766 = vmatpush1.bf16.msra.mxu0 %v1713
        %1767 = vmatprep.subr.bf16.mxu0 %v1718
        %1768 = vmatpush1.bf16.msra.mxu0 %v1717
        %1769 = vmatprep.subr.bf16.mxu0 0
        %1770 = vmatpush1.bf16.msra.mxu0 0
        %1771 = vmatprep.subr.bf16.mxu0 0
        %1772 = vmatpush1.bf16.msra.mxu0 0
        %1773 = vmatprep.subr.bf16.mxu0 0
        %1774 = vmatpush1.bf16.msra.mxu0 0
        %1775 = vmatprep.subr.bf16.mxu0 0
        %1776 = vmatpush1.bf16.msra.mxu0 0
        %1777 = vmatprep.subr.bf16.mxu0 0
        %1778 = vmatpush1.bf16.msra.mxu0 0
        %1779 = vmatprep.subr.bf16.mxu0 0
        %1780 = vmatpush1.bf16.msra.mxu0 0
        %1781 = vmatprep.subr.bf16.mxu0 0
        %1782 = vmatpush1.bf16.msra.mxu0 0
        %1783 = vmatprep.subr.bf16.mxu0 0
        %1784 = vmatpush1.bf16.msra.mxu0 0
        %1785 = vmatprep.mubr.bf16.mxu0 0
        %1786 = vmatmul.mubr.bf16.gmra.mrb[0].mxu0 0
        %v1787 = vpop.f32.mrb[0].mxu0
        %v1788 = vadd.f32 0.0, %v1787
        %v1789 = vpop.f32.mrb[0].mxu0
        %v1790 = vadd.f32 0.0, %v1789
        %v1791 = vpop.f32.mrb[0].mxu0
        %v1792 = vpop.f32.mrb[0].mxu0
        %1793 = vdwg.mxu0
        %1794 = vmatprep.subr.bf16.mxu0 %v1692
        %1795 = vmatpush1.bf16.msra.mxu0 %v1691
        %1796 = vmatprep.subr.bf16.mxu0 %v1696
        %1797 = vmatpush1.bf16.msra.mxu0 %v1695
        %1798 = vmatprep.subr.bf16.mxu0 %v1700
        %1799 = vmatpush1.bf16.msra.mxu0 %v1699
        %1800 = vmatprep.subr.bf16.mxu0 %v1704
        %1801 = vmatpush1.bf16.msra.mxu0 %v1703
        %1802 = vmatprep.subr.bf16.mxu0 %v1708
        %1803 = vmatpush1.bf16.msra.mxu0 %v1707
        %1804 = vmatprep.subr.bf16.mxu0 %v1712
        %1805 = vmatpush1.bf16.msra.mxu0 %v1711
        %1806 = vmatprep.subr.bf16.mxu0 %v1716
        %1807 = vmatpush1.bf16.msra.mxu0 %v1715
        %1808 = vmatprep.subr.bf16.mxu0 %v1720
        %1809 = vmatpush1.bf16.msra.mxu0 %v1719
        %1810 = vmatprep.subr.bf16.mxu0 0
        %1811 = vmatpush1.bf16.msra.mxu0 0
        %1812 = vmatprep.subr.bf16.mxu0 0
        %1813 = vmatpush1.bf16.msra.mxu0 0
        %1814 = vmatprep.subr.bf16.mxu0 0
        %1815 = vmatpush1.bf16.msra.mxu0 0
        %1816 = vmatprep.subr.bf16.mxu0 0
        %1817 = vmatpush1.bf16.msra.mxu0 0
        %1818 = vmatprep.subr.bf16.mxu0 0
        %1819 = vmatpush1.bf16.msra.mxu0 0
        %1820 = vmatprep.subr.bf16.mxu0 0
        %1821 = vmatpush1.bf16.msra.mxu0 0
        %1822 = vmatprep.subr.bf16.mxu0 0
        %1823 = vmatpush1.bf16.msra.mxu0 0
        %1824 = vmatprep.subr.bf16.mxu0 0
        %1825 = vmatpush1.bf16.msra.mxu0 0
        %1826 = vmatprep.mubr.bf16.mxu0 0
        %1827 = vmatmul.mubr.bf16.gmra.mrb[0].mxu0 0
        %v1828 = vpop.f32.mrb[0].mxu0
        %v1829 = vadd.f32 0.0, %v1828
        %v1830 = vpop.f32.mrb[0].mxu0
        %v1831 = vadd.f32 0.0, %v1830
        %v1832 = vpop.f32.mrb[0].mxu0
        %v1833 = vpop.f32.mrb[0].mxu0
        %1834 = vdwg.mxu0
        %v1835 = vadd.f32 %v1589, %v1788
        %v1836 = vadd.f32 %v1590, %v1790
        %v1837 = vadd.f32 %v1591, %v1829
        %v1838 = vadd.f32 %v1592, %v1831
        %v1839 = vld [vmem:[#allocation4 + $0x60] sm:$0xc0]
        %v1840 = vld [vmem:[#allocation4 + $0x68] sm:$0xc0]
        %v1841 = vld [vmem:[#allocation4 + $0x70] sm:$0xc0]
        %v1842 = vld [vmem:[#allocation4 + $0x78] sm:$0xc0]
        %v1875 = vunpack.c.l.b16 %v1557
        %v1876 = vunpack.c.h.b16 %v1557
        %v1877 = vunpack.c.l.b16 %v1558
        %v1878 = vunpack.c.h.b16 %v1558
        %v1879 = vunpack.c.l.b16 %v1559
        %v1880 = vunpack.c.h.b16 %v1559
        %v1881 = vunpack.c.l.b16 %v1560
        %v1882 = vunpack.c.h.b16 %v1560
        %v1883 = vunpack.c.l.b16 %v1561
        %v1884 = vunpack.c.h.b16 %v1561
        %v1885 = vunpack.c.l.b16 %v1562
        %v1886 = vunpack.c.h.b16 %v1562
        %v1887 = vunpack.c.l.b16 %v1563
        %v1888 = vunpack.c.h.b16 %v1563
        %v1889 = vunpack.c.l.b16 %v1564
        %v1890 = vunpack.c.h.b16 %v1564
        %v1891 = vunpack.c.l.b16 %v1565
        %v1892 = vunpack.c.h.b16 %v1565
        %v1893 = vunpack.c.l.b16 %v1566
        %v1894 = vunpack.c.h.b16 %v1566
        %v1895 = vunpack.c.l.b16 %v1567
        %v1896 = vunpack.c.h.b16 %v1567
        %v1897 = vunpack.c.l.b16 %v1568
        %v1898 = vunpack.c.h.b16 %v1568
        %v1899 = vunpack.c.l.b16 %v1569
        %v1900 = vunpack.c.h.b16 %v1569
        %v1901 = vunpack.c.l.b16 %v1570
        %v1902 = vunpack.c.h.b16 %v1570
        %v1903 = vunpack.c.l.b16 %v1571
        %v1904 = vunpack.c.h.b16 %v1571
        %v1905 = vunpack.c.l.b16 %v1572
        %v1906 = vunpack.c.h.b16 %v1572
        %v1907 = vunpack.c.l.b16 %v1573
        %v1908 = vunpack.c.h.b16 %v1573
        %v1909 = vunpack.c.l.b16 %v1574
        %v1910 = vunpack.c.h.b16 %v1574
        %v1911 = vunpack.c.l.b16 %v1575
        %v1912 = vunpack.c.h.b16 %v1575
        %v1913 = vunpack.c.l.b16 %v1576
        %v1914 = vunpack.c.h.b16 %v1576
        %v1915 = vunpack.c.l.b16 %v1577
        %v1916 = vunpack.c.h.b16 %v1577
        %v1917 = vunpack.c.l.b16 %v1578
        %v1918 = vunpack.c.h.b16 %v1578
        %v1919 = vunpack.c.l.b16 %v1579
        %v1920 = vunpack.c.h.b16 %v1579
        %v1921 = vunpack.c.l.b16 %v1580
        %v1922 = vunpack.c.h.b16 %v1580
        %v1923 = vunpack.c.l.b16 %v1581
        %v1924 = vunpack.c.h.b16 %v1581
        %v1925 = vunpack.c.l.b16 %v1582
        %v1926 = vunpack.c.h.b16 %v1582
        %v1927 = vunpack.c.l.b16 %v1583
        %v1928 = vunpack.c.h.b16 %v1583
        %v1929 = vunpack.c.l.b16 %v1584
        %v1930 = vunpack.c.h.b16 %v1584
        %v1931 = vunpack.c.l.b16 %v1585
        %v1932 = vunpack.c.h.b16 %v1585
        %v1933 = vunpack.c.l.b16 %v1586
        %v1934 = vunpack.c.h.b16 %v1586
        %v1935 = vunpack.c.l.b16 %v1587
        %v1936 = vunpack.c.h.b16 %v1587
        %v1937 = vunpack.c.l.b16 %v1588
        %v1938 = vunpack.c.h.b16 %v1588
        %v1939 = vpack.c.b16 %v1879, %v1875
        %v1940 = vpack.c.b16 %v1880, %v1876
        %v1941 = vpack.c.b16 %v1881, %v1877
        %v1942 = vpack.c.b16 %v1882, %v1878
        %v1943 = vpack.c.b16 %v1887, %v1883
        %v1944 = vpack.c.b16 %v1888, %v1884
        %v1945 = vpack.c.b16 %v1889, %v1885
        %v1946 = vpack.c.b16 %v1890, %v1886
        %v1947 = vpack.c.b16 %v1895, %v1891
        %v1948 = vpack.c.b16 %v1896, %v1892
        %v1949 = vpack.c.b16 %v1897, %v1893
        %v1950 = vpack.c.b16 %v1898, %v1894
        %v1951 = vpack.c.b16 %v1903, %v1899
        %v1952 = vpack.c.b16 %v1904, %v1900
        %v1953 = vpack.c.b16 %v1905, %v1901
        %v1954 = vpack.c.b16 %v1906, %v1902
        %v1955 = vpack.c.b16 %v1911, %v1907
        %v1956 = vpack.c.b16 %v1912, %v1908
        %v1957 = vpack.c.b16 %v1913, %v1909
        %v1958 = vpack.c.b16 %v1914, %v1910
        %v1959 = vpack.c.b16 %v1919, %v1915
        %v1960 = vpack.c.b16 %v1920, %v1916
        %v1961 = vpack.c.b16 %v1921, %v1917
        %v1962 = vpack.c.b16 %v1922, %v1918
        %v1963 = vpack.c.b16 %v1927, %v1923
        %v1964 = vpack.c.b16 %v1928, %v1924
        %v1965 = vpack.c.b16 %v1929, %v1925
        %v1966 = vpack.c.b16 %v1930, %v1926
        %v1967 = vpack.c.b16 %v1935, %v1931
        %v1968 = vpack.c.b16 %v1936, %v1932
        %v1969 = vpack.c.b16 %v1937, %v1933
        %v1970 = vpack.c.b16 %v1938, %v1934
        %2003 = vmatprep.subr.bf16.mxu0 %v1940
        %2004 = vmatpush1.bf16.msra.mxu0 %v1939
        %2005 = vmatprep.subr.bf16.mxu0 %v1944
        %2006 = vmatpush1.bf16.msra.mxu0 %v1943
        %2007 = vmatprep.subr.bf16.mxu0 %v1948
        %2008 = vmatpush1.bf16.msra.mxu0 %v1947
        %2009 = vmatprep.subr.bf16.mxu0 %v1952
        %2010 = vmatpush1.bf16.msra.mxu0 %v1951
        %2011 = vmatprep.subr.bf16.mxu0 %v1956
        %2012 = vmatpush1.bf16.msra.mxu0 %v1955
        %2013 = vmatprep.subr.bf16.mxu0 %v1960
        %2014 = vmatpush1.bf16.msra.mxu0 %v1959
        %2015 = vmatprep.subr.bf16.mxu0 %v1964
        %2016 = vmatpush1.bf16.msra.mxu0 %v1963
        %2017 = vmatprep.subr.bf16.mxu0 %v1968
        %2018 = vmatpush1.bf16.msra.mxu0 %v1967
        %2019 = vmatprep.subr.bf16.mxu0 0
        %2020 = vmatpush1.bf16.msra.mxu0 0
        %2021 = vmatprep.subr.bf16.mxu0 0
        %2022 = vmatpush1.bf16.msra.mxu0 0
        %2023 = vmatprep.subr.bf16.mxu0 0
        %2024 = vmatpush1.bf16.msra.mxu0 0
        %2025 = vmatprep.subr.bf16.mxu0 0
        %2026 = vmatpush1.bf16.msra.mxu0 0
        %2027 = vmatprep.subr.bf16.mxu0 0
        %2028 = vmatpush1.bf16.msra.mxu0 0
        %2029 = vmatprep.subr.bf16.mxu0 0
        %2030 = vmatpush1.bf16.msra.mxu0 0
        %2031 = vmatprep.subr.bf16.mxu0 0
        %2032 = vmatpush1.bf16.msra.mxu0 0
        %2033 = vmatprep.subr.bf16.mxu0 0
        %2034 = vmatpush1.bf16.msra.mxu0 0
        %2035 = vmatprep.mubr.bf16.mxu0 0
        %2036 = vmatmul.mubr.bf16.gmra.mrb[0].mxu0 0
        %v2037 = vpop.f32.mrb[0].mxu0
        %v2038 = vadd.f32 0.0, %v2037
        %v2039 = vpop.f32.mrb[0].mxu0
        %v2040 = vadd.f32 0.0, %v2039
        %v2041 = vpop.f32.mrb[0].mxu0
        %v2042 = vpop.f32.mrb[0].mxu0
        %2043 = vdwg.mxu0
        %2044 = vmatprep.subr.bf16.mxu0 %v1942
        %2045 = vmatpush1.bf16.msra.mxu0 %v1941
        %2046 = vmatprep.subr.bf16.mxu0 %v1946
        %2047 = vmatpush1.bf16.msra.mxu0 %v1945
        %2048 = vmatprep.subr.bf16.mxu0 %v1950
        %2049 = vmatpush1.bf16.msra.mxu0 %v1949
        %2050 = vmatprep.subr.bf16.mxu0 %v1954
        %2051 = vmatpush1.bf16.msra.mxu0 %v1953
        %2052 = vmatprep.subr.bf16.mxu0 %v1958
        %2053 = vmatpush1.bf16.msra.mxu0 %v1957
        %2054 = vmatprep.subr.bf16.mxu0 %v1962
        %2055 = vmatpush1.bf16.msra.mxu0 %v1961
        %2056 = vmatprep.subr.bf16.mxu0 %v1966
        %2057 = vmatpush1.bf16.msra.mxu0 %v1965
        %2058 = vmatprep.subr.bf16.mxu0 %v1970
        %2059 = vmatpush1.bf16.msra.mxu0 %v1969
        %2060 = vmatprep.subr.bf16.mxu0 0
        %2061 = vmatpush1.bf16.msra.mxu0 0
        %2062 = vmatprep.subr.bf16.mxu0 0
        %2063 = vmatpush1.bf16.msra.mxu0 0
        %2064 = vmatprep.subr.bf16.mxu0 0
        %2065 = vmatpush1.bf16.msra.mxu0 0
        %2066 = vmatprep.subr.bf16.mxu0 0
        %2067 = vmatpush1.bf16.msra.mxu0 0
        %2068 = vmatprep.subr.bf16.mxu0 0
        %2069 = vmatpush1.bf16.msra.mxu0 0
        %2070 = vmatprep.subr.bf16.mxu0 0
        %2071 = vmatpush1.bf16.msra.mxu0 0
        %2072 = vmatprep.subr.bf16.mxu0 0
        %2073 = vmatpush1.bf16.msra.mxu0 0
        %2074 = vmatprep.subr.bf16.mxu0 0
        %2075 = vmatpush1.bf16.msra.mxu0 0
        %2076 = vmatprep.mubr.bf16.mxu0 0
        %2077 = vmatmul.mubr.bf16.gmra.mrb[0].mxu0 0
        %v2078 = vpop.f32.mrb[0].mxu0
        %v2079 = vadd.f32 0.0, %v2078
        %v2080 = vpop.f32.mrb[0].mxu0
        %v2081 = vadd.f32 0.0, %v2080
        %v2082 = vpop.f32.mrb[0].mxu0
        %v2083 = vpop.f32.mrb[0].mxu0
        %2084 = vdwg.mxu0
        %v2089 = vrot.slane %v2038, 2
        %v2090 = vrot.slane %v2040, 2
        %v2091 = vrot.slane %v2079, 2
        %v2092 = vrot.slane %v2081, 2
        %v2097 = vadd.f32 %v1839, %v2089
        %v2098 = vadd.f32 %v1840, %v2090
        %v2099 = vadd.f32 %v1841, %v2091
        %v2100 = vadd.f32 %v1842, %v2092
        %v2101 = vxor.u32 %v1835, 2147483648
        %v2102 = vmul.f32 %v2101, 1.442695
        %v2103 = vpow.pop %v2102
        %v2104 = vadd.f32 %v2103, 1.0
        %v2105 = vrcp.pop %v2104
        %v2106 = vmul.f32 1.0, %v2105
        %v2107 = vxor.u32 %v1836, 2147483648
        %v2108 = vmul.f32 %v2107, 1.442695
        %v2109 = vpow.pop %v2108
        %v2110 = vadd.f32 %v2109, 1.0
        %v2111 = vrcp.pop %v2110
        %v2112 = vmul.f32 1.0, %v2111
        %v2113 = vtanh.pop %v1837
        %v2114 = vxor.u32 %v1838, 2147483648
        %v2115 = vmul.f32 %v2114, 1.442695
        %v2116 = vpow.pop %v2115
        %v2117 = vadd.f32 %v2116, 1.0
        %v2118 = vrcp.pop %v2117
        %v2119 = vmul.f32 1.0, %v2118
        %v2120 = vmul.f32 %v2112, 0.0
        %v2121 = vmul.f32 %v2106, %v2113
        %v2122 = vadd.f32 %v2120, %v2121
        %v2123 = vtanh.pop %v2122
        %v2124 = vmul.f32 %v2119, %v2123
        %v2125 = vxor.u32 %v2097, 2147483648
        %v2126 = vmul.f32 %v2125, 1.442695
        %v2127 = vpow.pop %v2126
        %v2128 = vadd.f32 %v2127, 1.0
        %v2129 = vrcp.pop %v2128
        %v2130 = vmul.f32 1.0, %v2129
        %v2131 = vxor.u32 %v2098, 2147483648
        %v2132 = vmul.f32 %v2131, 1.442695
        %v2133 = vpow.pop %v2132
        %v2134 = vadd.f32 %v2133, 1.0
        %v2135 = vrcp.pop %v2134
        %v2136 = vmul.f32 1.0, %v2135
        %v2137 = vtanh.pop %v2099
        %v2138 = vxor.u32 %v2100, 2147483648
        %v2139 = vmul.f32 %v2138, 1.442695
        %v2140 = vpow.pop %v2139
        %v2141 = vadd.f32 %v2140, 1.0
        %v2142 = vrcp.pop %v2141
        %v2143 = vmul.f32 1.0, %v2142
        %v2144 = vmul.f32 %v2136, 0.0
        %v2145 = vmul.f32 %v2130, %v2137
        %v2146 = vadd.f32 %v2144, %v2145
        %v2147 = vtanh.pop %v2146
        %v2148 = vmul.f32 %v2143, %v2147
        %2149 = vst [vmem:[#allocation2] sm:$0x3] %v2124
        %2150 = vst [vmem:[#allocation3 + $0x8] sm:$0xc0] %v2148
        %v2151 = vld [vmem:[#allocation4] sm:$0xc]
        %v2152 = vld [vmem:[#allocation4 + $0x8] sm:$0xc]
        %v2153 = vld [vmem:[#allocation4 + $0x10] sm:$0xc]
        %v2154 = vld [vmem:[#allocation4 + $0x18] sm:$0xc]
        %v2155 = vpack.c.bf16 %v2124, %v2124
        %2156 = vmatprep.subr.bf16.mxu0 %v1690
        %2157 = vmatpush1.bf16.msra.mxu0 %v1689
        %2158 = vmatprep.subr.bf16.mxu0 %v1694
        %2159 = vmatpush1.bf16.msra.mxu0 %v1693
        %2160 = vmatprep.subr.bf16.mxu0 %v1698
        %2161 = vmatpush1.bf16.msra.mxu0 %v1697
        %2162 = vmatprep.subr.bf16.mxu0 %v1702
        %2163 = vmatpush1.bf16.msra.mxu0 %v1701
        %2164 = vmatprep.subr.bf16.mxu0 %v1706
        %2165 = vmatpush1.bf16.msra.mxu0 %v1705
        %2166 = vmatprep.subr.bf16.mxu0 %v1710
        %2167 = vmatpush1.bf16.msra.mxu0 %v1709
        %2168 = vmatprep.subr.bf16.mxu0 %v1714
        %2169 = vmatpush1.bf16.msra.mxu0 %v1713
        %2170 = vmatprep.subr.bf16.mxu0 %v1718
        %2171 = vmatpush1.bf16.msra.mxu0 %v1717
        %2172 = vmatprep.subr.bf16.mxu0 0
        %2173 = vmatpush1.bf16.msra.mxu0 0
        %2174 = vmatprep.subr.bf16.mxu0 0
        %2175 = vmatpush1.bf16.msra.mxu0 0
        %2176 = vmatprep.subr.bf16.mxu0 0
        %2177 = vmatpush1.bf16.msra.mxu0 0
        %2178 = vmatprep.subr.bf16.mxu0 0
        %2179 = vmatpush1.bf16.msra.mxu0 0
        %2180 = vmatprep.subr.bf16.mxu0 0
        %2181 = vmatpush1.bf16.msra.mxu0 0
        %2182 = vmatprep.subr.bf16.mxu0 0
        %2183 = vmatpush1.bf16.msra.mxu0 0
        %2184 = vmatprep.subr.bf16.mxu0 0
        %2185 = vmatpush1.bf16.msra.mxu0 0
        %2186 = vmatprep.subr.bf16.mxu0 0
        %2187 = vmatpush1.bf16.msra.mxu0 0
        %2188 = vmatprep.mubr.bf16.mxu0 0
        %2189 = vmatmul.mubr.bf16.gmra.mrb[0].mxu0 %v2155
        %v2190 = vpop.f32.mrb[0].mxu0
        %v2191 = vadd.f32 0.0, %v2190
        %v2192 = vpop.f32.mrb[0].mxu0
        %v2193 = vadd.f32 0.0, %v2192
        %v2194 = vpop.f32.mrb[0].mxu0
        %v2195 = vpop.f32.mrb[0].mxu0
        %2196 = vdwg.mxu0
        %2197 = vmatprep.subr.bf16.mxu0 %v1692
        %2198 = vmatpush1.bf16.msra.mxu0 %v1691
        %2199 = vmatprep.subr.bf16.mxu0 %v1696
        %2200 = vmatpush1.bf16.msra.mxu0 %v1695
        %2201 = vmatprep.subr.bf16.mxu0 %v1700
        %2202 = vmatpush1.bf16.msra.mxu0 %v1699
        %2203 = vmatprep.subr.bf16.mxu0 %v1704
        %2204 = vmatpush1.bf16.msra.mxu0 %v1703
        %2205 = vmatprep.subr.bf16.mxu0 %v1708
        %2206 = vmatpush1.bf16.msra.mxu0 %v1707
        %2207 = vmatprep.subr.bf16.mxu0 %v1712
        %2208 = vmatpush1.bf16.msra.mxu0 %v1711
        %2209 = vmatprep.subr.bf16.mxu0 %v1716
        %2210 = vmatpush1.bf16.msra.mxu0 %v1715
        %2211 = vmatprep.subr.bf16.mxu0 %v1720
        %2212 = vmatpush1.bf16.msra.mxu0 %v1719
        %2213 = vmatprep.subr.bf16.mxu0 0
        %2214 = vmatpush1.bf16.msra.mxu0 0
        %2215 = vmatprep.subr.bf16.mxu0 0
        %2216 = vmatpush1.bf16.msra.mxu0 0
        %2217 = vmatprep.subr.bf16.mxu0 0
        %2218 = vmatpush1.bf16.msra.mxu0 0
        %2219 = vmatprep.subr.bf16.mxu0 0
        %2220 = vmatpush1.bf16.msra.mxu0 0
        %2221 = vmatprep.subr.bf16.mxu0 0
        %2222 = vmatpush1.bf16.msra.mxu0 0
        %2223 = vmatprep.subr.bf16.mxu0 0
        %2224 = vmatpush1.bf16.msra.mxu0 0
        %2225 = vmatprep.subr.bf16.mxu0 0
        %2226 = vmatpush1.bf16.msra.mxu0 0
        %2227 = vmatprep.subr.bf16.mxu0 0
        %2228 = vmatpush1.bf16.msra.mxu0 0
        %2229 = vmatprep.mubr.bf16.mxu0 0
        %2230 = vmatmul.mubr.bf16.gmra.mrb[0].mxu0 %v2155
        %v2231 = vpop.f32.mrb[0].mxu0
        %v2232 = vadd.f32 0.0, %v2231
        %v2233 = vpop.f32.mrb[0].mxu0
        %v2234 = vadd.f32 0.0, %v2233
        %v2235 = vpop.f32.mrb[0].mxu0
        %v2236 = vpop.f32.mrb[0].mxu0
        %2237 = vdwg.mxu0
        %v2242 = vrot.slane %v2191, 6
        %v2243 = vrot.slane %v2193, 6
        %v2244 = vrot.slane %v2232, 6
        %v2245 = vrot.slane %v2234, 6
        %v2250 = vadd.f32 %v2151, %v2242
        %v2251 = vadd.f32 %v2152, %v2243
        %v2252 = vadd.f32 %v2153, %v2244
        %v2253 = vadd.f32 %v2154, %v2245
        %v2254 = vld [vmem:[#allocation4 + $0x60] sm:$0x30]
        %v2255 = vld [vmem:[#allocation4 + $0x68] sm:$0x30]
        %v2256 = vld [vmem:[#allocation4 + $0x70] sm:$0x30]
        %v2257 = vld [vmem:[#allocation4 + $0x78] sm:$0x30]
        %v2258 = vpack.c.bf16 %v2148, %v2148
        %v2260 = vrot.slane %v2258, 3
        %2262 = vmatprep.subr.bf16.mxu0 %v1940
        %2263 = vmatpush1.bf16.msra.mxu0 %v1939
        %2264 = vmatprep.subr.bf16.mxu0 %v1944
        %2265 = vmatpush1.bf16.msra.mxu0 %v1943
        %2266 = vmatprep.subr.bf16.mxu0 %v1948
        %2267 = vmatpush1.bf16.msra.mxu0 %v1947
        %2268 = vmatprep.subr.bf16.mxu0 %v1952
        %2269 = vmatpush1.bf16.msra.mxu0 %v1951
        %2270 = vmatprep.subr.bf16.mxu0 %v1956
        %2271 = vmatpush1.bf16.msra.mxu0 %v1955
        %2272 = vmatprep.subr.bf16.mxu0 %v1960
        %2273 = vmatpush1.bf16.msra.mxu0 %v1959
        %2274 = vmatprep.subr.bf16.mxu0 %v1964
        %2275 = vmatpush1.bf16.msra.mxu0 %v1963
        %2276 = vmatprep.subr.bf16.mxu0 %v1968
        %2277 = vmatpush1.bf16.msra.mxu0 %v1967
        %2278 = vmatprep.subr.bf16.mxu0 0
        %2279 = vmatpush1.bf16.msra.mxu0 0
        %2280 = vmatprep.subr.bf16.mxu0 0
        %2281 = vmatpush1.bf16.msra.mxu0 0
        %2282 = vmatprep.subr.bf16.mxu0 0
        %2283 = vmatpush1.bf16.msra.mxu0 0
        %2284 = vmatprep.subr.bf16.mxu0 0
        %2285 = vmatpush1.bf16.msra.mxu0 0
        %2286 = vmatprep.subr.bf16.mxu0 0
        %2287 = vmatpush1.bf16.msra.mxu0 0
        %2288 = vmatprep.subr.bf16.mxu0 0
        %2289 = vmatpush1.bf16.msra.mxu0 0
        %2290 = vmatprep.subr.bf16.mxu0 0
        %2291 = vmatpush1.bf16.msra.mxu0 0
        %2292 = vmatprep.subr.bf16.mxu0 0
        %2293 = vmatpush1.bf16.msra.mxu0 0
        %2294 = vmatprep.mubr.bf16.mxu0 0
        %2295 = vmatmul.mubr.bf16.gmra.mrb[0].mxu0 %v2260
        %v2296 = vpop.f32.mrb[0].mxu0
        %v2297 = vadd.f32 0.0, %v2296
        %v2298 = vpop.f32.mrb[0].mxu0
        %v2299 = vadd.f32 0.0, %v2298
        %v2300 = vpop.f32.mrb[0].mxu0
        %v2301 = vpop.f32.mrb[0].mxu0
        %2302 = vdwg.mxu0
        %2303 = vmatprep.subr.bf16.mxu0 %v1942
        %2304 = vmatpush1.bf16.msra.mxu0 %v1941
        %2305 = vmatprep.subr.bf16.mxu0 %v1946
        %2306 = vmatpush1.bf16.msra.mxu0 %v1945
        %2307 = vmatprep.subr.bf16.mxu0 %v1950
        %2308 = vmatpush1.bf16.msra.mxu0 %v1949
        %2309 = vmatprep.subr.bf16.mxu0 %v1954
        %2310 = vmatpush1.bf16.msra.mxu0 %v1953
        %2311 = vmatprep.subr.bf16.mxu0 %v1958
        %2312 = vmatpush1.bf16.msra.mxu0 %v1957
        %2313 = vmatprep.subr.bf16.mxu0 %v1962
        %2314 = vmatpush1.bf16.msra.mxu0 %v1961
        %2315 = vmatprep.subr.bf16.mxu0 %v1966
        %2316 = vmatpush1.bf16.msra.mxu0 %v1965
        %2317 = vmatprep.subr.bf16.mxu0 %v1970
        %2318 = vmatpush1.bf16.msra.mxu0 %v1969
        %2319 = vmatprep.subr.bf16.mxu0 0
        %2320 = vmatpush1.bf16.msra.mxu0 0
        %2321 = vmatprep.subr.bf16.mxu0 0
        %2322 = vmatpush1.bf16.msra.mxu0 0
        %2323 = vmatprep.subr.bf16.mxu0 0
        %2324 = vmatpush1.bf16.msra.mxu0 0
        %2325 = vmatprep.subr.bf16.mxu0 0
        %2326 = vmatpush1.bf16.msra.mxu0 0
        %2327 = vmatprep.subr.bf16.mxu0 0
        %2328 = vmatpush1.bf16.msra.mxu0 0
        %2329 = vmatprep.subr.bf16.mxu0 0
        %2330 = vmatpush1.bf16.msra.mxu0 0
        %2331 = vmatprep.subr.bf16.mxu0 0
        %2332 = vmatpush1.bf16.msra.mxu0 0
        %2333 = vmatprep.subr.bf16.mxu0 0
        %2334 = vmatpush1.bf16.msra.mxu0 0
        %2335 = vmatprep.mubr.bf16.mxu0 0
        %2336 = vmatmul.mubr.bf16.gmra.mrb[0].mxu0 %v2260
        %v2337 = vpop.f32.mrb[0].mxu0
        %v2338 = vadd.f32 0.0, %v2337
        %v2339 = vpop.f32.mrb[0].mxu0
        %v2340 = vadd.f32 0.0, %v2339
        %v2341 = vpop.f32.mrb[0].mxu0
        %v2342 = vpop.f32.mrb[0].mxu0
        %2343 = vdwg.mxu0
        %v2348 = vrot.slane %v2297, 4
        %v2349 = vrot.slane %v2299, 4
        %v2350 = vrot.slane %v2338, 4
        %v2351 = vrot.slane %v2340, 4
        %v2356 = vadd.f32 %v2254, %v2348
        %v2357 = vadd.f32 %v2255, %v2349
        %v2358 = vadd.f32 %v2256, %v2350
        %v2359 = vadd.f32 %v2257, %v2351
        %v2360 = vxor.u32 %v2250, 2147483648
        %v2361 = vmul.f32 %v2360, 1.442695
        %v2362 = vpow.pop %v2361
        %v2363 = vadd.f32 %v2362, 1.0
        %v2364 = vrcp.pop %v2363
        %v2365 = vmul.f32 1.0, %v2364
        %v2366 = vxor.u32 %v2251, 2147483648
        %v2367 = vmul.f32 %v2366, 1.442695
        %v2368 = vpow.pop %v2367
        %v2369 = vadd.f32 %v2368, 1.0
        %v2370 = vrcp.pop %v2369
        %v2371 = vmul.f32 1.0, %v2370
        %v2372 = vtanh.pop %v2252
        %v2373 = vxor.u32 %v2253, 2147483648
        %v2374 = vmul.f32 %v2373, 1.442695
        %v2375 = vpow.pop %v2374
        %v2376 = vadd.f32 %v2375, 1.0
        %v2377 = vrcp.pop %v2376
        %v2378 = vmul.f32 1.0, %v2377
        %v2380 = vrot.slane %v2122, 6
        %v2382 = vmul.f32 %v2371, %v2380
        %v2383 = vmul.f32 %v2365, %v2372
        %v2384 = vadd.f32 %v2382, %v2383
        %v2385 = vtanh.pop %v2384
        %v2386 = vmul.f32 %v2378, %v2385
        %v2387 = vxor.u32 %v2356, 2147483648
        %v2388 = vmul.f32 %v2387, 1.442695
        %v2389 = vpow.pop %v2388
        %v2390 = vadd.f32 %v2389, 1.0
        %v2391 = vrcp.pop %v2390
        %v2392 = vmul.f32 1.0, %v2391
        %v2393 = vxor.u32 %v2357, 2147483648
        %v2394 = vmul.f32 %v2393, 1.442695
        %v2395 = vpow.pop %v2394
        %v2396 = vadd.f32 %v2395, 1.0
        %v2397 = vrcp.pop %v2396
        %v2398 = vmul.f32 1.0, %v2397
        %v2399 = vtanh.pop %v2358
        %v2400 = vxor.u32 %v2359, 2147483648
        %v2401 = vmul.f32 %v2400, 1.442695
        %v2402 = vpow.pop %v2401
        %v2403 = vadd.f32 %v2402, 1.0
        %v2404 = vrcp.pop %v2403
        %v2405 = vmul.f32 1.0, %v2404
        %v2407 = vrot.slane %v2146, 2
        %v2409 = vmul.f32 %v2398, %v2407
        %v2410 = vmul.f32 %v2392, %v2399
        %v2411 = vadd.f32 %v2409, %v2410
        %v2412 = vtanh.pop %v2411
        %v2413 = vmul.f32 %v2405, %v2412
        %2414 = vst [vmem:[#allocation2] sm:$0xc] %v2386
        %2415 = vst [vmem:[#allocation3 + $0x8] sm:$0x30] %v2413
        %v2416 = vld [vmem:[#allocation4] sm:$0x30]
        %v2417 = vld [vmem:[#allocation4 + $0x8] sm:$0x30]
        %v2418 = vld [vmem:[#allocation4 + $0x10] sm:$0x30]
        %v2419 = vld [vmem:[#allocation4 + $0x18] sm:$0x30]
        %v2420 = vpack.c.bf16 %v2386, %v2386
        %v2422 = vrot.slane %v2420, 1
        %2424 = vmatprep.subr.bf16.mxu0 %v1690
        %2425 = vmatpush1.bf16.msra.mxu0 %v1689
        %2426 = vmatprep.subr.bf16.mxu0 %v1694
        %2427 = vmatpush1.bf16.msra.mxu0 %v1693
        %2428 = vmatprep.subr.bf16.mxu0 %v1698
        %2429 = vmatpush1.bf16.msra.mxu0 %v1697
        %2430 = vmatprep.subr.bf16.mxu0 %v1702
        %2431 = vmatpush1.bf16.msra.mxu0 %v1701
        %2432 = vmatprep.subr.bf16.mxu0 %v1706
        %2433 = vmatpush1.bf16.msra.mxu0 %v1705
        %2434 = vmatprep.subr.bf16.mxu0 %v1710
        %2435 = vmatpush1.bf16.msra.mxu0 %v1709
        %2436 = vmatprep.subr.bf16.mxu0 %v1714
        %2437 = vmatpush1.bf16.msra.mxu0 %v1713
        %2438 = vmatprep.subr.bf16.mxu0 %v1718
        %2439 = vmatpush1.bf16.msra.mxu0 %v1717
        %2440 = vmatprep.subr.bf16.mxu0 0
        %2441 = vmatpush1.bf16.msra.mxu0 0
        %2442 = vmatprep.subr.bf16.mxu0 0
        %2443 = vmatpush1.bf16.msra.mxu0 0
        %2444 = vmatprep.subr.bf16.mxu0 0
        %2445 = vmatpush1.bf16.msra.mxu0 0
        %2446 = vmatprep.subr.bf16.mxu0 0
        %2447 = vmatpush1.bf16.msra.mxu0 0
        %2448 = vmatprep.subr.bf16.mxu0 0
        %2449 = vmatpush1.bf16.msra.mxu0 0
        %2450 = vmatprep.subr.bf16.mxu0 0
        %2451 = vmatpush1.bf16.msra.mxu0 0
        %2452 = vmatprep.subr.bf16.mxu0 0
        %2453 = vmatpush1.bf16.msra.mxu0 0
        %2454 = vmatprep.subr.bf16.mxu0 0
        %2455 = vmatpush1.bf16.msra.mxu0 0
        %2456 = vmatprep.mubr.bf16.mxu0 0
        %2457 = vmatmul.mubr.bf16.gmra.mrb[0].mxu0 %v2422
        %v2458 = vpop.f32.mrb[0].mxu0
        %v2459 = vadd.f32 0.0, %v2458
        %v2460 = vpop.f32.mrb[0].mxu0
        %v2461 = vadd.f32 0.0, %v2460
        %v2462 = vpop.f32.mrb[0].mxu0
        %v2463 = vpop.f32.mrb[0].mxu0
        %2464 = vdwg.mxu0
        %2465 = vmatprep.subr.bf16.mxu0 %v1692
        %2466 = vmatpush1.bf16.msra.mxu0 %v1691
        %2467 = vmatprep.subr.bf16.mxu0 %v1696
        %2468 = vmatpush1.bf16.msra.mxu0 %v1695
        %2469 = vmatprep.subr.bf16.mxu0 %v1700
        %2470 = vmatpush1.bf16.msra.mxu0 %v1699
        %2471 = vmatprep.subr.bf16.mxu0 %v1704
        %2472 = vmatpush1.bf16.msra.mxu0 %v1703
        %2473 = vmatprep.subr.bf16.mxu0 %v1708
        %2474 = vmatpush1.bf16.msra.mxu0 %v1707
        %2475 = vmatprep.subr.bf16.mxu0 %v1712
        %2476 = vmatpush1.bf16.msra.mxu0 %v1711
        %2477 = vmatprep.subr.bf16.mxu0 %v1716
        %2478 = vmatpush1.bf16.msra.mxu0 %v1715
        %2479 = vmatprep.subr.bf16.mxu0 %v1720
        %2480 = vmatpush1.bf16.msra.mxu0 %v1719
        %2481 = vmatprep.subr.bf16.mxu0 0
        %2482 = vmatpush1.bf16.msra.mxu0 0
        %2483 = vmatprep.subr.bf16.mxu0 0
        %2484 = vmatpush1.bf16.msra.mxu0 0
        %2485 = vmatprep.subr.bf16.mxu0 0
        %2486 = vmatpush1.bf16.msra.mxu0 0
        %2487 = vmatprep.subr.bf16.mxu0 0
        %2488 = vmatpush1.bf16.msra.mxu0 0
        %2489 = vmatprep.subr.bf16.mxu0 0
        %2490 = vmatpush1.bf16.msra.mxu0 0
        %2491 = vmatprep.subr.bf16.mxu0 0
        %2492 = vmatpush1.bf16.msra.mxu0 0
        %2493 = vmatprep.subr.bf16.mxu0 0
        %2494 = vmatpush1.bf16.msra.mxu0 0
        %2495 = vmatprep.subr.bf16.mxu0 0
        %2496 = vmatpush1.bf16.msra.mxu0 0
        %2497 = vmatprep.mubr.bf16.mxu0 0
        %2498 = vmatmul.mubr.bf16.gmra.mrb[0].mxu0 %v2422
        %v2499 = vpop.f32.mrb[0].mxu0
        %v2500 = vadd.f32 0.0, %v2499
        %v2501 = vpop.f32.mrb[0].mxu0
        %v2502 = vadd.f32 0.0, %v2501
        %v2503 = vpop.f32.mrb[0].mxu0
        %v2504 = vpop.f32.mrb[0].mxu0
        %2505 = vdwg.mxu0
        %v2510 = vrot.slane %v2459, 4
        %v2511 = vrot.slane %v2461, 4
        %v2512 = vrot.slane %v2500, 4
        %v2513 = vrot.slane %v2502, 4
        %v2518 = vadd.f32 %v2416, %v2510
        %v2519 = vadd.f32 %v2417, %v2511
        %v2520 = vadd.f32 %v2418, %v2512
        %v2521 = vadd.f32 %v2419, %v2513
        %v2522 = vld [vmem:[#allocation4 + $0x60] sm:$0xc]
        %v2523 = vld [vmem:[#allocation4 + $0x68] sm:$0xc]
        %v2524 = vld [vmem:[#allocation4 + $0x70] sm:$0xc]
        %v2525 = vld [vmem:[#allocation4 + $0x78] sm:$0xc]
        %v2526 = vpack.c.bf16 %v2413, %v2413
        %v2528 = vrot.slane %v2526, 2
        %2530 = vmatprep.subr.bf16.mxu0 %v1940
        %2531 = vmatpush1.bf16.msra.mxu0 %v1939
        %2532 = vmatprep.subr.bf16.mxu0 %v1944
        %2533 = vmatpush1.bf16.msra.mxu0 %v1943
        %2534 = vmatprep.subr.bf16.mxu0 %v1948
        %2535 = vmatpush1.bf16.msra.mxu0 %v1947
        %2536 = vmatprep.subr.bf16.mxu0 %v1952
        %2537 = vmatpush1.bf16.msra.mxu0 %v1951
        %2538 = vmatprep.subr.bf16.mxu0 %v1956
        %2539 = vmatpush1.bf16.msra.mxu0 %v1955
        %2540 = vmatprep.subr.bf16.mxu0 %v1960
        %2541 = vmatpush1.bf16.msra.mxu0 %v1959
        %2542 = vmatprep.subr.bf16.mxu0 %v1964
        %2543 = vmatpush1.bf16.msra.mxu0 %v1963
        %2544 = vmatprep.subr.bf16.mxu0 %v1968
        %2545 = vmatpush1.bf16.msra.mxu0 %v1967
        %2546 = vmatprep.subr.bf16.mxu0 0
        %2547 = vmatpush1.bf16.msra.mxu0 0
        %2548 = vmatprep.subr.bf16.mxu0 0
        %2549 = vmatpush1.bf16.msra.mxu0 0
        %2550 = vmatprep.subr.bf16.mxu0 0
        %2551 = vmatpush1.bf16.msra.mxu0 0
        %2552 = vmatprep.subr.bf16.mxu0 0
        %2553 = vmatpush1.bf16.msra.mxu0 0
        %2554 = vmatprep.subr.bf16.mxu0 0
        %2555 = vmatpush1.bf16.msra.mxu0 0
        %2556 = vmatprep.subr.bf16.mxu0 0
        %2557 = vmatpush1.bf16.msra.mxu0 0
        %2558 = vmatprep.subr.bf16.mxu0 0
        %2559 = vmatpush1.bf16.msra.mxu0 0
        %2560 = vmatprep.subr.bf16.mxu0 0
        %2561 = vmatpush1.bf16.msra.mxu0 0
        %2562 = vmatprep.mubr.bf16.mxu0 0
        %2563 = vmatmul.mubr.bf16.gmra.mrb[0].mxu0 %v2528
        %v2564 = vpop.f32.mrb[0].mxu0
        %v2565 = vadd.f32 0.0, %v2564
        %v2566 = vpop.f32.mrb[0].mxu0
        %v2567 = vadd.f32 0.0, %v2566
        %v2568 = vpop.f32.mrb[0].mxu0
        %v2569 = vpop.f32.mrb[0].mxu0
        %2570 = vdwg.mxu0
        %2571 = vmatprep.subr.bf16.mxu0 %v1942
        %2572 = vmatpush1.bf16.msra.mxu0 %v1941
        %2573 = vmatprep.subr.bf16.mxu0 %v1946
        %2574 = vmatpush1.bf16.msra.mxu0 %v1945
        %2575 = vmatprep.subr.bf16.mxu0 %v1950
        %2576 = vmatpush1.bf16.msra.mxu0 %v1949
        %2577 = vmatprep.subr.bf16.mxu0 %v1954
        %2578 = vmatpush1.bf16.msra.mxu0 %v1953
        %2579 = vmatprep.subr.bf16.mxu0 %v1958
        %2580 = vmatpush1.bf16.msra.mxu0 %v1957
        %2581 = vmatprep.subr.bf16.mxu0 %v1962
        %2582 = vmatpush1.bf16.msra.mxu0 %v1961
        %2583 = vmatprep.subr.bf16.mxu0 %v1966
        %2584 = vmatpush1.bf16.msra.mxu0 %v1965
        %2585 = vmatprep.subr.bf16.mxu0 %v1970
        %2586 = vmatpush1.bf16.msra.mxu0 %v1969
        %2587 = vmatprep.subr.bf16.mxu0 0
        %2588 = vmatpush1.bf16.msra.mxu0 0
        %2589 = vmatprep.subr.bf16.mxu0 0
        %2590 = vmatpush1.bf16.msra.mxu0 0
        %2591 = vmatprep.subr.bf16.mxu0 0
        %2592 = vmatpush1.bf16.msra.mxu0 0
        %2593 = vmatprep.subr.bf16.mxu0 0
        %2594 = vmatpush1.bf16.msra.mxu0 0
        %2595 = vmatprep.subr.bf16.mxu0 0
        %2596 = vmatpush1.bf16.msra.mxu0 0
        %2597 = vmatprep.subr.bf16.mxu0 0
        %2598 = vmatpush1.bf16.msra.mxu0 0
        %2599 = vmatprep.subr.bf16.mxu0 0
        %2600 = vmatpush1.bf16.msra.mxu0 0
        %2601 = vmatprep.subr.bf16.mxu0 0
        %2602 = vmatpush1.bf16.msra.mxu0 0
        %2603 = vmatprep.mubr.bf16.mxu0 0
        %2604 = vmatmul.mubr.bf16.gmra.mrb[0].mxu0 %v2528
        %v2605 = vpop.f32.mrb[0].mxu0
        %v2606 = vadd.f32 0.0, %v2605
        %v2607 = vpop.f32.mrb[0].mxu0
        %v2608 = vadd.f32 0.0, %v2607
        %v2609 = vpop.f32.mrb[0].mxu0
        %v2610 = vpop.f32.mrb[0].mxu0
        %2611 = vdwg.mxu0
        %v2616 = vrot.slane %v2565, 6
        %v2617 = vrot.slane %v2567, 6
        %v2618 = vrot.slane %v2606, 6
        %v2619 = vrot.slane %v2608, 6
        %v2624 = vadd.f32 %v2522, %v2616
        %v2625 = vadd.f32 %v2523, %v2617
        %v2626 = vadd.f32 %v2524, %v2618
        %v2627 = vadd.f32 %v2525, %v2619
        %v2628 = vxor.u32 %v2518, 2147483648
        %v2629 = vmul.f32 %v2628, 1.442695
        %v2630 = vpow.pop %v2629
        %v2631 = vadd.f32 %v2630, 1.0
        %v2632 = vrcp.pop %v2631
        %v2633 = vmul.f32 1.0, %v2632
        %v2634 = vxor.u32 %v2519, 2147483648
        %v2635 = vmul.f32 %v2634, 1.442695
        %v2636 = vpow.pop %v2635
        %v2637 = vadd.f32 %v2636, 1.0
        %v2638 = vrcp.pop %v2637
        %v2639 = vmul.f32 1.0, %v2638
        %v2640 = vtanh.pop %v2520
        %v2641 = vxor.u32 %v2521, 2147483648
        %v2642 = vmul.f32 %v2641, 1.442695
        %v2643 = vpow.pop %v2642
        %v2644 = vadd.f32 %v2643, 1.0
        %v2645 = vrcp.pop %v2644
        %v2646 = vmul.f32 1.0, %v2645
        %v2648 = vrot.slane %v2384, 6
        %v2650 = vmul.f32 %v2639, %v2648
        %v2651 = vmul.f32 %v2633, %v2640
        %v2652 = vadd.f32 %v2650, %v2651
        %v2653 = vtanh.pop %v2652
        %v2654 = vmul.f32 %v2646, %v2653
        %v2655 = vxor.u32 %v2624, 2147483648
        %v2656 = vmul.f32 %v2655, 1.442695
        %v2657 = vpow.pop %v2656
        %v2658 = vadd.f32 %v2657, 1.0
        %v2659 = vrcp.pop %v2658
        %v2660 = vmul.f32 1.0, %v2659
        %v2661 = vxor.u32 %v2625, 2147483648
        %v2662 = vmul.f32 %v2661, 1.442695
        %v2663 = vpow.pop %v2662
        %v2664 = vadd.f32 %v2663, 1.0
        %v2665 = vrcp.pop %v2664
        %v2666 = vmul.f32 1.0, %v2665
        %v2667 = vtanh.pop %v2626
        %v2668 = vxor.u32 %v2627, 2147483648
        %v2669 = vmul.f32 %v2668, 1.442695
        %v2670 = vpow.pop %v2669
        %v2671 = vadd.f32 %v2670, 1.0
        %v2672 = vrcp.pop %v2671
        %v2673 = vmul.f32 1.0, %v2672
        %v2675 = vrot.slane %v2411, 2
        %v2677 = vmul.f32 %v2666, %v2675
        %v2678 = vmul.f32 %v2660, %v2667
        %v2679 = vadd.f32 %v2677, %v2678
        %v2680 = vtanh.pop %v2679
        %v2681 = vmul.f32 %v2673, %v2680
        %2682 = vst [vmem:[#allocation2] sm:$0x30] %v2654
        %2683 = vst [vmem:[#allocation3 + $0x8] sm:$0xc] %v2681
        %v2684 = vld [vmem:[#allocation4] sm:$0xc0]
        %v2685 = vld [vmem:[#allocation4 + $0x8] sm:$0xc0]
        %v2686 = vld [vmem:[#allocation4 + $0x10] sm:$0xc0]
        %v2687 = vld [vmem:[#allocation4 + $0x18] sm:$0xc0]
        %v2688 = vpack.c.bf16 %v2654, %v2654
        %v2690 = vrot.slane %v2688, 2
        %2692 = vmatprep.subr.bf16.mxu0 %v1690
        %2693 = vmatpush1.bf16.msra.mxu0 %v1689
        %2694 = vmatprep.subr.bf16.mxu0 %v1694
        %2695 = vmatpush1.bf16.msra.mxu0 %v1693
        %2696 = vmatprep.subr.bf16.mxu0 %v1698
        %2697 = vmatpush1.bf16.msra.mxu0 %v1697
        %2698 = vmatprep.subr.bf16.mxu0 %v1702
        %2699 = vmatpush1.bf16.msra.mxu0 %v1701
        %2700 = vmatprep.subr.bf16.mxu0 %v1706
        %2701 = vmatpush1.bf16.msra.mxu0 %v1705
        %2702 = vmatprep.subr.bf16.mxu0 %v1710
        %2703 = vmatpush1.bf16.msra.mxu0 %v1709
        %2704 = vmatprep.subr.bf16.mxu0 %v1714
        %2705 = vmatpush1.bf16.msra.mxu0 %v1713
        %2706 = vmatprep.subr.bf16.mxu0 %v1718
        %2707 = vmatpush1.bf16.msra.mxu0 %v1717
        %2708 = vmatprep.subr.bf16.mxu0 0
        %2709 = vmatpush1.bf16.msra.mxu0 0
        %2710 = vmatprep.subr.bf16.mxu0 0
        %2711 = vmatpush1.bf16.msra.mxu0 0
        %2712 = vmatprep.subr.bf16.mxu0 0
        %2713 = vmatpush1.bf16.msra.mxu0 0
        %2714 = vmatprep.subr.bf16.mxu0 0
        %2715 = vmatpush1.bf16.msra.mxu0 0
        %2716 = vmatprep.subr.bf16.mxu0 0
        %2717 = vmatpush1.bf16.msra.mxu0 0
        %2718 = vmatprep.subr.bf16.mxu0 0
        %2719 = vmatpush1.bf16.msra.mxu0 0
        %2720 = vmatprep.subr.bf16.mxu0 0
        %2721 = vmatpush1.bf16.msra.mxu0 0
        %2722 = vmatprep.subr.bf16.mxu0 0
        %2723 = vmatpush1.bf16.msra.mxu0 0
        %2724 = vmatprep.mubr.bf16.mxu0 0
        %2725 = vmatmul.mubr.bf16.gmra.mrb[0].mxu0 %v2690
        %v2726 = vpop.f32.mrb[0].mxu0
        %v2727 = vadd.f32 0.0, %v2726
        %v2728 = vpop.f32.mrb[0].mxu0
        %v2729 = vadd.f32 0.0, %v2728
        %v2730 = vpop.f32.mrb[0].mxu0
        %v2731 = vpop.f32.mrb[0].mxu0
        %2732 = vdwg.mxu0
        %2733 = vmatprep.subr.bf16.mxu0 %v1692
        %2734 = vmatpush1.bf16.msra.mxu0 %v1691
        %2735 = vmatprep.subr.bf16.mxu0 %v1696
        %2736 = vmatpush1.bf16.msra.mxu0 %v1695
        %2737 = vmatprep.subr.bf16.mxu0 %v1700
        %2738 = vmatpush1.bf16.msra.mxu0 %v1699
        %2739 = vmatprep.subr.bf16.mxu0 %v1704
        %2740 = vmatpush1.bf16.msra.mxu0 %v1703
        %2741 = vmatprep.subr.bf16.mxu0 %v1708
        %2742 = vmatpush1.bf16.msra.mxu0 %v1707
        %2743 = vmatprep.subr.bf16.mxu0 %v1712
        %2744 = vmatpush1.bf16.msra.mxu0 %v1711
        %2745 = vmatprep.subr.bf16.mxu0 %v1716
        %2746 = vmatpush1.bf16.msra.mxu0 %v1715
        %2747 = vmatprep.subr.bf16.mxu0 %v1720
        %2748 = vmatpush1.bf16.msra.mxu0 %v1719
        %2749 = vmatprep.subr.bf16.mxu0 0
        %2750 = vmatpush1.bf16.msra.mxu0 0
        %2751 = vmatprep.subr.bf16.mxu0 0
        %2752 = vmatpush1.bf16.msra.mxu0 0
        %2753 = vmatprep.subr.bf16.mxu0 0
        %2754 = vmatpush1.bf16.msra.mxu0 0
        %2755 = vmatprep.subr.bf16.mxu0 0
        %2756 = vmatpush1.bf16.msra.mxu0 0
        %2757 = vmatprep.subr.bf16.mxu0 0
        %2758 = vmatpush1.bf16.msra.mxu0 0
        %2759 = vmatprep.subr.bf16.mxu0 0
        %2760 = vmatpush1.bf16.msra.mxu0 0
        %2761 = vmatprep.subr.bf16.mxu0 0
        %2762 = vmatpush1.bf16.msra.mxu0 0
        %2763 = vmatprep.subr.bf16.mxu0 0
        %2764 = vmatpush1.bf16.msra.mxu0 0
        %2765 = vmatprep.mubr.bf16.mxu0 0
        %2766 = vmatmul.mubr.bf16.gmra.mrb[0].mxu0 %v2690
        %v2767 = vpop.f32.mrb[0].mxu0
        %v2768 = vadd.f32 0.0, %v2767
        %v2769 = vpop.f32.mrb[0].mxu0
        %v2770 = vadd.f32 0.0, %v2769
        %v2771 = vpop.f32.mrb[0].mxu0
        %v2772 = vpop.f32.mrb[0].mxu0
        %2773 = vdwg.mxu0
        %v2778 = vrot.slane %v2727, 2
        %v2779 = vrot.slane %v2729, 2
        %v2780 = vrot.slane %v2768, 2
        %v2781 = vrot.slane %v2770, 2
        %v2786 = vadd.f32 %v2684, %v2778
        %v2787 = vadd.f32 %v2685, %v2779
        %v2788 = vadd.f32 %v2686, %v2780
        %v2789 = vadd.f32 %v2687, %v2781
        %v2790 = vld [vmem:[#allocation4 + $0x60] sm:$0x3]
        %v2791 = vld [vmem:[#allocation4 + $0x68] sm:$0x3]
        %v2792 = vld [vmem:[#allocation4 + $0x70] sm:$0x3]
        %v2793 = vld [vmem:[#allocation4 + $0x78] sm:$0x3]
        %v2794 = vpack.c.bf16 %v2681, %v2681
        %v2796 = vrot.slane %v2794, 1
        %2798 = vmatprep.subr.bf16.mxu0 %v1940
        %2799 = vmatpush1.bf16.msra.mxu0 %v1939
        %2800 = vmatprep.subr.bf16.mxu0 %v1944
        %2801 = vmatpush1.bf16.msra.mxu0 %v1943
        %2802 = vmatprep.subr.bf16.mxu0 %v1948
        %2803 = vmatpush1.bf16.msra.mxu0 %v1947
        %2804 = vmatprep.subr.bf16.mxu0 %v1952
        %2805 = vmatpush1.bf16.msra.mxu0 %v1951
        %2806 = vmatprep.subr.bf16.mxu0 %v1956
        %2807 = vmatpush1.bf16.msra.mxu0 %v1955
        %2808 = vmatprep.subr.bf16.mxu0 %v1960
        %2809 = vmatpush1.bf16.msra.mxu0 %v1959
        %2810 = vmatprep.subr.bf16.mxu0 %v1964
        %2811 = vmatpush1.bf16.msra.mxu0 %v1963
        %2812 = vmatprep.subr.bf16.mxu0 %v1968
        %2813 = vmatpush1.bf16.msra.mxu0 %v1967
        %2814 = vmatprep.subr.bf16.mxu0 0
        %2815 = vmatpush1.bf16.msra.mxu0 0
        %2816 = vmatprep.subr.bf16.mxu0 0
        %2817 = vmatpush1.bf16.msra.mxu0 0
        %2818 = vmatprep.subr.bf16.mxu0 0
        %2819 = vmatpush1.bf16.msra.mxu0 0
        %2820 = vmatprep.subr.bf16.mxu0 0
        %2821 = vmatpush1.bf16.msra.mxu0 0
        %2822 = vmatprep.subr.bf16.mxu0 0
        %2823 = vmatpush1.bf16.msra.mxu0 0
        %2824 = vmatprep.subr.bf16.mxu0 0
        %2825 = vmatpush1.bf16.msra.mxu0 0
        %2826 = vmatprep.subr.bf16.mxu0 0
        %2827 = vmatpush1.bf16.msra.mxu0 0
        %2828 = vmatprep.subr.bf16.mxu0 0
        %2829 = vmatpush1.bf16.msra.mxu0 0
        %2830 = vmatprep.mubr.bf16.mxu0 0
        %2831 = vmatmul.mubr.bf16.gmra.mrb[0].mxu0 %v2796
        %v2832 = vpop.f32.mrb[0].mxu0
        %v2833 = vadd.f32 0.0, %v2832
        %v2834 = vpop.f32.mrb[0].mxu0
        %v2835 = vadd.f32 0.0, %v2834
        %v2836 = vpop.f32.mrb[0].mxu0
        %v2837 = vpop.f32.mrb[0].mxu0
        %2838 = vdwg.mxu0
        %2839 = vmatprep.subr.bf16.mxu0 %v1942
        %2840 = vmatpush1.bf16.msra.mxu0 %v1941
        %2841 = vmatprep.subr.bf16.mxu0 %v1946
        %2842 = vmatpush1.bf16.msra.mxu0 %v1945
        %2843 = vmatprep.subr.bf16.mxu0 %v1950
        %2844 = vmatpush1.bf16.msra.mxu0 %v1949
        %2845 = vmatprep.subr.bf16.mxu0 %v1954
        %2846 = vmatpush1.bf16.msra.mxu0 %v1953
        %2847 = vmatprep.subr.bf16.mxu0 %v1958
        %2848 = vmatpush1.bf16.msra.mxu0 %v1957
        %2849 = vmatprep.subr.bf16.mxu0 %v1962
        %2850 = vmatpush1.bf16.msra.mxu0 %v1961
        %2851 = vmatprep.subr.bf16.mxu0 %v1966
        %2852 = vmatpush1.bf16.msra.mxu0 %v1965
        %2853 = vmatprep.subr.bf16.mxu0 %v1970
        %2854 = vmatpush1.bf16.msra.mxu0 %v1969
        %2855 = vmatprep.subr.bf16.mxu0 0
        %2856 = vmatpush1.bf16.msra.mxu0 0
        %2857 = vmatprep.subr.bf16.mxu0 0
        %2858 = vmatpush1.bf16.msra.mxu0 0
        %2859 = vmatprep.subr.bf16.mxu0 0
        %2860 = vmatpush1.bf16.msra.mxu0 0
        %2861 = vmatprep.subr.bf16.mxu0 0
        %2862 = vmatpush1.bf16.msra.mxu0 0
        %2863 = vmatprep.subr.bf16.mxu0 0
        %2864 = vmatpush1.bf16.msra.mxu0 0
        %2865 = vmatprep.subr.bf16.mxu0 0
        %2866 = vmatpush1.bf16.msra.mxu0 0
        %2867 = vmatprep.subr.bf16.mxu0 0
        %2868 = vmatpush1.bf16.msra.mxu0 0
        %2869 = vmatprep.subr.bf16.mxu0 0
        %2870 = vmatpush1.bf16.msra.mxu0 0
        %2871 = vmatprep.mubr.bf16.mxu0 0
        %2872 = vmatmul.mubr.bf16.gmra.mrb[0].mxu0 %v2796
        %v2873 = vpop.f32.mrb[0].mxu0
        %v2874 = vadd.f32 0.0, %v2873
        %v2875 = vpop.f32.mrb[0].mxu0
        %v2876 = vadd.f32 0.0, %v2875
        %v2877 = vpop.f32.mrb[0].mxu0
        %v2878 = vpop.f32.mrb[0].mxu0
        %2879 = vdwg.mxu0
        %v2880 = vadd.f32 %v2790, %v2833
        %v2881 = vadd.f32 %v2791, %v2835
        %v2882 = vadd.f32 %v2792, %v2874
        %v2883 = vadd.f32 %v2793, %v2876
        %v2884 = vxor.u32 %v2786, 2147483648
        %v2885 = vmul.f32 %v2884, 1.442695
        %v2886 = vpow.pop %v2885
        %v2887 = vadd.f32 %v2886, 1.0
        %v2888 = vrcp.pop %v2887
        %v2889 = vmul.f32 1.0, %v2888
        %v2890 = vxor.u32 %v2787, 2147483648
        %v2891 = vmul.f32 %v2890, 1.442695
        %v2892 = vpow.pop %v2891
        %v2893 = vadd.f32 %v2892, 1.0
        %v2894 = vrcp.pop %v2893
        %v2895 = vmul.f32 1.0, %v2894
        %v2896 = vtanh.pop %v2788
        %v2897 = vxor.u32 %v2789, 2147483648
        %v2898 = vmul.f32 %v2897, 1.442695
        %v2899 = vpow.pop %v2898
        %v2900 = vadd.f32 %v2899, 1.0
        %v2901 = vrcp.pop %v2900
        %v2902 = vmul.f32 1.0, %v2901
        %v2904 = vrot.slane %v2652, 6
        %v2906 = vmul.f32 %v2895, %v2904
        %v2907 = vmul.f32 %v2889, %v2896
        %v2908 = vadd.f32 %v2906, %v2907
        %v2909 = vtanh.pop %v2908
        %v2910 = vmul.f32 %v2902, %v2909
        %v2911 = vxor.u32 %v2880, 2147483648
        %v2912 = vmul.f32 %v2911, 1.442695
        %v2913 = vpow.pop %v2912
        %v2914 = vadd.f32 %v2913, 1.0
        %v2915 = vrcp.pop %v2914
        %v2916 = vmul.f32 1.0, %v2915
        %v2917 = vxor.u32 %v2881, 2147483648
        %v2918 = vmul.f32 %v2917, 1.442695
        %v2919 = vpow.pop %v2918
        %v2920 = vadd.f32 %v2919, 1.0
        %v2921 = vrcp.pop %v2920
        %v2922 = vmul.f32 1.0, %v2921
        %v2923 = vtanh.pop %v2882
        %v2924 = vxor.u32 %v2883, 2147483648
        %v2925 = vmul.f32 %v2924, 1.442695
        %v2926 = vpow.pop %v2925
        %v2927 = vadd.f32 %v2926, 1.0
        %v2928 = vrcp.pop %v2927
        %v2929 = vmul.f32 1.0, %v2928
        %v2931 = vrot.slane %v2679, 2
        %v2933 = vmul.f32 %v2922, %v2931
        %v2934 = vmul.f32 %v2916, %v2923
        %v2935 = vadd.f32 %v2933, %v2934
        %v2936 = vtanh.pop %v2935
        %v2937 = vmul.f32 %v2929, %v2936
        %2938 = vst [vmem:[#allocation2] sm:$0xc0] %v2910
        %2939 = vst [vmem:[#allocation3 + $0x8] sm:$0x3] %v2937
        %v2940 = vld [vmem:[#allocation4 + $0x40] sm:$0x3]
        %v2941 = vld [vmem:[#allocation4 + $0x48] sm:$0x3]
        %v2942 = vld [vmem:[#allocation4 + $0x50] sm:$0x3]
        %v2943 = vld [vmem:[#allocation4 + $0x58] sm:$0x3]
        %v2944 = vpack.c.bf16 %v2910, %v2910
        %v2946 = vrot.slane %v2944, 3
        %2948 = vmatprep.subr.bf16.mxu0 %v1690
        %2949 = vmatpush1.bf16.msra.mxu0 %v1689
        %2950 = vmatprep.subr.bf16.mxu0 %v1694
        %2951 = vmatpush1.bf16.msra.mxu0 %v1693
        %2952 = vmatprep.subr.bf16.mxu0 %v1698
        %2953 = vmatpush1.bf16.msra.mxu0 %v1697
        %2954 = vmatprep.subr.bf16.mxu0 %v1702
        %2955 = vmatpush1.bf16.msra.mxu0 %v1701
        %2956 = vmatprep.subr.bf16.mxu0 %v1706
        %2957 = vmatpush1.bf16.msra.mxu0 %v1705
        %2958 = vmatprep.subr.bf16.mxu0 %v1710
        %2959 = vmatpush1.bf16.msra.mxu0 %v1709
        %2960 = vmatprep.subr.bf16.mxu0 %v1714
        %2961 = vmatpush1.bf16.msra.mxu0 %v1713
        %2962 = vmatprep.subr.bf16.mxu0 %v1718
        %2963 = vmatpush1.bf16.msra.mxu0 %v1717
        %2964 = vmatprep.subr.bf16.mxu0 0
        %2965 = vmatpush1.bf16.msra.mxu0 0
        %2966 = vmatprep.subr.bf16.mxu0 0
        %2967 = vmatpush1.bf16.msra.mxu0 0
        %2968 = vmatprep.subr.bf16.mxu0 0
        %2969 = vmatpush1.bf16.msra.mxu0 0
        %2970 = vmatprep.subr.bf16.mxu0 0
        %2971 = vmatpush1.bf16.msra.mxu0 0
        %2972 = vmatprep.subr.bf16.mxu0 0
        %2973 = vmatpush1.bf16.msra.mxu0 0
        %2974 = vmatprep.subr.bf16.mxu0 0
        %2975 = vmatpush1.bf16.msra.mxu0 0
        %2976 = vmatprep.subr.bf16.mxu0 0
        %2977 = vmatpush1.bf16.msra.mxu0 0
        %2978 = vmatprep.subr.bf16.mxu0 0
        %2979 = vmatpush1.bf16.msra.mxu0 0
        %2980 = vmatprep.mubr.bf16.mxu0 0
        %2981 = vmatmul.mubr.bf16.gmra.mrb[0].mxu0 %v2946
        %v2982 = vpop.f32.mrb[0].mxu0
        %v2983 = vadd.f32 0.0, %v2982
        %v2984 = vpop.f32.mrb[0].mxu0
        %v2985 = vadd.f32 0.0, %v2984
        %v2986 = vpop.f32.mrb[0].mxu0
        %v2987 = vpop.f32.mrb[0].mxu0
        %2988 = vdwg.mxu0
        %2989 = vmatprep.subr.bf16.mxu0 %v1692
        %2990 = vmatpush1.bf16.msra.mxu0 %v1691
        %2991 = vmatprep.subr.bf16.mxu0 %v1696
        %2992 = vmatpush1.bf16.msra.mxu0 %v1695
        %2993 = vmatprep.subr.bf16.mxu0 %v1700
        %2994 = vmatpush1.bf16.msra.mxu0 %v1699
        %2995 = vmatprep.subr.bf16.mxu0 %v1704
        %2996 = vmatpush1.bf16.msra.mxu0 %v1703
        %2997 = vmatprep.subr.bf16.mxu0 %v1708
        %2998 = vmatpush1.bf16.msra.mxu0 %v1707
        %2999 = vmatprep.subr.bf16.mxu0 %v1712
        %3000 = vmatpush1.bf16.msra.mxu0 %v1711
        %3001 = vmatprep.subr.bf16.mxu0 %v1716
        %3002 = vmatpush1.bf16.msra.mxu0 %v1715
        %3003 = vmatprep.subr.bf16.mxu0 %v1720
        %3004 = vmatpush1.bf16.msra.mxu0 %v1719
        %3005 = vmatprep.subr.bf16.mxu0 0
        %3006 = vmatpush1.bf16.msra.mxu0 0
        %3007 = vmatprep.subr.bf16.mxu0 0
        %3008 = vmatpush1.bf16.msra.mxu0 0
        %3009 = vmatprep.subr.bf16.mxu0 0
        %3010 = vmatpush1.bf16.msra.mxu0 0
        %3011 = vmatprep.subr.bf16.mxu0 0
        %3012 = vmatpush1.bf16.msra.mxu0 0
        %3013 = vmatprep.subr.bf16.mxu0 0
        %3014 = vmatpush1.bf16.msra.mxu0 0
        %3015 = vmatprep.subr.bf16.mxu0 0
        %3016 = vmatpush1.bf16.msra.mxu0 0
        %3017 = vmatprep.subr.bf16.mxu0 0
        %3018 = vmatpush1.bf16.msra.mxu0 0
        %3019 = vmatprep.subr.bf16.mxu0 0
        %3020 = vmatpush1.bf16.msra.mxu0 0
        %3021 = vmatprep.mubr.bf16.mxu0 0
        %3022 = vmatmul.mubr.bf16.gmra.mrb[0].mxu0 %v2946
        %v3023 = vpop.f32.mrb[0].mxu0
        %v3024 = vadd.f32 0.0, %v3023
        %v3025 = vpop.f32.mrb[0].mxu0
        %v3026 = vadd.f32 0.0, %v3025
        %v3027 = vpop.f32.mrb[0].mxu0
        %v3028 = vpop.f32.mrb[0].mxu0
        %3029 = vdwg.mxu0
        %v3030 = vadd.f32 %v2940, %v2983
        %v3031 = vadd.f32 %v2941, %v2985
        %v3032 = vadd.f32 %v2942, %v3024
        %v3033 = vadd.f32 %v2943, %v3026
        %v3034 = vld [vmem:[#allocation4 + $0x20] sm:$0xc0]
        %v3035 = vld [vmem:[#allocation4 + $0x28] sm:$0xc0]
        %v3036 = vld [vmem:[#allocation4 + $0x30] sm:$0xc0]
        %v3037 = vld [vmem:[#allocation4 + $0x38] sm:$0xc0]
        %v3038 = vpack.c.bf16 %v2937, %v2937
        %3039 = vmatprep.subr.bf16.mxu0 %v1940
        %3040 = vmatpush1.bf16.msra.mxu0 %v1939
        %3041 = vmatprep.subr.bf16.mxu0 %v1944
        %3042 = vmatpush1.bf16.msra.mxu0 %v1943
        %3043 = vmatprep.subr.bf16.mxu0 %v1948
        %3044 = vmatpush1.bf16.msra.mxu0 %v1947
        %3045 = vmatprep.subr.bf16.mxu0 %v1952
        %3046 = vmatpush1.bf16.msra.mxu0 %v1951
        %3047 = vmatprep.subr.bf16.mxu0 %v1956
        %3048 = vmatpush1.bf16.msra.mxu0 %v1955
        %3049 = vmatprep.subr.bf16.mxu0 %v1960
        %3050 = vmatpush1.bf16.msra.mxu0 %v1959
        %3051 = vmatprep.subr.bf16.mxu0 %v1964
        %3052 = vmatpush1.bf16.msra.mxu0 %v1963
        %3053 = vmatprep.subr.bf16.mxu0 %v1968
        %3054 = vmatpush1.bf16.msra.mxu0 %v1967
        %3055 = vmatprep.subr.bf16.mxu0 0
        %3056 = vmatpush1.bf16.msra.mxu0 0
        %3057 = vmatprep.subr.bf16.mxu0 0
        %3058 = vmatpush1.bf16.msra.mxu0 0
        %3059 = vmatprep.subr.bf16.mxu0 0
        %3060 = vmatpush1.bf16.msra.mxu0 0
        %3061 = vmatprep.subr.bf16.mxu0 0
        %3062 = vmatpush1.bf16.msra.mxu0 0
        %3063 = vmatprep.subr.bf16.mxu0 0
        %3064 = vmatpush1.bf16.msra.mxu0 0
        %3065 = vmatprep.subr.bf16.mxu0 0
        %3066 = vmatpush1.bf16.msra.mxu0 0
        %3067 = vmatprep.subr.bf16.mxu0 0
        %3068 = vmatpush1.bf16.msra.mxu0 0
        %3069 = vmatprep.subr.bf16.mxu0 0
        %3070 = vmatpush1.bf16.msra.mxu0 0
        %3071 = vmatprep.mubr.bf16.mxu0 0
        %3072 = vmatmul.mubr.bf16.gmra.mrb[0].mxu0 %v3038
        %v3073 = vpop.f32.mrb[0].mxu0
        %v3074 = vadd.f32 0.0, %v3073
        %v3075 = vpop.f32.mrb[0].mxu0
        %v3076 = vadd.f32 0.0, %v3075
        %v3077 = vpop.f32.mrb[0].mxu0
        %v3078 = vpop.f32.mrb[0].mxu0
        %3079 = vdwg.mxu0
        %3080 = vmatprep.subr.bf16.mxu0 %v1942
        %3081 = vmatpush1.bf16.msra.mxu0 %v1941
        %3082 = vmatprep.subr.bf16.mxu0 %v1946
        %3083 = vmatpush1.bf16.msra.mxu0 %v1945
        %3084 = vmatprep.subr.bf16.mxu0 %v1950
        %3085 = vmatpush1.bf16.msra.mxu0 %v1949
        %3086 = vmatprep.subr.bf16.mxu0 %v1954
        %3087 = vmatpush1.bf16.msra.mxu0 %v1953
        %3088 = vmatprep.subr.bf16.mxu0 %v1958
        %3089 = vmatpush1.bf16.msra.mxu0 %v1957
        %3090 = vmatprep.subr.bf16.mxu0 %v1962
        %3091 = vmatpush1.bf16.msra.mxu0 %v1961
        %3092 = vmatprep.subr.bf16.mxu0 %v1966
        %3093 = vmatpush1.bf16.msra.mxu0 %v1965
        %3094 = vmatprep.subr.bf16.mxu0 %v1970
        %3095 = vmatpush1.bf16.msra.mxu0 %v1969
        %3096 = vmatprep.subr.bf16.mxu0 0
        %3097 = vmatpush1.bf16.msra.mxu0 0
        %3098 = vmatprep.subr.bf16.mxu0 0
        %3099 = vmatpush1.bf16.msra.mxu0 0
        %3100 = vmatprep.subr.bf16.mxu0 0
        %3101 = vmatpush1.bf16.msra.mxu0 0
        %3102 = vmatprep.subr.bf16.mxu0 0
        %3103 = vmatpush1.bf16.msra.mxu0 0
        %3104 = vmatprep.subr.bf16.mxu0 0
        %3105 = vmatpush1.bf16.msra.mxu0 0
        %3106 = vmatprep.subr.bf16.mxu0 0
        %3107 = vmatpush1.bf16.msra.mxu0 0
        %3108 = vmatprep.subr.bf16.mxu0 0
        %3109 = vmatpush1.bf16.msra.mxu0 0
        %3110 = vmatprep.subr.bf16.mxu0 0
        %3111 = vmatpush1.bf16.msra.mxu0 0
        %3112 = vmatprep.mubr.bf16.mxu0 0
        %3113 = vmatmul.mubr.bf16.gmra.mrb[0].mxu0 %v3038
        %v3114 = vpop.f32.mrb[0].mxu0
        %v3115 = vadd.f32 0.0, %v3114
        %v3116 = vpop.f32.mrb[0].mxu0
        %v3117 = vadd.f32 0.0, %v3116
        %v3118 = vpop.f32.mrb[0].mxu0
        %v3119 = vpop.f32.mrb[0].mxu0
        %3120 = vdwg.mxu0
        %v3125 = vrot.slane %v3074, 2
        %v3126 = vrot.slane %v3076, 2
        %v3127 = vrot.slane %v3115, 2
        %v3128 = vrot.slane %v3117, 2
        %v3133 = vadd.f32 %v3034, %v3125
        %v3134 = vadd.f32 %v3035, %v3126
        %v3135 = vadd.f32 %v3036, %v3127
        %v3136 = vadd.f32 %v3037, %v3128
        %v3137 = vxor.u32 %v3030, 2147483648
        %v3138 = vmul.f32 %v3137, 1.442695
        %v3139 = vpow.pop %v3138
        %v3140 = vadd.f32 %v3139, 1.0
        %v3141 = vrcp.pop %v3140
        %v3142 = vmul.f32 1.0, %v3141
        %v3143 = vxor.u32 %v3031, 2147483648
        %v3144 = vmul.f32 %v3143, 1.442695
        %v3145 = vpow.pop %v3144
        %v3146 = vadd.f32 %v3145, 1.0
        %v3147 = vrcp.pop %v3146
        %v3148 = vmul.f32 1.0, %v3147
        %v3149 = vtanh.pop %v3032
        %v3150 = vxor.u32 %v3033, 2147483648
        %v3151 = vmul.f32 %v3150, 1.442695
        %v3152 = vpow.pop %v3151
        %v3153 = vadd.f32 %v3152, 1.0
        %v3154 = vrcp.pop %v3153
        %v3155 = vmul.f32 1.0, %v3154
        %v3157 = vrot.slane %v2908, 6
        %v3159 = vmul.f32 %v3148, %v3157
        %v3160 = vmul.f32 %v3142, %v3149
        %v3161 = vadd.f32 %v3159, %v3160
        %v3162 = vtanh.pop %v3161
        %v3163 = vmul.f32 %v3155, %v3162
        %v3164 = vxor.u32 %v3133, 2147483648
        %v3165 = vmul.f32 %v3164, 1.442695
        %v3166 = vpow.pop %v3165
        %v3167 = vadd.f32 %v3166, 1.0
        %v3168 = vrcp.pop %v3167
        %v3169 = vmul.f32 1.0, %v3168
        %v3170 = vxor.u32 %v3134, 2147483648
        %v3171 = vmul.f32 %v3170, 1.442695
        %v3172 = vpow.pop %v3171
        %v3173 = vadd.f32 %v3172, 1.0
        %v3174 = vrcp.pop %v3173
        %v3175 = vmul.f32 1.0, %v3174
        %v3176 = vtanh.pop %v3135
        %v3177 = vxor.u32 %v3136, 2147483648
        %v3178 = vmul.f32 %v3177, 1.442695
        %v3179 = vpow.pop %v3178
        %v3180 = vadd.f32 %v3179, 1.0
        %v3181 = vrcp.pop %v3180
        %v3182 = vmul.f32 1.0, %v3181
        %v3184 = vrot.slane %v2935, 2
        %v3186 = vmul.f32 %v3175, %v3184
        %v3187 = vmul.f32 %v3169, %v3176
        %v3188 = vadd.f32 %v3186, %v3187
        %v3189 = vtanh.pop %v3188
        %v3190 = vmul.f32 %v3182, %v3189
        %3191 = vst [vmem:[#allocation2 + $0x8] sm:$0x3] %v3163
        %3192 = vst [vmem:[#allocation3] sm:$0xc0] %v3190
        %v3193 = vld [vmem:[#allocation4 + $0x40] sm:$0xc]
        %v3194 = vld [vmem:[#allocation4 + $0x48] sm:$0xc]
        %v3195 = vld [vmem:[#allocation4 + $0x50] sm:$0xc]
        %v3196 = vld [vmem:[#allocation4 + $0x58] sm:$0xc]
        %v3197 = vpack.c.bf16 %v3163, %v3163
        %3198 = vmatprep.subr.bf16.mxu0 %v1690
        %3199 = vmatpush1.bf16.msra.mxu0 %v1689
        %3200 = vmatprep.subr.bf16.mxu0 %v1694
        %3201 = vmatpush1.bf16.msra.mxu0 %v1693
        %3202 = vmatprep.subr.bf16.mxu0 %v1698
        %3203 = vmatpush1.bf16.msra.mxu0 %v1697
        %3204 = vmatprep.subr.bf16.mxu0 %v1702
        %3205 = vmatpush1.bf16.msra.mxu0 %v1701
        %3206 = vmatprep.subr.bf16.mxu0 %v1706
        %3207 = vmatpush1.bf16.msra.mxu0 %v1705
        %3208 = vmatprep.subr.bf16.mxu0 %v1710
        %3209 = vmatpush1.bf16.msra.mxu0 %v1709
        %3210 = vmatprep.subr.bf16.mxu0 %v1714
        %3211 = vmatpush1.bf16.msra.mxu0 %v1713
        %3212 = vmatprep.subr.bf16.mxu0 %v1718
        %3213 = vmatpush1.bf16.msra.mxu0 %v1717
        %3214 = vmatprep.subr.bf16.mxu0 0
        %3215 = vmatpush1.bf16.msra.mxu0 0
        %3216 = vmatprep.subr.bf16.mxu0 0
        %3217 = vmatpush1.bf16.msra.mxu0 0
        %3218 = vmatprep.subr.bf16.mxu0 0
        %3219 = vmatpush1.bf16.msra.mxu0 0
        %3220 = vmatprep.subr.bf16.mxu0 0
        %3221 = vmatpush1.bf16.msra.mxu0 0
        %3222 = vmatprep.subr.bf16.mxu0 0
        %3223 = vmatpush1.bf16.msra.mxu0 0
        %3224 = vmatprep.subr.bf16.mxu0 0
        %3225 = vmatpush1.bf16.msra.mxu0 0
        %3226 = vmatprep.subr.bf16.mxu0 0
        %3227 = vmatpush1.bf16.msra.mxu0 0
        %3228 = vmatprep.subr.bf16.mxu0 0
        %3229 = vmatpush1.bf16.msra.mxu0 0
        %3230 = vmatprep.mubr.bf16.mxu0 0
        %3231 = vmatmul.mubr.bf16.gmra.mrb[0].mxu0 %v3197
        %v3232 = vpop.f32.mrb[0].mxu0
        %v3233 = vadd.f32 0.0, %v3232
        %v3234 = vpop.f32.mrb[0].mxu0
        %v3235 = vadd.f32 0.0, %v3234
        %v3236 = vpop.f32.mrb[0].mxu0
        %v3237 = vpop.f32.mrb[0].mxu0
        %3238 = vdwg.mxu0
        %3239 = vmatprep.subr.bf16.mxu0 %v1692
        %3240 = vmatpush1.bf16.msra.mxu0 %v1691
        %3241 = vmatprep.subr.bf16.mxu0 %v1696
        %3242 = vmatpush1.bf16.msra.mxu0 %v1695
        %3243 = vmatprep.subr.bf16.mxu0 %v1700
        %3244 = vmatpush1.bf16.msra.mxu0 %v1699
        %3245 = vmatprep.subr.bf16.mxu0 %v1704
        %3246 = vmatpush1.bf16.msra.mxu0 %v1703
        %3247 = vmatprep.subr.bf16.mxu0 %v1708
        %3248 = vmatpush1.bf16.msra.mxu0 %v1707
        %3249 = vmatprep.subr.bf16.mxu0 %v1712
        %3250 = vmatpush1.bf16.msra.mxu0 %v1711
        %3251 = vmatprep.subr.bf16.mxu0 %v1716
        %3252 = vmatpush1.bf16.msra.mxu0 %v1715
        %3253 = vmatprep.subr.bf16.mxu0 %v1720
        %3254 = vmatpush1.bf16.msra.mxu0 %v1719
        %3255 = vmatprep.subr.bf16.mxu0 0
        %3256 = vmatpush1.bf16.msra.mxu0 0
        %3257 = vmatprep.subr.bf16.mxu0 0
        %3258 = vmatpush1.bf16.msra.mxu0 0
        %3259 = vmatprep.subr.bf16.mxu0 0
        %3260 = vmatpush1.bf16.msra.mxu0 0
        %3261 = vmatprep.subr.bf16.mxu0 0
        %3262 = vmatpush1.bf16.msra.mxu0 0
        %3263 = vmatprep.subr.bf16.mxu0 0
        %3264 = vmatpush1.bf16.msra.mxu0 0
        %3265 = vmatprep.subr.bf16.mxu0 0
        %3266 = vmatpush1.bf16.msra.mxu0 0
        %3267 = vmatprep.subr.bf16.mxu0 0
        %3268 = vmatpush1.bf16.msra.mxu0 0
        %3269 = vmatprep.subr.bf16.mxu0 0
        %3270 = vmatpush1.bf16.msra.mxu0 0
        %3271 = vmatprep.mubr.bf16.mxu0 0
        %3272 = vmatmul.mubr.bf16.gmra.mrb[0].mxu0 %v3197
        %v3273 = vpop.f32.mrb[0].mxu0
        %v3274 = vadd.f32 0.0, %v3273
        %v3275 = vpop.f32.mrb[0].mxu0
        %v3276 = vadd.f32 0.0, %v3275
        %v3277 = vpop.f32.mrb[0].mxu0
        %v3278 = vpop.f32.mrb[0].mxu0
        %3279 = vdwg.mxu0
        %v3284 = vrot.slane %v3233, 6
        %v3285 = vrot.slane %v3235, 6
        %v3286 = vrot.slane %v3274, 6
        %v3287 = vrot.slane %v3276, 6
        %v3292 = vadd.f32 %v3193, %v3284
        %v3293 = vadd.f32 %v3194, %v3285
        %v3294 = vadd.f32 %v3195, %v3286
        %v3295 = vadd.f32 %v3196, %v3287
        %v3296 = vld [vmem:[#allocation4 + $0x20] sm:$0x30]
        %v3297 = vld [vmem:[#allocation4 + $0x28] sm:$0x30]
        %v3298 = vld [vmem:[#allocation4 + $0x30] sm:$0x30]
        %v3299 = vld [vmem:[#allocation4 + $0x38] sm:$0x30]
        %v3300 = vpack.c.bf16 %v3190, %v3190
        %v3302 = vrot.slane %v3300, 3
        %3304 = vmatprep.subr.bf16.mxu0 %v1940
        %3305 = vmatpush1.bf16.msra.mxu0 %v1939
        %3306 = vmatprep.subr.bf16.mxu0 %v1944
        %3307 = vmatpush1.bf16.msra.mxu0 %v1943
        %3308 = vmatprep.subr.bf16.mxu0 %v1948
        %3309 = vmatpush1.bf16.msra.mxu0 %v1947
        %3310 = vmatprep.subr.bf16.mxu0 %v1952
        %3311 = vmatpush1.bf16.msra.mxu0 %v1951
        %3312 = vmatprep.subr.bf16.mxu0 %v1956
        %3313 = vmatpush1.bf16.msra.mxu0 %v1955
        %3314 = vmatprep.subr.bf16.mxu0 %v1960
        %3315 = vmatpush1.bf16.msra.mxu0 %v1959
        %3316 = vmatprep.subr.bf16.mxu0 %v1964
        %3317 = vmatpush1.bf16.msra.mxu0 %v1963
        %3318 = vmatprep.subr.bf16.mxu0 %v1968
        %3319 = vmatpush1.bf16.msra.mxu0 %v1967
        %3320 = vmatprep.subr.bf16.mxu0 0
        %3321 = vmatpush1.bf16.msra.mxu0 0
        %3322 = vmatprep.subr.bf16.mxu0 0
        %3323 = vmatpush1.bf16.msra.mxu0 0
        %3324 = vmatprep.subr.bf16.mxu0 0
        %3325 = vmatpush1.bf16.msra.mxu0 0
        %3326 = vmatprep.subr.bf16.mxu0 0
        %3327 = vmatpush1.bf16.msra.mxu0 0
        %3328 = vmatprep.subr.bf16.mxu0 0
        %3329 = vmatpush1.bf16.msra.mxu0 0
        %3330 = vmatprep.subr.bf16.mxu0 0
        %3331 = vmatpush1.bf16.msra.mxu0 0
        %3332 = vmatprep.subr.bf16.mxu0 0
        %3333 = vmatpush1.bf16.msra.mxu0 0
        %3334 = vmatprep.subr.bf16.mxu0 0
        %3335 = vmatpush1.bf16.msra.mxu0 0
        %3336 = vmatprep.mubr.bf16.mxu0 0
        %3337 = vmatmul.mubr.bf16.gmra.mrb[0].mxu0 %v3302
        %v3338 = vpop.f32.mrb[0].mxu0
        %v3339 = vadd.f32 0.0, %v3338
        %v3340 = vpop.f32.mrb[0].mxu0
        %v3341 = vadd.f32 0.0, %v3340
        %v3342 = vpop.f32.mrb[0].mxu0
        %v3343 = vpop.f32.mrb[0].mxu0
        %3344 = vdwg.mxu0
        %3345 = vmatprep.subr.bf16.mxu0 %v1942
        %3346 = vmatpush1.bf16.msra.mxu0 %v1941
        %3347 = vmatprep.subr.bf16.mxu0 %v1946
        %3348 = vmatpush1.bf16.msra.mxu0 %v1945
        %3349 = vmatprep.subr.bf16.mxu0 %v1950
        %3350 = vmatpush1.bf16.msra.mxu0 %v1949
        %3351 = vmatprep.subr.bf16.mxu0 %v1954
        %3352 = vmatpush1.bf16.msra.mxu0 %v1953
        %3353 = vmatprep.subr.bf16.mxu0 %v1958
        %3354 = vmatpush1.bf16.msra.mxu0 %v1957
        %3355 = vmatprep.subr.bf16.mxu0 %v1962
        %3356 = vmatpush1.bf16.msra.mxu0 %v1961
        %3357 = vmatprep.subr.bf16.mxu0 %v1966
        %3358 = vmatpush1.bf16.msra.mxu0 %v1965
        %3359 = vmatprep.subr.bf16.mxu0 %v1970
        %3360 = vmatpush1.bf16.msra.mxu0 %v1969
        %3361 = vmatprep.subr.bf16.mxu0 0
        %3362 = vmatpush1.bf16.msra.mxu0 0
        %3363 = vmatprep.subr.bf16.mxu0 0
        %3364 = vmatpush1.bf16.msra.mxu0 0
        %3365 = vmatprep.subr.bf16.mxu0 0
        %3366 = vmatpush1.bf16.msra.mxu0 0
        %3367 = vmatprep.subr.bf16.mxu0 0
        %3368 = vmatpush1.bf16.msra.mxu0 0
        %3369 = vmatprep.subr.bf16.mxu0 0
        %3370 = vmatpush1.bf16.msra.mxu0 0
        %3371 = vmatprep.subr.bf16.mxu0 0
        %3372 = vmatpush1.bf16.msra.mxu0 0
        %3373 = vmatprep.subr.bf16.mxu0 0
        %3374 = vmatpush1.bf16.msra.mxu0 0
        %3375 = vmatprep.subr.bf16.mxu0 0
        %3376 = vmatpush1.bf16.msra.mxu0 0
        %3377 = vmatprep.mubr.bf16.mxu0 0
        %3378 = vmatmul.mubr.bf16.gmra.mrb[0].mxu0 %v3302
        %v3379 = vpop.f32.mrb[0].mxu0
        %v3380 = vadd.f32 0.0, %v3379
        %v3381 = vpop.f32.mrb[0].mxu0
        %v3382 = vadd.f32 0.0, %v3381
        %v3383 = vpop.f32.mrb[0].mxu0
        %v3384 = vpop.f32.mrb[0].mxu0
        %3385 = vdwg.mxu0
        %v3390 = vrot.slane %v3339, 4
        %v3391 = vrot.slane %v3341, 4
        %v3392 = vrot.slane %v3380, 4
        %v3393 = vrot.slane %v3382, 4
        %v3398 = vadd.f32 %v3296, %v3390
        %v3399 = vadd.f32 %v3297, %v3391
        %v3400 = vadd.f32 %v3298, %v3392
        %v3401 = vadd.f32 %v3299, %v3393
        %v3402 = vxor.u32 %v3292, 2147483648
        %v3403 = vmul.f32 %v3402, 1.442695
        %v3404 = vpow.pop %v3403
        %v3405 = vadd.f32 %v3404, 1.0
        %v3406 = vrcp.pop %v3405
        %v3407 = vmul.f32 1.0, %v3406
        %v3408 = vxor.u32 %v3293, 2147483648
        %v3409 = vmul.f32 %v3408, 1.442695
        %v3410 = vpow.pop %v3409
        %v3411 = vadd.f32 %v3410, 1.0
        %v3412 = vrcp.pop %v3411
        %v3413 = vmul.f32 1.0, %v3412
        %v3414 = vtanh.pop %v3294
        %v3415 = vxor.u32 %v3295, 2147483648
        %v3416 = vmul.f32 %v3415, 1.442695
        %v3417 = vpow.pop %v3416
        %v3418 = vadd.f32 %v3417, 1.0
        %v3419 = vrcp.pop %v3418
        %v3420 = vmul.f32 1.0, %v3419
        %v3422 = vrot.slane %v3161, 6
        %v3424 = vmul.f32 %v3413, %v3422
        %v3425 = vmul.f32 %v3407, %v3414
        %v3426 = vadd.f32 %v3424, %v3425
        %v3427 = vtanh.pop %v3426
        %v3428 = vmul.f32 %v3420, %v3427
        %v3429 = vxor.u32 %v3398, 2147483648
        %v3430 = vmul.f32 %v3429, 1.442695
        %v3431 = vpow.pop %v3430
        %v3432 = vadd.f32 %v3431, 1.0
        %v3433 = vrcp.pop %v3432
        %v3434 = vmul.f32 1.0, %v3433
        %v3435 = vxor.u32 %v3399, 2147483648
        %v3436 = vmul.f32 %v3435, 1.442695
        %v3437 = vpow.pop %v3436
        %v3438 = vadd.f32 %v3437, 1.0
        %v3439 = vrcp.pop %v3438
        %v3440 = vmul.f32 1.0, %v3439
        %v3441 = vtanh.pop %v3400
        %v3442 = vxor.u32 %v3401, 2147483648
        %v3443 = vmul.f32 %v3442, 1.442695
        %v3444 = vpow.pop %v3443
        %v3445 = vadd.f32 %v3444, 1.0
        %v3446 = vrcp.pop %v3445
        %v3447 = vmul.f32 1.0, %v3446
        %v3449 = vrot.slane %v3188, 2
        %v3451 = vmul.f32 %v3440, %v3449
        %v3452 = vmul.f32 %v3434, %v3441
        %v3453 = vadd.f32 %v3451, %v3452
        %v3454 = vtanh.pop %v3453
        %v3455 = vmul.f32 %v3447, %v3454
        %3456 = vst [vmem:[#allocation2 + $0x8] sm:$0xc] %v3428
        %3457 = vst [vmem:[#allocation3] sm:$0x30] %v3455
        %v3458 = vld [vmem:[#allocation4 + $0x40] sm:$0x30]
        %v3459 = vld [vmem:[#allocation4 + $0x48] sm:$0x30]
        %v3460 = vld [vmem:[#allocation4 + $0x50] sm:$0x30]
        %v3461 = vld [vmem:[#allocation4 + $0x58] sm:$0x30]
        %v3462 = vpack.c.bf16 %v3428, %v3428
        %v3464 = vrot.slane %v3462, 1
        %3466 = vmatprep.subr.bf16.mxu0 %v1690
        %3467 = vmatpush1.bf16.msra.mxu0 %v1689
        %3468 = vmatprep.subr.bf16.mxu0 %v1694
        %3469 = vmatpush1.bf16.msra.mxu0 %v1693
        %3470 = vmatprep.subr.bf16.mxu0 %v1698
        %3471 = vmatpush1.bf16.msra.mxu0 %v1697
        %3472 = vmatprep.subr.bf16.mxu0 %v1702
        %3473 = vmatpush1.bf16.msra.mxu0 %v1701
        %3474 = vmatprep.subr.bf16.mxu0 %v1706
        %3475 = vmatpush1.bf16.msra.mxu0 %v1705
        %3476 = vmatprep.subr.bf16.mxu0 %v1710
        %3477 = vmatpush1.bf16.msra.mxu0 %v1709
        %3478 = vmatprep.subr.bf16.mxu0 %v1714
        %3479 = vmatpush1.bf16.msra.mxu0 %v1713
        %3480 = vmatprep.subr.bf16.mxu0 %v1718
        %3481 = vmatpush1.bf16.msra.mxu0 %v1717
        %3482 = vmatprep.subr.bf16.mxu0 0
        %3483 = vmatpush1.bf16.msra.mxu0 0
        %3484 = vmatprep.subr.bf16.mxu0 0
        %3485 = vmatpush1.bf16.msra.mxu0 0
        %3486 = vmatprep.subr.bf16.mxu0 0
        %3487 = vmatpush1.bf16.msra.mxu0 0
        %3488 = vmatprep.subr.bf16.mxu0 0
        %3489 = vmatpush1.bf16.msra.mxu0 0
        %3490 = vmatprep.subr.bf16.mxu0 0
        %3491 = vmatpush1.bf16.msra.mxu0 0
        %3492 = vmatprep.subr.bf16.mxu0 0
        %3493 = vmatpush1.bf16.msra.mxu0 0
        %3494 = vmatprep.subr.bf16.mxu0 0
        %3495 = vmatpush1.bf16.msra.mxu0 0
        %3496 = vmatprep.subr.bf16.mxu0 0
        %3497 = vmatpush1.bf16.msra.mxu0 0
        %3498 = vmatprep.mubr.bf16.mxu0 0
        %3499 = vmatmul.mubr.bf16.gmra.mrb[0].mxu0 %v3464
        %v3500 = vpop.f32.mrb[0].mxu0
        %v3501 = vadd.f32 0.0, %v3500
        %v3502 = vpop.f32.mrb[0].mxu0
        %v3503 = vadd.f32 0.0, %v3502
        %v3504 = vpop.f32.mrb[0].mxu0
        %v3505 = vpop.f32.mrb[0].mxu0
        %3506 = vdwg.mxu0
        %3507 = vmatprep.subr.bf16.mxu0 %v1692
        %3508 = vmatpush1.bf16.msra.mxu0 %v1691
        %3509 = vmatprep.subr.bf16.mxu0 %v1696
        %3510 = vmatpush1.bf16.msra.mxu0 %v1695
        %3511 = vmatprep.subr.bf16.mxu0 %v1700
        %3512 = vmatpush1.bf16.msra.mxu0 %v1699
        %3513 = vmatprep.subr.bf16.mxu0 %v1704
        %3514 = vmatpush1.bf16.msra.mxu0 %v1703
        %3515 = vmatprep.subr.bf16.mxu0 %v1708
        %3516 = vmatpush1.bf16.msra.mxu0 %v1707
        %3517 = vmatprep.subr.bf16.mxu0 %v1712
        %3518 = vmatpush1.bf16.msra.mxu0 %v1711
        %3519 = vmatprep.subr.bf16.mxu0 %v1716
        %3520 = vmatpush1.bf16.msra.mxu0 %v1715
        %3521 = vmatprep.subr.bf16.mxu0 %v1720
        %3522 = vmatpush1.bf16.msra.mxu0 %v1719
        %3523 = vmatprep.subr.bf16.mxu0 0
        %3524 = vmatpush1.bf16.msra.mxu0 0
        %3525 = vmatprep.subr.bf16.mxu0 0
        %3526 = vmatpush1.bf16.msra.mxu0 0
        %3527 = vmatprep.subr.bf16.mxu0 0
        %3528 = vmatpush1.bf16.msra.mxu0 0
        %3529 = vmatprep.subr.bf16.mxu0 0
        %3530 = vmatpush1.bf16.msra.mxu0 0
        %3531 = vmatprep.subr.bf16.mxu0 0
        %3532 = vmatpush1.bf16.msra.mxu0 0
        %3533 = vmatprep.subr.bf16.mxu0 0
        %3534 = vmatpush1.bf16.msra.mxu0 0
        %3535 = vmatprep.subr.bf16.mxu0 0
        %3536 = vmatpush1.bf16.msra.mxu0 0
        %3537 = vmatprep.subr.bf16.mxu0 0
        %3538 = vmatpush1.bf16.msra.mxu0 0
        %3539 = vmatprep.mubr.bf16.mxu0 0
        %3540 = vmatmul.mubr.bf16.gmra.mrb[0].mxu0 %v3464
        %v3541 = vpop.f32.mrb[0].mxu0
        %v3542 = vadd.f32 0.0, %v3541
        %v3543 = vpop.f32.mrb[0].mxu0
        %v3544 = vadd.f32 0.0, %v3543
        %v3545 = vpop.f32.mrb[0].mxu0
        %v3546 = vpop.f32.mrb[0].mxu0
        %3547 = vdwg.mxu0
        %v3552 = vrot.slane %v3501, 4
        %v3553 = vrot.slane %v3503, 4
        %v3554 = vrot.slane %v3542, 4
        %v3555 = vrot.slane %v3544, 4
        %v3560 = vadd.f32 %v3458, %v3552
        %v3561 = vadd.f32 %v3459, %v3553
        %v3562 = vadd.f32 %v3460, %v3554
        %v3563 = vadd.f32 %v3461, %v3555
        %v3564 = vld [vmem:[#allocation4 + $0x20] sm:$0xc]
        %v3565 = vld [vmem:[#allocation4 + $0x28] sm:$0xc]
        %v3566 = vld [vmem:[#allocation4 + $0x30] sm:$0xc]
        %v3567 = vld [vmem:[#allocation4 + $0x38] sm:$0xc]
        %v3568 = vpack.c.bf16 %v3455, %v3455
        %v3570 = vrot.slane %v3568, 2
        %3572 = vmatprep.subr.bf16.mxu0 %v1940
        %3573 = vmatpush1.bf16.msra.mxu0 %v1939
        %3574 = vmatprep.subr.bf16.mxu0 %v1944
        %3575 = vmatpush1.bf16.msra.mxu0 %v1943
        %3576 = vmatprep.subr.bf16.mxu0 %v1948
        %3577 = vmatpush1.bf16.msra.mxu0 %v1947
        %3578 = vmatprep.subr.bf16.mxu0 %v1952
        %3579 = vmatpush1.bf16.msra.mxu0 %v1951
        %3580 = vmatprep.subr.bf16.mxu0 %v1956
        %3581 = vmatpush1.bf16.msra.mxu0 %v1955
        %3582 = vmatprep.subr.bf16.mxu0 %v1960
        %3583 = vmatpush1.bf16.msra.mxu0 %v1959
        %3584 = vmatprep.subr.bf16.mxu0 %v1964
        %3585 = vmatpush1.bf16.msra.mxu0 %v1963
        %3586 = vmatprep.subr.bf16.mxu0 %v1968
        %3587 = vmatpush1.bf16.msra.mxu0 %v1967
        %3588 = vmatprep.subr.bf16.mxu0 0
        %3589 = vmatpush1.bf16.msra.mxu0 0
        %3590 = vmatprep.subr.bf16.mxu0 0
        %3591 = vmatpush1.bf16.msra.mxu0 0
        %3592 = vmatprep.subr.bf16.mxu0 0
        %3593 = vmatpush1.bf16.msra.mxu0 0
        %3594 = vmatprep.subr.bf16.mxu0 0
        %3595 = vmatpush1.bf16.msra.mxu0 0
        %3596 = vmatprep.subr.bf16.mxu0 0
        %3597 = vmatpush1.bf16.msra.mxu0 0
        %3598 = vmatprep.subr.bf16.mxu0 0
        %3599 = vmatpush1.bf16.msra.mxu0 0
        %3600 = vmatprep.subr.bf16.mxu0 0
        %3601 = vmatpush1.bf16.msra.mxu0 0
        %3602 = vmatprep.subr.bf16.mxu0 0
        %3603 = vmatpush1.bf16.msra.mxu0 0
        %3604 = vmatprep.mubr.bf16.mxu0 0
        %3605 = vmatmul.mubr.bf16.gmra.mrb[0].mxu0 %v3570
        %v3606 = vpop.f32.mrb[0].mxu0
        %v3607 = vadd.f32 0.0, %v3606
        %v3608 = vpop.f32.mrb[0].mxu0
        %v3609 = vadd.f32 0.0, %v3608
        %v3610 = vpop.f32.mrb[0].mxu0
        %v3611 = vpop.f32.mrb[0].mxu0
        %3612 = vdwg.mxu0
        %3613 = vmatprep.subr.bf16.mxu0 %v1942
        %3614 = vmatpush1.bf16.msra.mxu0 %v1941
        %3615 = vmatprep.subr.bf16.mxu0 %v1946
        %3616 = vmatpush1.bf16.msra.mxu0 %v1945
        %3617 = vmatprep.subr.bf16.mxu0 %v1950
        %3618 = vmatpush1.bf16.msra.mxu0 %v1949
        %3619 = vmatprep.subr.bf16.mxu0 %v1954
        %3620 = vmatpush1.bf16.msra.mxu0 %v1953
        %3621 = vmatprep.subr.bf16.mxu0 %v1958
        %3622 = vmatpush1.bf16.msra.mxu0 %v1957
        %3623 = vmatprep.subr.bf16.mxu0 %v1962
        %3624 = vmatpush1.bf16.msra.mxu0 %v1961
        %3625 = vmatprep.subr.bf16.mxu0 %v1966
        %3626 = vmatpush1.bf16.msra.mxu0 %v1965
        %3627 = vmatprep.subr.bf16.mxu0 %v1970
        %3628 = vmatpush1.bf16.msra.mxu0 %v1969
        %3629 = vmatprep.subr.bf16.mxu0 0
        %3630 = vmatpush1.bf16.msra.mxu0 0
        %3631 = vmatprep.subr.bf16.mxu0 0
        %3632 = vmatpush1.bf16.msra.mxu0 0
        %3633 = vmatprep.subr.bf16.mxu0 0
        %3634 = vmatpush1.bf16.msra.mxu0 0
        %3635 = vmatprep.subr.bf16.mxu0 0
        %3636 = vmatpush1.bf16.msra.mxu0 0
        %3637 = vmatprep.subr.bf16.mxu0 0
        %3638 = vmatpush1.bf16.msra.mxu0 0
        %3639 = vmatprep.subr.bf16.mxu0 0
        %3640 = vmatpush1.bf16.msra.mxu0 0
        %3641 = vmatprep.subr.bf16.mxu0 0
        %3642 = vmatpush1.bf16.msra.mxu0 0
        %3643 = vmatprep.subr.bf16.mxu0 0
        %3644 = vmatpush1.bf16.msra.mxu0 0
        %3645 = vmatprep.mubr.bf16.mxu0 0
        %3646 = vmatmul.mubr.bf16.gmra.mrb[0].mxu0 %v3570
        %v3647 = vpop.f32.mrb[0].mxu0
        %v3648 = vadd.f32 0.0, %v3647
        %v3649 = vpop.f32.mrb[0].mxu0
        %v3650 = vadd.f32 0.0, %v3649
        %v3651 = vpop.f32.mrb[0].mxu0
        %v3652 = vpop.f32.mrb[0].mxu0
        %3653 = vdwg.mxu0
        %v3658 = vrot.slane %v3607, 6
        %v3659 = vrot.slane %v3609, 6
        %v3660 = vrot.slane %v3648, 6
        %v3661 = vrot.slane %v3650, 6
        %v3666 = vadd.f32 %v3564, %v3658
        %v3667 = vadd.f32 %v3565, %v3659
        %v3668 = vadd.f32 %v3566, %v3660
        %v3669 = vadd.f32 %v3567, %v3661
        %v3670 = vxor.u32 %v3560, 2147483648
        %v3671 = vmul.f32 %v3670, 1.442695
        %v3672 = vpow.pop %v3671
        %v3673 = vadd.f32 %v3672, 1.0
        %v3674 = vrcp.pop %v3673
        %v3675 = vmul.f32 1.0, %v3674
        %v3676 = vxor.u32 %v3561, 2147483648
        %v3677 = vmul.f32 %v3676, 1.442695
        %v3678 = vpow.pop %v3677
        %v3679 = vadd.f32 %v3678, 1.0
        %v3680 = vrcp.pop %v3679
        %v3681 = vmul.f32 1.0, %v3680
        %v3682 = vtanh.pop %v3562
        %v3683 = vxor.u32 %v3563, 2147483648
        %v3684 = vmul.f32 %v3683, 1.442695
        %v3685 = vpow.pop %v3684
        %v3686 = vadd.f32 %v3685, 1.0
        %v3687 = vrcp.pop %v3686
        %v3688 = vmul.f32 1.0, %v3687
        %v3690 = vrot.slane %v3426, 6
        %v3692 = vmul.f32 %v3681, %v3690
        %v3693 = vmul.f32 %v3675, %v3682
        %v3694 = vadd.f32 %v3692, %v3693
        %v3695 = vtanh.pop %v3694
        %v3696 = vmul.f32 %v3688, %v3695
        %v3697 = vxor.u32 %v3666, 2147483648
        %v3698 = vmul.f32 %v3697, 1.442695
        %v3699 = vpow.pop %v3698
        %v3700 = vadd.f32 %v3699, 1.0
        %v3701 = vrcp.pop %v3700
        %v3702 = vmul.f32 1.0, %v3701
        %v3703 = vxor.u32 %v3667, 2147483648
        %v3704 = vmul.f32 %v3703, 1.442695
        %v3705 = vpow.pop %v3704
        %v3706 = vadd.f32 %v3705, 1.0
        %v3707 = vrcp.pop %v3706
        %v3708 = vmul.f32 1.0, %v3707
        %v3709 = vtanh.pop %v3668
        %v3710 = vxor.u32 %v3669, 2147483648
        %v3711 = vmul.f32 %v3710, 1.442695
        %v3712 = vpow.pop %v3711
        %v3713 = vadd.f32 %v3712, 1.0
        %v3714 = vrcp.pop %v3713
        %v3715 = vmul.f32 1.0, %v3714
        %v3717 = vrot.slane %v3453, 2
        %v3719 = vmul.f32 %v3708, %v3717
        %v3720 = vmul.f32 %v3702, %v3709
        %v3721 = vadd.f32 %v3719, %v3720
        %v3722 = vtanh.pop %v3721
        %v3723 = vmul.f32 %v3715, %v3722
        %3724 = vst [vmem:[#allocation2 + $0x8] sm:$0x30] %v3696
        %3725 = vst [vmem:[#allocation3] sm:$0xc] %v3723
        %v3726 = vld [vmem:[#allocation4 + $0x40] sm:$0xc0]
        %v3727 = vld [vmem:[#allocation4 + $0x48] sm:$0xc0]
        %v3728 = vld [vmem:[#allocation4 + $0x50] sm:$0xc0]
        %v3729 = vld [vmem:[#allocation4 + $0x58] sm:$0xc0]
        %v3730 = vpack.c.bf16 %v3696, %v3696
        %v3732 = vrot.slane %v3730, 2
        %3734 = vmatprep.subr.bf16.mxu0 %v1690
        %3735 = vmatpush1.bf16.msra.mxu0 %v1689
        %3736 = vmatprep.subr.bf16.mxu0 %v1694
        %3737 = vmatpush1.bf16.msra.mxu0 %v1693
        %3738 = vmatprep.subr.bf16.mxu0 %v1698
        %3739 = vmatpush1.bf16.msra.mxu0 %v1697
        %3740 = vmatprep.subr.bf16.mxu0 %v1702
        %3741 = vmatpush1.bf16.msra.mxu0 %v1701
        %3742 = vmatprep.subr.bf16.mxu0 %v1706
        %3743 = vmatpush1.bf16.msra.mxu0 %v1705
        %3744 = vmatprep.subr.bf16.mxu0 %v1710
        %3745 = vmatpush1.bf16.msra.mxu0 %v1709
        %3746 = vmatprep.subr.bf16.mxu0 %v1714
        %3747 = vmatpush1.bf16.msra.mxu0 %v1713
        %3748 = vmatprep.subr.bf16.mxu0 %v1718
        %3749 = vmatpush1.bf16.msra.mxu0 %v1717
        %3750 = vmatprep.subr.bf16.mxu0 0
        %3751 = vmatpush1.bf16.msra.mxu0 0
        %3752 = vmatprep.subr.bf16.mxu0 0
        %3753 = vmatpush1.bf16.msra.mxu0 0
        %3754 = vmatprep.subr.bf16.mxu0 0
        %3755 = vmatpush1.bf16.msra.mxu0 0
        %3756 = vmatprep.subr.bf16.mxu0 0
        %3757 = vmatpush1.bf16.msra.mxu0 0
        %3758 = vmatprep.subr.bf16.mxu0 0
        %3759 = vmatpush1.bf16.msra.mxu0 0
        %3760 = vmatprep.subr.bf16.mxu0 0
        %3761 = vmatpush1.bf16.msra.mxu0 0
        %3762 = vmatprep.subr.bf16.mxu0 0
        %3763 = vmatpush1.bf16.msra.mxu0 0
        %3764 = vmatprep.subr.bf16.mxu0 0
        %3765 = vmatpush1.bf16.msra.mxu0 0
        %3766 = vmatprep.mubr.bf16.mxu0 0
        %3767 = vmatmul.mubr.bf16.gmra.mrb[0].mxu0 %v3732
        %v3768 = vpop.f32.mrb[0].mxu0
        %v3769 = vadd.f32 0.0, %v3768
        %v3770 = vpop.f32.mrb[0].mxu0
        %v3771 = vadd.f32 0.0, %v3770
        %v3772 = vpop.f32.mrb[0].mxu0
        %v3773 = vpop.f32.mrb[0].mxu0
        %3774 = vdwg.mxu0
        %3775 = vmatprep.subr.bf16.mxu0 %v1692
        %3776 = vmatpush1.bf16.msra.mxu0 %v1691
        %3777 = vmatprep.subr.bf16.mxu0 %v1696
        %3778 = vmatpush1.bf16.msra.mxu0 %v1695
        %3779 = vmatprep.subr.bf16.mxu0 %v1700
        %3780 = vmatpush1.bf16.msra.mxu0 %v1699
        %3781 = vmatprep.subr.bf16.mxu0 %v1704
        %3782 = vmatpush1.bf16.msra.mxu0 %v1703
        %3783 = vmatprep.subr.bf16.mxu0 %v1708
        %3784 = vmatpush1.bf16.msra.mxu0 %v1707
        %3785 = vmatprep.subr.bf16.mxu0 %v1712
        %3786 = vmatpush1.bf16.msra.mxu0 %v1711
        %3787 = vmatprep.subr.bf16.mxu0 %v1716
        %3788 = vmatpush1.bf16.msra.mxu0 %v1715
        %3789 = vmatprep.subr.bf16.mxu0 %v1720
        %3790 = vmatpush1.bf16.msra.mxu0 %v1719
        %3791 = vmatprep.subr.bf16.mxu0 0
        %3792 = vmatpush1.bf16.msra.mxu0 0
        %3793 = vmatprep.subr.bf16.mxu0 0
        %3794 = vmatpush1.bf16.msra.mxu0 0
        %3795 = vmatprep.subr.bf16.mxu0 0
        %3796 = vmatpush1.bf16.msra.mxu0 0
        %3797 = vmatprep.subr.bf16.mxu0 0
        %3798 = vmatpush1.bf16.msra.mxu0 0
        %3799 = vmatprep.subr.bf16.mxu0 0
        %3800 = vmatpush1.bf16.msra.mxu0 0
        %3801 = vmatprep.subr.bf16.mxu0 0
        %3802 = vmatpush1.bf16.msra.mxu0 0
        %3803 = vmatprep.subr.bf16.mxu0 0
        %3804 = vmatpush1.bf16.msra.mxu0 0
        %3805 = vmatprep.subr.bf16.mxu0 0
        %3806 = vmatpush1.bf16.msra.mxu0 0
        %3807 = vmatprep.mubr.bf16.mxu0 0
        %3808 = vmatmul.mubr.bf16.gmra.mrb[0].mxu0 %v3732
        %v3809 = vpop.f32.mrb[0].mxu0
        %v3810 = vadd.f32 0.0, %v3809
        %v3811 = vpop.f32.mrb[0].mxu0
        %v3812 = vadd.f32 0.0, %v3811
        %v3813 = vpop.f32.mrb[0].mxu0
        %v3814 = vpop.f32.mrb[0].mxu0
        %3815 = vdwg.mxu0
        %v3820 = vrot.slane %v3769, 2
        %v3821 = vrot.slane %v3771, 2
        %v3822 = vrot.slane %v3810, 2
        %v3823 = vrot.slane %v3812, 2
        %v3828 = vadd.f32 %v3726, %v3820
        %v3829 = vadd.f32 %v3727, %v3821
        %v3830 = vadd.f32 %v3728, %v3822
        %v3831 = vadd.f32 %v3729, %v3823
        %v3832 = vld [vmem:[#allocation4 + $0x20] sm:$0x3]
        %v3833 = vld [vmem:[#allocation4 + $0x28] sm:$0x3]
        %v3834 = vld [vmem:[#allocation4 + $0x30] sm:$0x3]
        %v3835 = vld [vmem:[#allocation4 + $0x38] sm:$0x3]
        %v3836 = vpack.c.bf16 %v3723, %v3723
        %v3838 = vrot.slane %v3836, 1
        %3840 = vmatprep.subr.bf16.mxu0 %v1940
        %3841 = vmatpush1.bf16.msra.mxu0 %v1939
        %3842 = vmatprep.subr.bf16.mxu0 %v1944
        %3843 = vmatpush1.bf16.msra.mxu0 %v1943
        %3844 = vmatprep.subr.bf16.mxu0 %v1948
        %3845 = vmatpush1.bf16.msra.mxu0 %v1947
        %3846 = vmatprep.subr.bf16.mxu0 %v1952
        %3847 = vmatpush1.bf16.msra.mxu0 %v1951
        %3848 = vmatprep.subr.bf16.mxu0 %v1956
        %3849 = vmatpush1.bf16.msra.mxu0 %v1955
        %3850 = vmatprep.subr.bf16.mxu0 %v1960
        %3851 = vmatpush1.bf16.msra.mxu0 %v1959
        %3852 = vmatprep.subr.bf16.mxu0 %v1964
        %3853 = vmatpush1.bf16.msra.mxu0 %v1963
        %3854 = vmatprep.subr.bf16.mxu0 %v1968
        %3855 = vmatpush1.bf16.msra.mxu0 %v1967
        %3856 = vmatprep.subr.bf16.mxu0 0
        %3857 = vmatpush1.bf16.msra.mxu0 0
        %3858 = vmatprep.subr.bf16.mxu0 0
        %3859 = vmatpush1.bf16.msra.mxu0 0
        %3860 = vmatprep.subr.bf16.mxu0 0
        %3861 = vmatpush1.bf16.msra.mxu0 0
        %3862 = vmatprep.subr.bf16.mxu0 0
        %3863 = vmatpush1.bf16.msra.mxu0 0
        %3864 = vmatprep.subr.bf16.mxu0 0
        %3865 = vmatpush1.bf16.msra.mxu0 0
        %3866 = vmatprep.subr.bf16.mxu0 0
        %3867 = vmatpush1.bf16.msra.mxu0 0
        %3868 = vmatprep.subr.bf16.mxu0 0
        %3869 = vmatpush1.bf16.msra.mxu0 0
        %3870 = vmatprep.subr.bf16.mxu0 0
        %3871 = vmatpush1.bf16.msra.mxu0 0
        %3872 = vmatprep.mubr.bf16.mxu0 0
        %3873 = vmatmul.mubr.bf16.gmra.mrb[0].mxu0 %v3838
        %v3874 = vpop.f32.mrb[0].mxu0
        %v3875 = vadd.f32 0.0, %v3874
        %v3876 = vpop.f32.mrb[0].mxu0
        %v3877 = vadd.f32 0.0, %v3876
        %v3878 = vpop.f32.mrb[0].mxu0
        %v3879 = vpop.f32.mrb[0].mxu0
        %3880 = vdwg.mxu0
        %3881 = vmatprep.subr.bf16.mxu0 %v1942
        %3882 = vmatpush1.bf16.msra.mxu0 %v1941
        %3883 = vmatprep.subr.bf16.mxu0 %v1946
        %3884 = vmatpush1.bf16.msra.mxu0 %v1945
        %3885 = vmatprep.subr.bf16.mxu0 %v1950
        %3886 = vmatpush1.bf16.msra.mxu0 %v1949
        %3887 = vmatprep.subr.bf16.mxu0 %v1954
        %3888 = vmatpush1.bf16.msra.mxu0 %v1953
        %3889 = vmatprep.subr.bf16.mxu0 %v1958
        %3890 = vmatpush1.bf16.msra.mxu0 %v1957
        %3891 = vmatprep.subr.bf16.mxu0 %v1962
        %3892 = vmatpush1.bf16.msra.mxu0 %v1961
        %3893 = vmatprep.subr.bf16.mxu0 %v1966
        %3894 = vmatpush1.bf16.msra.mxu0 %v1965
        %3895 = vmatprep.subr.bf16.mxu0 %v1970
        %3896 = vmatpush1.bf16.msra.mxu0 %v1969
        %3897 = vmatprep.subr.bf16.mxu0 0
        %3898 = vmatpush1.bf16.msra.mxu0 0
        %3899 = vmatprep.subr.bf16.mxu0 0
        %3900 = vmatpush1.bf16.msra.mxu0 0
        %3901 = vmatprep.subr.bf16.mxu0 0
        %3902 = vmatpush1.bf16.msra.mxu0 0
        %3903 = vmatprep.subr.bf16.mxu0 0
        %3904 = vmatpush1.bf16.msra.mxu0 0
        %3905 = vmatprep.subr.bf16.mxu0 0
        %3906 = vmatpush1.bf16.msra.mxu0 0
        %3907 = vmatprep.subr.bf16.mxu0 0
        %3908 = vmatpush1.bf16.msra.mxu0 0
        %3909 = vmatprep.subr.bf16.mxu0 0
        %3910 = vmatpush1.bf16.msra.mxu0 0
        %3911 = vmatprep.subr.bf16.mxu0 0
        %3912 = vmatpush1.bf16.msra.mxu0 0
        %3913 = vmatprep.mubr.bf16.mxu0 0
        %3914 = vmatmul.mubr.bf16.gmra.mrb[0].mxu0 %v3838
        %v3915 = vpop.f32.mrb[0].mxu0
        %v3916 = vadd.f32 0.0, %v3915
        %v3917 = vpop.f32.mrb[0].mxu0
        %v3918 = vadd.f32 0.0, %v3917
        %v3919 = vpop.f32.mrb[0].mxu0
        %v3920 = vpop.f32.mrb[0].mxu0
        %3921 = vdwg.mxu0
        %v3922 = vadd.f32 %v3832, %v3875
        %v3923 = vadd.f32 %v3833, %v3877
        %v3924 = vadd.f32 %v3834, %v3916
        %v3925 = vadd.f32 %v3835, %v3918
        %v3926 = vxor.u32 %v3828, 2147483648
        %v3927 = vmul.f32 %v3926, 1.442695
        %v3928 = vpow.pop %v3927
        %v3929 = vadd.f32 %v3928, 1.0
        %v3930 = vrcp.pop %v3929
        %v3931 = vmul.f32 1.0, %v3930
        %v3932 = vxor.u32 %v3829, 2147483648
        %v3933 = vmul.f32 %v3932, 1.442695
        %v3934 = vpow.pop %v3933
        %v3935 = vadd.f32 %v3934, 1.0
        %v3936 = vrcp.pop %v3935
        %v3937 = vmul.f32 1.0, %v3936
        %v3938 = vtanh.pop %v3830
        %v3939 = vxor.u32 %v3831, 2147483648
        %v3940 = vmul.f32 %v3939, 1.442695
        %v3941 = vpow.pop %v3940
        %v3942 = vadd.f32 %v3941, 1.0
        %v3943 = vrcp.pop %v3942
        %v3944 = vmul.f32 1.0, %v3943
        %v3946 = vrot.slane %v3694, 6
        %v3948 = vmul.f32 %v3937, %v3946
        %v3949 = vmul.f32 %v3931, %v3938
        %v3950 = vadd.f32 %v3948, %v3949
        %v3951 = vtanh.pop %v3950
        %v3952 = vmul.f32 %v3944, %v3951
        %v3953 = vxor.u32 %v3922, 2147483648
        %v3954 = vmul.f32 %v3953, 1.442695
        %v3955 = vpow.pop %v3954
        %v3956 = vadd.f32 %v3955, 1.0
        %v3957 = vrcp.pop %v3956
        %v3958 = vmul.f32 1.0, %v3957
        %v3959 = vxor.u32 %v3923, 2147483648
        %v3960 = vmul.f32 %v3959, 1.442695
        %v3961 = vpow.pop %v3960
        %v3962 = vadd.f32 %v3961, 1.0
        %v3963 = vrcp.pop %v3962
        %v3964 = vmul.f32 1.0, %v3963
        %v3965 = vtanh.pop %v3924
        %v3966 = vxor.u32 %v3925, 2147483648
        %v3967 = vmul.f32 %v3966, 1.442695
        %v3968 = vpow.pop %v3967
        %v3969 = vadd.f32 %v3968, 1.0
        %v3970 = vrcp.pop %v3969
        %v3971 = vmul.f32 1.0, %v3970
        %v3973 = vrot.slane %v3721, 2
        %v3975 = vmul.f32 %v3964, %v3973
        %v3976 = vmul.f32 %v3958, %v3965
        %v3977 = vadd.f32 %v3975, %v3976
        %v3978 = vtanh.pop %v3977
        %v3979 = vmul.f32 %v3971, %v3978
        %3980 = vst [vmem:[#allocation2 + $0x8] sm:$0xc0] %v3952
        %3981 = vst [vmem:[#allocation3] sm:$0x3] %v3979
        %s3982 = smul.u32 %s24, 2
        %s3983 = smul.u32 %s3982, 2
        %s3984 = scalar_lea.vmem [#allocation5], %s3983
        %3985 = vst [vmem:[%s3984 - $0x6] sm:$0xc0] %v3952
        %s3986 = sadd.s32 %s3982, 1
        %s3987 = smul.u32 %s3986, 2
        %s3988 = scalar_lea.vmem [#allocation5], %s3987
        %3989 = vst [vmem:[%s3988] sm:$0x3] %v3979
        %p3990 = scmp.eq.s32.totalorder %s24, 5
        // Predicated region
        $region61: #{lstm_model_forward.1} parent=39 // pred_check
          %p3991 = pneg %p3990
        $region62: #{lstm_model_forward.1} parent=39 // pred_check_branch
          %3993 = sbr.rel (%p3991) target = $region64
        $region63: #{lstm_model_forward.1} parent=39 // pred_region
          %v3994 = vld [vmem:[#allocation5] sm:$0x3]
          %v3995 = vpack.c.bf16 %v3994, %v3994
          %v3996 = vld [vmem:[%s4] sm:$0xf]
          %v3997 = vld [vmem:[%s4 + $0x4] sm:$0xf]
          %v3998 = vld [vmem:[%s4 + $0x8] sm:$0xf]
          %v3999 = vld [vmem:[%s4 + $0xc] sm:$0xf]
          %v4000 = vld [vmem:[%s4 + $0x10] sm:$0xf]
          %v4001 = vld [vmem:[%s4 + $0x14] sm:$0xf]
          %v4002 = vld [vmem:[%s4 + $0x18] sm:$0xf]
          %v4003 = vld [vmem:[%s4 + $0x1c] sm:$0xf]
          %v4004 = vld [vmem:[%s4 + $0x20] sm:$0xf]
          %v4005 = vld [vmem:[%s4 + $0x24] sm:$0xf]
          %v4006 = vld [vmem:[%s4 + $0x28] sm:$0xf]
          %v4007 = vld [vmem:[%s4 + $0x2c] sm:$0xf]
          %v4008 = vld [vmem:[%s4 + $0x30] sm:$0xf]
          %v4009 = vld [vmem:[%s4 + $0x34] sm:$0xf]
          %v4010 = vld [vmem:[%s4 + $0x38] sm:$0xf]
          %v4011 = vld [vmem:[%s4 + $0x3c] sm:$0xf]
          %s4012 = scalar_lea.vmem [#allocation5], 2
          %v4013 = vld [vmem:[%s4012] sm:$0x3]
          %v4014 = vpack.c.bf16 %v4013, %v4013
          %s4015 = scalar_lea.vmem %s4, 64
          %v4016 = vld [vmem:[%s4015] sm:$0xf]
          %v4017 = vld [vmem:[%s4015 + $0x4] sm:$0xf]
          %v4018 = vld [vmem:[%s4015 + $0x8] sm:$0xf]
          %v4019 = vld [vmem:[%s4015 + $0xc] sm:$0xf]
          %v4020 = vld [vmem:[%s4015 + $0x10] sm:$0xf]
          %v4021 = vld [vmem:[%s4015 + $0x14] sm:$0xf]
          %v4022 = vld [vmem:[%s4015 + $0x18] sm:$0xf]
          %v4023 = vld [vmem:[%s4015 + $0x1c] sm:$0xf]
          %v4024 = vld [vmem:[%s4015 + $0x20] sm:$0xf]
          %v4025 = vld [vmem:[%s4015 + $0x24] sm:$0xf]
          %v4026 = vld [vmem:[%s4015 + $0x28] sm:$0xf]
          %v4027 = vld [vmem:[%s4015 + $0x2c] sm:$0xf]
          %v4028 = vld [vmem:[%s4015 + $0x30] sm:$0xf]
          %v4029 = vld [vmem:[%s4015 + $0x34] sm:$0xf]
          %v4030 = vld [vmem:[%s4015 + $0x38] sm:$0xf]
          %v4031 = vld [vmem:[%s4015 + $0x3c] sm:$0xf]
          %v4048 = vunpack.c.l.b16 %v4016
          %v4049 = vunpack.c.l.b16 %v4017
          %v4050 = vunpack.c.l.b16 %v4018
          %v4051 = vunpack.c.l.b16 %v4019
          %v4052 = vunpack.c.l.b16 %v4020
          %v4053 = vunpack.c.l.b16 %v4021
          %v4054 = vunpack.c.l.b16 %v4022
          %v4055 = vunpack.c.l.b16 %v4023
          %v4056 = vunpack.c.l.b16 %v4024
          %v4057 = vunpack.c.l.b16 %v4025
          %v4058 = vunpack.c.l.b16 %v4026
          %v4059 = vunpack.c.l.b16 %v4027
          %v4060 = vunpack.c.l.b16 %v4028
          %v4061 = vunpack.c.l.b16 %v4029
          %v4062 = vunpack.c.l.b16 %v4030
          %v4063 = vunpack.c.l.b16 %v4031
          %v4064 = vpack.c.b16 %v4049, %v4048
          %v4065 = vpack.c.b16 %v4051, %v4050
          %v4066 = vpack.c.b16 %v4053, %v4052
          %v4067 = vpack.c.b16 %v4055, %v4054
          %v4068 = vpack.c.b16 %v4057, %v4056
          %v4069 = vpack.c.b16 %v4059, %v4058
          %v4070 = vpack.c.b16 %v4061, %v4060
          %v4071 = vpack.c.b16 %v4063, %v4062
          %4080 = vmatprep.subr.bf16.mxu0 0
          %4081 = vmatpush1.bf16.msra.mxu0 %v4064
          %4082 = vmatprep.subr.bf16.mxu0 0
          %4083 = vmatpush1.bf16.msra.mxu0 %v4065
          %4084 = vmatprep.subr.bf16.mxu0 0
          %4085 = vmatpush1.bf16.msra.mxu0 %v4066
          %4086 = vmatprep.subr.bf16.mxu0 0
          %4087 = vmatpush1.bf16.msra.mxu0 %v4067
          %4088 = vmatprep.subr.bf16.mxu0 0
          %4089 = vmatpush1.bf16.msra.mxu0 %v4068
          %4090 = vmatprep.subr.bf16.mxu0 0
          %4091 = vmatpush1.bf16.msra.mxu0 %v4069
          %4092 = vmatprep.subr.bf16.mxu0 0
          %4093 = vmatpush1.bf16.msra.mxu0 %v4070
          %4094 = vmatprep.subr.bf16.mxu0 0
          %4095 = vmatpush1.bf16.msra.mxu0 %v4071
          %4096 = vmatprep.subr.bf16.mxu0 0
          %4097 = vmatpush1.bf16.msra.mxu0 0
          %4098 = vmatprep.subr.bf16.mxu0 0
          %4099 = vmatpush1.bf16.msra.mxu0 0
          %4100 = vmatprep.subr.bf16.mxu0 0
          %4101 = vmatpush1.bf16.msra.mxu0 0
          %4102 = vmatprep.subr.bf16.mxu0 0
          %4103 = vmatpush1.bf16.msra.mxu0 0
          %4104 = vmatprep.subr.bf16.mxu0 0
          %4105 = vmatpush1.bf16.msra.mxu0 0
          %4106 = vmatprep.subr.bf16.mxu0 0
          %4107 = vmatpush1.bf16.msra.mxu0 0
          %4108 = vmatprep.subr.bf16.mxu0 0
          %4109 = vmatpush1.bf16.msra.mxu0 0
          %4110 = vmatprep.subr.bf16.mxu0 0
          %4111 = vmatpush1.bf16.msra.mxu0 0
          %4112 = vmatprep.mubr.bf16.mxu0 0
          %4113 = vmatmul.mubr.bf16.gmra.mrb[0].mxu0 %v4014
          %v4114 = vpop.f32.mrb[0].mxu0
          %v4115 = vadd.f32 0.0, %v4114
          %v4116 = vpop.f32.mrb[0].mxu0
          %v4117 = vpop.f32.mrb[0].mxu0
          %v4118 = vpop.f32.mrb[0].mxu0
          %4119 = vdwg.mxu0
          %v4136 = vunpack.c.l.b16 %v3996
          %v4137 = vunpack.c.l.b16 %v3997
          %v4138 = vunpack.c.l.b16 %v3998
          %v4139 = vunpack.c.l.b16 %v3999
          %v4140 = vunpack.c.l.b16 %v4000
          %v4141 = vunpack.c.l.b16 %v4001
          %v4142 = vunpack.c.l.b16 %v4002
          %v4143 = vunpack.c.l.b16 %v4003
          %v4144 = vunpack.c.l.b16 %v4004
          %v4145 = vunpack.c.l.b16 %v4005
          %v4146 = vunpack.c.l.b16 %v4006
          %v4147 = vunpack.c.l.b16 %v4007
          %v4148 = vunpack.c.l.b16 %v4008
          %v4149 = vunpack.c.l.b16 %v4009
          %v4150 = vunpack.c.l.b16 %v4010
          %v4151 = vunpack.c.l.b16 %v4011
          %v4152 = vpack.c.b16 %v4137, %v4136
          %v4153 = vpack.c.b16 %v4139, %v4138
          %v4154 = vpack.c.b16 %v4141, %v4140
          %v4155 = vpack.c.b16 %v4143, %v4142
          %v4156 = vpack.c.b16 %v4145, %v4144
          %v4157 = vpack.c.b16 %v4147, %v4146
          %v4158 = vpack.c.b16 %v4149, %v4148
          %v4159 = vpack.c.b16 %v4151, %v4150
          %4168 = vmatprep.subr.bf16.mxu0 0
          %4169 = vmatpush1.bf16.msra.mxu0 %v4152
          %4170 = vmatprep.subr.bf16.mxu0 0
          %4171 = vmatpush1.bf16.msra.mxu0 %v4153
          %4172 = vmatprep.subr.bf16.mxu0 0
          %4173 = vmatpush1.bf16.msra.mxu0 %v4154
          %4174 = vmatprep.subr.bf16.mxu0 0
          %4175 = vmatpush1.bf16.msra.mxu0 %v4155
          %4176 = vmatprep.subr.bf16.mxu0 0
          %4177 = vmatpush1.bf16.msra.mxu0 %v4156
          %4178 = vmatprep.subr.bf16.mxu0 0
          %4179 = vmatpush1.bf16.msra.mxu0 %v4157
          %4180 = vmatprep.subr.bf16.mxu0 0
          %4181 = vmatpush1.bf16.msra.mxu0 %v4158
          %4182 = vmatprep.subr.bf16.mxu0 0
          %4183 = vmatpush1.bf16.msra.mxu0 %v4159
          %4184 = vmatprep.subr.bf16.mxu0 0
          %4185 = vmatpush1.bf16.msra.mxu0 0
          %4186 = vmatprep.subr.bf16.mxu0 0
          %4187 = vmatpush1.bf16.msra.mxu0 0
          %4188 = vmatprep.subr.bf16.mxu0 0
          %4189 = vmatpush1.bf16.msra.mxu0 0
          %4190 = vmatprep.subr.bf16.mxu0 0
          %4191 = vmatpush1.bf16.msra.mxu0 0
          %4192 = vmatprep.subr.bf16.mxu0 0
          %4193 = vmatpush1.bf16.msra.mxu0 0
          %4194 = vmatprep.subr.bf16.mxu0 0
          %4195 = vmatpush1.bf16.msra.mxu0 0
          %4196 = vmatprep.subr.bf16.mxu0 0
          %4197 = vmatpush1.bf16.msra.mxu0 0
          %4198 = vmatprep.subr.bf16.mxu0 0
          %4199 = vmatpush1.bf16.msra.mxu0 0
          %4200 = vmatprep.mubr.bf16.mxu0 0
          %4201 = vmatmul.mubr.bf16.gmra.mrb[0].mxu0 %v3995
          %v4202 = vpop.f32.mrb[0].mxu0
          %v4203 = vadd.f32 %v4115, %v4202
          %v4204 = vpop.f32.mrb[0].mxu0
          %v4205 = vpop.f32.mrb[0].mxu0
          %v4206 = vpop.f32.mrb[0].mxu0
          %4207 = vdwg.mxu0
          %s4208 = scalar_lea.vmem [#allocation5], 4
          %v4209 = vld [vmem:[%s4208] sm:$0x3]
          %v4210 = vpack.c.bf16 %v4209, %v4209
          %s4211 = scalar_lea.vmem %s4, 128
          %v4212 = vld [vmem:[%s4211] sm:$0xf]
          %v4213 = vld [vmem:[%s4211 + $0x4] sm:$0xf]
          %v4214 = vld [vmem:[%s4211 + $0x8] sm:$0xf]
          %v4215 = vld [vmem:[%s4211 + $0xc] sm:$0xf]
          %v4216 = vld [vmem:[%s4211 + $0x10] sm:$0xf]
          %v4217 = vld [vmem:[%s4211 + $0x14] sm:$0xf]
          %v4218 = vld [vmem:[%s4211 + $0x18] sm:$0xf]
          %v4219 = vld [vmem:[%s4211 + $0x1c] sm:$0xf]
          %v4220 = vld [vmem:[%s4211 + $0x20] sm:$0xf]
          %v4221 = vld [vmem:[%s4211 + $0x24] sm:$0xf]
          %v4222 = vld [vmem:[%s4211 + $0x28] sm:$0xf]
          %v4223 = vld [vmem:[%s4211 + $0x2c] sm:$0xf]
          %v4224 = vld [vmem:[%s4211 + $0x30] sm:$0xf]
          %v4225 = vld [vmem:[%s4211 + $0x34] sm:$0xf]
          %v4226 = vld [vmem:[%s4211 + $0x38] sm:$0xf]
          %v4227 = vld [vmem:[%s4211 + $0x3c] sm:$0xf]
          %v4244 = vunpack.c.l.b16 %v4212
          %v4245 = vunpack.c.l.b16 %v4213
          %v4246 = vunpack.c.l.b16 %v4214
          %v4247 = vunpack.c.l.b16 %v4215
          %v4248 = vunpack.c.l.b16 %v4216
          %v4249 = vunpack.c.l.b16 %v4217
          %v4250 = vunpack.c.l.b16 %v4218
          %v4251 = vunpack.c.l.b16 %v4219
          %v4252 = vunpack.c.l.b16 %v4220
          %v4253 = vunpack.c.l.b16 %v4221
          %v4254 = vunpack.c.l.b16 %v4222
          %v4255 = vunpack.c.l.b16 %v4223
          %v4256 = vunpack.c.l.b16 %v4224
          %v4257 = vunpack.c.l.b16 %v4225
          %v4258 = vunpack.c.l.b16 %v4226
          %v4259 = vunpack.c.l.b16 %v4227
          %v4260 = vpack.c.b16 %v4245, %v4244
          %v4261 = vpack.c.b16 %v4247, %v4246
          %v4262 = vpack.c.b16 %v4249, %v4248
          %v4263 = vpack.c.b16 %v4251, %v4250
          %v4264 = vpack.c.b16 %v4253, %v4252
          %v4265 = vpack.c.b16 %v4255, %v4254
          %v4266 = vpack.c.b16 %v4257, %v4256
          %v4267 = vpack.c.b16 %v4259, %v4258
          %4276 = vmatprep.subr.bf16.mxu0 0
          %4277 = vmatpush1.bf16.msra.mxu0 %v4260
          %4278 = vmatprep.subr.bf16.mxu0 0
          %4279 = vmatpush1.bf16.msra.mxu0 %v4261
          %4280 = vmatprep.subr.bf16.mxu0 0
          %4281 = vmatpush1.bf16.msra.mxu0 %v4262
          %4282 = vmatprep.subr.bf16.mxu0 0
          %4283 = vmatpush1.bf16.msra.mxu0 %v4263
          %4284 = vmatprep.subr.bf16.mxu0 0
          %4285 = vmatpush1.bf16.msra.mxu0 %v4264
          %4286 = vmatprep.subr.bf16.mxu0 0
          %4287 = vmatpush1.bf16.msra.mxu0 %v4265
          %4288 = vmatprep.subr.bf16.mxu0 0
          %4289 = vmatpush1.bf16.msra.mxu0 %v4266
          %4290 = vmatprep.subr.bf16.mxu0 0
          %4291 = vmatpush1.bf16.msra.mxu0 %v4267
          %4292 = vmatprep.subr.bf16.mxu0 0
          %4293 = vmatpush1.bf16.msra.mxu0 0
          %4294 = vmatprep.subr.bf16.mxu0 0
          %4295 = vmatpush1.bf16.msra.mxu0 0
          %4296 = vmatprep.subr.bf16.mxu0 0
          %4297 = vmatpush1.bf16.msra.mxu0 0
          %4298 = vmatprep.subr.bf16.mxu0 0
          %4299 = vmatpush1.bf16.msra.mxu0 0
          %4300 = vmatprep.subr.bf16.mxu0 0
          %4301 = vmatpush1.bf16.msra.mxu0 0
          %4302 = vmatprep.subr.bf16.mxu0 0
          %4303 = vmatpush1.bf16.msra.mxu0 0
          %4304 = vmatprep.subr.bf16.mxu0 0
          %4305 = vmatpush1.bf16.msra.mxu0 0
          %4306 = vmatprep.subr.bf16.mxu0 0
          %4307 = vmatpush1.bf16.msra.mxu0 0
          %4308 = vmatprep.mubr.bf16.mxu0 0
          %4309 = vmatmul.mubr.bf16.gmra.mrb[0].mxu0 %v4210
          %v4310 = vpop.f32.mrb[0].mxu0
          %v4311 = vadd.f32 0.0, %v4310
          %v4312 = vpop.f32.mrb[0].mxu0
          %v4313 = vpop.f32.mrb[0].mxu0
          %v4314 = vpop.f32.mrb[0].mxu0
          %4315 = vdwg.mxu0
          %v4316 = vadd.f32 %v4203, %v4311
          %s4317 = scalar_lea.vmem [#allocation5], 6
          %v4318 = vld [vmem:[%s4317] sm:$0x3]
          %v4319 = vpack.c.bf16 %v4318, %v4318
          %s4320 = scalar_lea.vmem %s4, 192
          %v4321 = vld [vmem:[%s4320] sm:$0xf]
          %v4322 = vld [vmem:[%s4320 + $0x4] sm:$0xf]
          %v4323 = vld [vmem:[%s4320 + $0x8] sm:$0xf]
          %v4324 = vld [vmem:[%s4320 + $0xc] sm:$0xf]
          %v4325 = vld [vmem:[%s4320 + $0x10] sm:$0xf]
          %v4326 = vld [vmem:[%s4320 + $0x14] sm:$0xf]
          %v4327 = vld [vmem:[%s4320 + $0x18] sm:$0xf]
          %v4328 = vld [vmem:[%s4320 + $0x1c] sm:$0xf]
          %v4329 = vld [vmem:[%s4320 + $0x20] sm:$0xf]
          %v4330 = vld [vmem:[%s4320 + $0x24] sm:$0xf]
          %v4331 = vld [vmem:[%s4320 + $0x28] sm:$0xf]
          %v4332 = vld [vmem:[%s4320 + $0x2c] sm:$0xf]
          %v4333 = vld [vmem:[%s4320 + $0x30] sm:$0xf]
          %v4334 = vld [vmem:[%s4320 + $0x34] sm:$0xf]
          %v4335 = vld [vmem:[%s4320 + $0x38] sm:$0xf]
          %v4336 = vld [vmem:[%s4320 + $0x3c] sm:$0xf]
          %v4353 = vunpack.c.l.b16 %v4321
          %v4354 = vunpack.c.l.b16 %v4322
          %v4355 = vunpack.c.l.b16 %v4323
          %v4356 = vunpack.c.l.b16 %v4324
          %v4357 = vunpack.c.l.b16 %v4325
          %v4358 = vunpack.c.l.b16 %v4326
          %v4359 = vunpack.c.l.b16 %v4327
          %v4360 = vunpack.c.l.b16 %v4328
          %v4361 = vunpack.c.l.b16 %v4329
          %v4362 = vunpack.c.l.b16 %v4330
          %v4363 = vunpack.c.l.b16 %v4331
          %v4364 = vunpack.c.l.b16 %v4332
          %v4365 = vunpack.c.l.b16 %v4333
          %v4366 = vunpack.c.l.b16 %v4334
          %v4367 = vunpack.c.l.b16 %v4335
          %v4368 = vunpack.c.l.b16 %v4336
          %v4369 = vpack.c.b16 %v4354, %v4353
          %v4370 = vpack.c.b16 %v4356, %v4355
          %v4371 = vpack.c.b16 %v4358, %v4357
          %v4372 = vpack.c.b16 %v4360, %v4359
          %v4373 = vpack.c.b16 %v4362, %v4361
          %v4374 = vpack.c.b16 %v4364, %v4363
          %v4375 = vpack.c.b16 %v4366, %v4365
          %v4376 = vpack.c.b16 %v4368, %v4367
          %4385 = vmatprep.subr.bf16.mxu0 0
          %4386 = vmatpush1.bf16.msra.mxu0 %v4369
          %4387 = vmatprep.subr.bf16.mxu0 0
          %4388 = vmatpush1.bf16.msra.mxu0 %v4370
          %4389 = vmatprep.subr.bf16.mxu0 0
          %4390 = vmatpush1.bf16.msra.mxu0 %v4371
          %4391 = vmatprep.subr.bf16.mxu0 0
          %4392 = vmatpush1.bf16.msra.mxu0 %v4372
          %4393 = vmatprep.subr.bf16.mxu0 0
          %4394 = vmatpush1.bf16.msra.mxu0 %v4373
          %4395 = vmatprep.subr.bf16.mxu0 0
          %4396 = vmatpush1.bf16.msra.mxu0 %v4374
          %4397 = vmatprep.subr.bf16.mxu0 0
          %4398 = vmatpush1.bf16.msra.mxu0 %v4375
          %4399 = vmatprep.subr.bf16.mxu0 0
          %4400 = vmatpush1.bf16.msra.mxu0 %v4376
          %4401 = vmatprep.subr.bf16.mxu0 0
          %4402 = vmatpush1.bf16.msra.mxu0 0
          %4403 = vmatprep.subr.bf16.mxu0 0
          %4404 = vmatpush1.bf16.msra.mxu0 0
          %4405 = vmatprep.subr.bf16.mxu0 0
          %4406 = vmatpush1.bf16.msra.mxu0 0
          %4407 = vmatprep.subr.bf16.mxu0 0
          %4408 = vmatpush1.bf16.msra.mxu0 0
          %4409 = vmatprep.subr.bf16.mxu0 0
          %4410 = vmatpush1.bf16.msra.mxu0 0
          %4411 = vmatprep.subr.bf16.mxu0 0
          %4412 = vmatpush1.bf16.msra.mxu0 0
          %4413 = vmatprep.subr.bf16.mxu0 0
          %4414 = vmatpush1.bf16.msra.mxu0 0
          %4415 = vmatprep.subr.bf16.mxu0 0
          %4416 = vmatpush1.bf16.msra.mxu0 0
          %4417 = vmatprep.mubr.bf16.mxu0 0
          %4418 = vmatmul.mubr.bf16.gmra.mrb[0].mxu0 %v4319
          %v4419 = vpop.f32.mrb[0].mxu0
          %v4420 = vadd.f32 0.0, %v4419
          %v4421 = vpop.f32.mrb[0].mxu0
          %v4422 = vpop.f32.mrb[0].mxu0
          %v4423 = vpop.f32.mrb[0].mxu0
          %4424 = vdwg.mxu0
          %v4425 = vadd.f32 %v4316, %v4420
          %s4426 = scalar_lea.vmem [#allocation5], 8
          %v4427 = vld [vmem:[%s4426] sm:$0x3]
          %v4428 = vpack.c.bf16 %v4427, %v4427
          %s4429 = scalar_lea.vmem %s4, 256
          %v4430 = vld [vmem:[%s4429] sm:$0xf]
          %v4431 = vld [vmem:[%s4429 + $0x4] sm:$0xf]
          %v4432 = vld [vmem:[%s4429 + $0x8] sm:$0xf]
          %v4433 = vld [vmem:[%s4429 + $0xc] sm:$0xf]
          %v4434 = vld [vmem:[%s4429 + $0x10] sm:$0xf]
          %v4435 = vld [vmem:[%s4429 + $0x14] sm:$0xf]
          %v4436 = vld [vmem:[%s4429 + $0x18] sm:$0xf]
          %v4437 = vld [vmem:[%s4429 + $0x1c] sm:$0xf]
          %v4438 = vld [vmem:[%s4429 + $0x20] sm:$0xf]
          %v4439 = vld [vmem:[%s4429 + $0x24] sm:$0xf]
          %v4440 = vld [vmem:[%s4429 + $0x28] sm:$0xf]
          %v4441 = vld [vmem:[%s4429 + $0x2c] sm:$0xf]
          %v4442 = vld [vmem:[%s4429 + $0x30] sm:$0xf]
          %v4443 = vld [vmem:[%s4429 + $0x34] sm:$0xf]
          %v4444 = vld [vmem:[%s4429 + $0x38] sm:$0xf]
          %v4445 = vld [vmem:[%s4429 + $0x3c] sm:$0xf]
          %v4462 = vunpack.c.l.b16 %v4430
          %v4463 = vunpack.c.l.b16 %v4431
          %v4464 = vunpack.c.l.b16 %v4432
          %v4465 = vunpack.c.l.b16 %v4433
          %v4466 = vunpack.c.l.b16 %v4434
          %v4467 = vunpack.c.l.b16 %v4435
          %v4468 = vunpack.c.l.b16 %v4436
          %v4469 = vunpack.c.l.b16 %v4437
          %v4470 = vunpack.c.l.b16 %v4438
          %v4471 = vunpack.c.l.b16 %v4439
          %v4472 = vunpack.c.l.b16 %v4440
          %v4473 = vunpack.c.l.b16 %v4441
          %v4474 = vunpack.c.l.b16 %v4442
          %v4475 = vunpack.c.l.b16 %v4443
          %v4476 = vunpack.c.l.b16 %v4444
          %v4477 = vunpack.c.l.b16 %v4445
          %v4478 = vpack.c.b16 %v4463, %v4462
          %v4479 = vpack.c.b16 %v4465, %v4464
          %v4480 = vpack.c.b16 %v4467, %v4466
          %v4481 = vpack.c.b16 %v4469, %v4468
          %v4482 = vpack.c.b16 %v4471, %v4470
          %v4483 = vpack.c.b16 %v4473, %v4472
          %v4484 = vpack.c.b16 %v4475, %v4474
          %v4485 = vpack.c.b16 %v4477, %v4476
          %4494 = vmatprep.subr.bf16.mxu0 0
          %4495 = vmatpush1.bf16.msra.mxu0 %v4478
          %4496 = vmatprep.subr.bf16.mxu0 0
          %4497 = vmatpush1.bf16.msra.mxu0 %v4479
          %4498 = vmatprep.subr.bf16.mxu0 0
          %4499 = vmatpush1.bf16.msra.mxu0 %v4480
          %4500 = vmatprep.subr.bf16.mxu0 0
          %4501 = vmatpush1.bf16.msra.mxu0 %v4481
          %4502 = vmatprep.subr.bf16.mxu0 0
          %4503 = vmatpush1.bf16.msra.mxu0 %v4482
          %4504 = vmatprep.subr.bf16.mxu0 0
          %4505 = vmatpush1.bf16.msra.mxu0 %v4483
          %4506 = vmatprep.subr.bf16.mxu0 0
          %4507 = vmatpush1.bf16.msra.mxu0 %v4484
          %4508 = vmatprep.subr.bf16.mxu0 0
          %4509 = vmatpush1.bf16.msra.mxu0 %v4485
          %4510 = vmatprep.subr.bf16.mxu0 0
          %4511 = vmatpush1.bf16.msra.mxu0 0
          %4512 = vmatprep.subr.bf16.mxu0 0
          %4513 = vmatpush1.bf16.msra.mxu0 0
          %4514 = vmatprep.subr.bf16.mxu0 0
          %4515 = vmatpush1.bf16.msra.mxu0 0
          %4516 = vmatprep.subr.bf16.mxu0 0
          %4517 = vmatpush1.bf16.msra.mxu0 0
          %4518 = vmatprep.subr.bf16.mxu0 0
          %4519 = vmatpush1.bf16.msra.mxu0 0
          %4520 = vmatprep.subr.bf16.mxu0 0
          %4521 = vmatpush1.bf16.msra.mxu0 0
          %4522 = vmatprep.subr.bf16.mxu0 0
          %4523 = vmatpush1.bf16.msra.mxu0 0
          %4524 = vmatprep.subr.bf16.mxu0 0
          %4525 = vmatpush1.bf16.msra.mxu0 0
          %4526 = vmatprep.mubr.bf16.mxu0 0
          %4527 = vmatmul.mubr.bf16.gmra.mrb[0].mxu0 %v4428
          %v4528 = vpop.f32.mrb[0].mxu0
          %v4529 = vadd.f32 0.0, %v4528
          %v4530 = vpop.f32.mrb[0].mxu0
          %v4531 = vpop.f32.mrb[0].mxu0
          %v4532 = vpop.f32.mrb[0].mxu0
          %4533 = vdwg.mxu0
          %v4534 = vadd.f32 %v4425, %v4529
          %s4535 = scalar_lea.vmem [#allocation5], 10
          %v4536 = vld [vmem:[%s4535] sm:$0x3]
          %v4537 = vpack.c.bf16 %v4536, %v4536
          %s4538 = scalar_lea.vmem %s4, 320
          %v4539 = vld [vmem:[%s4538] sm:$0xf]
          %v4540 = vld [vmem:[%s4538 + $0x4] sm:$0xf]
          %v4541 = vld [vmem:[%s4538 + $0x8] sm:$0xf]
          %v4542 = vld [vmem:[%s4538 + $0xc] sm:$0xf]
          %v4543 = vld [vmem:[%s4538 + $0x10] sm:$0xf]
          %v4544 = vld [vmem:[%s4538 + $0x14] sm:$0xf]
          %v4545 = vld [vmem:[%s4538 + $0x18] sm:$0xf]
          %v4546 = vld [vmem:[%s4538 + $0x1c] sm:$0xf]
          %v4547 = vld [vmem:[%s4538 + $0x20] sm:$0xf]
          %v4548 = vld [vmem:[%s4538 + $0x24] sm:$0xf]
          %v4549 = vld [vmem:[%s4538 + $0x28] sm:$0xf]
          %v4550 = vld [vmem:[%s4538 + $0x2c] sm:$0xf]
          %v4551 = vld [vmem:[%s4538 + $0x30] sm:$0xf]
          %v4552 = vld [vmem:[%s4538 + $0x34] sm:$0xf]
          %v4553 = vld [vmem:[%s4538 + $0x38] sm:$0xf]
          %v4554 = vld [vmem:[%s4538 + $0x3c] sm:$0xf]
          %v4571 = vunpack.c.l.b16 %v4539
          %v4572 = vunpack.c.l.b16 %v4540
          %v4573 = vunpack.c.l.b16 %v4541
          %v4574 = vunpack.c.l.b16 %v4542
          %v4575 = vunpack.c.l.b16 %v4543
          %v4576 = vunpack.c.l.b16 %v4544
          %v4577 = vunpack.c.l.b16 %v4545
          %v4578 = vunpack.c.l.b16 %v4546
          %v4579 = vunpack.c.l.b16 %v4547
          %v4580 = vunpack.c.l.b16 %v4548
          %v4581 = vunpack.c.l.b16 %v4549
          %v4582 = vunpack.c.l.b16 %v4550
          %v4583 = vunpack.c.l.b16 %v4551
          %v4584 = vunpack.c.l.b16 %v4552
          %v4585 = vunpack.c.l.b16 %v4553
          %v4586 = vunpack.c.l.b16 %v4554
          %v4587 = vpack.c.b16 %v4572, %v4571
          %v4588 = vpack.c.b16 %v4574, %v4573
          %v4589 = vpack.c.b16 %v4576, %v4575
          %v4590 = vpack.c.b16 %v4578, %v4577
          %v4591 = vpack.c.b16 %v4580, %v4579
          %v4592 = vpack.c.b16 %v4582, %v4581
          %v4593 = vpack.c.b16 %v4584, %v4583
          %v4594 = vpack.c.b16 %v4586, %v4585
          %4603 = vmatprep.subr.bf16.mxu0 0
          %4604 = vmatpush1.bf16.msra.mxu0 %v4587
          %4605 = vmatprep.subr.bf16.mxu0 0
          %4606 = vmatpush1.bf16.msra.mxu0 %v4588
          %4607 = vmatprep.subr.bf16.mxu0 0
          %4608 = vmatpush1.bf16.msra.mxu0 %v4589
          %4609 = vmatprep.subr.bf16.mxu0 0
          %4610 = vmatpush1.bf16.msra.mxu0 %v4590
          %4611 = vmatprep.subr.bf16.mxu0 0
          %4612 = vmatpush1.bf16.msra.mxu0 %v4591
          %4613 = vmatprep.subr.bf16.mxu0 0
          %4614 = vmatpush1.bf16.msra.mxu0 %v4592
          %4615 = vmatprep.subr.bf16.mxu0 0
          %4616 = vmatpush1.bf16.msra.mxu0 %v4593
          %4617 = vmatprep.subr.bf16.mxu0 0
          %4618 = vmatpush1.bf16.msra.mxu0 %v4594
          %4619 = vmatprep.subr.bf16.mxu0 0
          %4620 = vmatpush1.bf16.msra.mxu0 0
          %4621 = vmatprep.subr.bf16.mxu0 0
          %4622 = vmatpush1.bf16.msra.mxu0 0
          %4623 = vmatprep.subr.bf16.mxu0 0
          %4624 = vmatpush1.bf16.msra.mxu0 0
          %4625 = vmatprep.subr.bf16.mxu0 0
          %4626 = vmatpush1.bf16.msra.mxu0 0
          %4627 = vmatprep.subr.bf16.mxu0 0
          %4628 = vmatpush1.bf16.msra.mxu0 0
          %4629 = vmatprep.subr.bf16.mxu0 0
          %4630 = vmatpush1.bf16.msra.mxu0 0
          %4631 = vmatprep.subr.bf16.mxu0 0
          %4632 = vmatpush1.bf16.msra.mxu0 0
          %4633 = vmatprep.subr.bf16.mxu0 0
          %4634 = vmatpush1.bf16.msra.mxu0 0
          %4635 = vmatprep.mubr.bf16.mxu0 0
          %4636 = vmatmul.mubr.bf16.gmra.mrb[0].mxu0 %v4537
          %v4637 = vpop.f32.mrb[0].mxu0
          %v4638 = vadd.f32 0.0, %v4637
          %v4639 = vpop.f32.mrb[0].mxu0
          %v4640 = vpop.f32.mrb[0].mxu0
          %v4641 = vpop.f32.mrb[0].mxu0
          %4642 = vdwg.mxu0
          %v4643 = vadd.f32 %v4534, %v4638
          %s4644 = scalar_lea.vmem [#allocation5], 12
          %v4645 = vld [vmem:[%s4644] sm:$0x3]
          %v4646 = vpack.c.bf16 %v4645, %v4645
          %s4647 = scalar_lea.vmem %s4, 384
          %v4648 = vld [vmem:[%s4647] sm:$0xf]
          %v4649 = vld [vmem:[%s4647 + $0x4] sm:$0xf]
          %v4650 = vld [vmem:[%s4647 + $0x8] sm:$0xf]
          %v4651 = vld [vmem:[%s4647 + $0xc] sm:$0xf]
          %v4652 = vld [vmem:[%s4647 + $0x10] sm:$0xf]
          %v4653 = vld [vmem:[%s4647 + $0x14] sm:$0xf]
          %v4654 = vld [vmem:[%s4647 + $0x18] sm:$0xf]
          %v4655 = vld [vmem:[%s4647 + $0x1c] sm:$0xf]
          %v4656 = vld [vmem:[%s4647 + $0x20] sm:$0xf]
          %v4657 = vld [vmem:[%s4647 + $0x24] sm:$0xf]
          %v4658 = vld [vmem:[%s4647 + $0x28] sm:$0xf]
          %v4659 = vld [vmem:[%s4647 + $0x2c] sm:$0xf]
          %v4660 = vld [vmem:[%s4647 + $0x30] sm:$0xf]
          %v4661 = vld [vmem:[%s4647 + $0x34] sm:$0xf]
          %v4662 = vld [vmem:[%s4647 + $0x38] sm:$0xf]
          %v4663 = vld [vmem:[%s4647 + $0x3c] sm:$0xf]
          %v4680 = vunpack.c.l.b16 %v4648
          %v4681 = vunpack.c.l.b16 %v4649
          %v4682 = vunpack.c.l.b16 %v4650
          %v4683 = vunpack.c.l.b16 %v4651
          %v4684 = vunpack.c.l.b16 %v4652
          %v4685 = vunpack.c.l.b16 %v4653
          %v4686 = vunpack.c.l.b16 %v4654
          %v4687 = vunpack.c.l.b16 %v4655
          %v4688 = vunpack.c.l.b16 %v4656
          %v4689 = vunpack.c.l.b16 %v4657
          %v4690 = vunpack.c.l.b16 %v4658
          %v4691 = vunpack.c.l.b16 %v4659
          %v4692 = vunpack.c.l.b16 %v4660
          %v4693 = vunpack.c.l.b16 %v4661
          %v4694 = vunpack.c.l.b16 %v4662
          %v4695 = vunpack.c.l.b16 %v4663
          %v4696 = vpack.c.b16 %v4681, %v4680
          %v4697 = vpack.c.b16 %v4683, %v4682
          %v4698 = vpack.c.b16 %v4685, %v4684
          %v4699 = vpack.c.b16 %v4687, %v4686
          %v4700 = vpack.c.b16 %v4689, %v4688
          %v4701 = vpack.c.b16 %v4691, %v4690
          %v4702 = vpack.c.b16 %v4693, %v4692
          %v4703 = vpack.c.b16 %v4695, %v4694
          %4712 = vmatprep.subr.bf16.mxu0 0
          %4713 = vmatpush1.bf16.msra.mxu0 %v4696
          %4714 = vmatprep.subr.bf16.mxu0 0
          %4715 = vmatpush1.bf16.msra.mxu0 %v4697
          %4716 = vmatprep.subr.bf16.mxu0 0
          %4717 = vmatpush1.bf16.msra.mxu0 %v4698
          %4718 = vmatprep.subr.bf16.mxu0 0
          %4719 = vmatpush1.bf16.msra.mxu0 %v4699
          %4720 = vmatprep.subr.bf16.mxu0 0
          %4721 = vmatpush1.bf16.msra.mxu0 %v4700
          %4722 = vmatprep.subr.bf16.mxu0 0
          %4723 = vmatpush1.bf16.msra.mxu0 %v4701
          %4724 = vmatprep.subr.bf16.mxu0 0
          %4725 = vmatpush1.bf16.msra.mxu0 %v4702
          %4726 = vmatprep.subr.bf16.mxu0 0
          %4727 = vmatpush1.bf16.msra.mxu0 %v4703
          %4728 = vmatprep.subr.bf16.mxu0 0
          %4729 = vmatpush1.bf16.msra.mxu0 0
          %4730 = vmatprep.subr.bf16.mxu0 0
          %4731 = vmatpush1.bf16.msra.mxu0 0
          %4732 = vmatprep.subr.bf16.mxu0 0
          %4733 = vmatpush1.bf16.msra.mxu0 0
          %4734 = vmatprep.subr.bf16.mxu0 0
          %4735 = vmatpush1.bf16.msra.mxu0 0
          %4736 = vmatprep.subr.bf16.mxu0 0
          %4737 = vmatpush1.bf16.msra.mxu0 0
          %4738 = vmatprep.subr.bf16.mxu0 0
          %4739 = vmatpush1.bf16.msra.mxu0 0
          %4740 = vmatprep.subr.bf16.mxu0 0
          %4741 = vmatpush1.bf16.msra.mxu0 0
          %4742 = vmatprep.subr.bf16.mxu0 0
          %4743 = vmatpush1.bf16.msra.mxu0 0
          %4744 = vmatprep.mubr.bf16.mxu0 0
          %4745 = vmatmul.mubr.bf16.gmra.mrb[0].mxu0 %v4646
          %v4746 = vpop.f32.mrb[0].mxu0
          %v4747 = vadd.f32 0.0, %v4746
          %v4748 = vpop.f32.mrb[0].mxu0
          %v4749 = vpop.f32.mrb[0].mxu0
          %v4750 = vpop.f32.mrb[0].mxu0
          %4751 = vdwg.mxu0
          %v4752 = vadd.f32 %v4643, %v4747
          %s4753 = scalar_lea.vmem [#allocation5], 14
          %v4754 = vld [vmem:[%s4753] sm:$0x3]
          %v4755 = vpack.c.bf16 %v4754, %v4754
          %s4756 = scalar_lea.vmem %s4, 448
          %v4757 = vld [vmem:[%s4756] sm:$0xf]
          %v4758 = vld [vmem:[%s4756 + $0x4] sm:$0xf]
          %v4759 = vld [vmem:[%s4756 + $0x8] sm:$0xf]
          %v4760 = vld [vmem:[%s4756 + $0xc] sm:$0xf]
          %v4761 = vld [vmem:[%s4756 + $0x10] sm:$0xf]
          %v4762 = vld [vmem:[%s4756 + $0x14] sm:$0xf]
          %v4763 = vld [vmem:[%s4756 + $0x18] sm:$0xf]
          %v4764 = vld [vmem:[%s4756 + $0x1c] sm:$0xf]
          %v4765 = vld [vmem:[%s4756 + $0x20] sm:$0xf]
          %v4766 = vld [vmem:[%s4756 + $0x24] sm:$0xf]
          %v4767 = vld [vmem:[%s4756 + $0x28] sm:$0xf]
          %v4768 = vld [vmem:[%s4756 + $0x2c] sm:$0xf]
          %v4769 = vld [vmem:[%s4756 + $0x30] sm:$0xf]
          %v4770 = vld [vmem:[%s4756 + $0x34] sm:$0xf]
          %v4771 = vld [vmem:[%s4756 + $0x38] sm:$0xf]
          %v4772 = vld [vmem:[%s4756 + $0x3c] sm:$0xf]
          %v4789 = vunpack.c.l.b16 %v4757
          %v4790 = vunpack.c.l.b16 %v4758
          %v4791 = vunpack.c.l.b16 %v4759
          %v4792 = vunpack.c.l.b16 %v4760
          %v4793 = vunpack.c.l.b16 %v4761
          %v4794 = vunpack.c.l.b16 %v4762
          %v4795 = vunpack.c.l.b16 %v4763
          %v4796 = vunpack.c.l.b16 %v4764
          %v4797 = vunpack.c.l.b16 %v4765
          %v4798 = vunpack.c.l.b16 %v4766
          %v4799 = vunpack.c.l.b16 %v4767
          %v4800 = vunpack.c.l.b16 %v4768
          %v4801 = vunpack.c.l.b16 %v4769
          %v4802 = vunpack.c.l.b16 %v4770
          %v4803 = vunpack.c.l.b16 %v4771
          %v4804 = vunpack.c.l.b16 %v4772
          %v4805 = vpack.c.b16 %v4790, %v4789
          %v4806 = vpack.c.b16 %v4792, %v4791
          %v4807 = vpack.c.b16 %v4794, %v4793
          %v4808 = vpack.c.b16 %v4796, %v4795
          %v4809 = vpack.c.b16 %v4798, %v4797
          %v4810 = vpack.c.b16 %v4800, %v4799
          %v4811 = vpack.c.b16 %v4802, %v4801
          %v4812 = vpack.c.b16 %v4804, %v4803
          %4821 = vmatprep.subr.bf16.mxu0 0
          %4822 = vmatpush1.bf16.msra.mxu0 %v4805
          %4823 = vmatprep.subr.bf16.mxu0 0
          %4824 = vmatpush1.bf16.msra.mxu0 %v4806
          %4825 = vmatprep.subr.bf16.mxu0 0
          %4826 = vmatpush1.bf16.msra.mxu0 %v4807
          %4827 = vmatprep.subr.bf16.mxu0 0
          %4828 = vmatpush1.bf16.msra.mxu0 %v4808
          %4829 = vmatprep.subr.bf16.mxu0 0
          %4830 = vmatpush1.bf16.msra.mxu0 %v4809
          %4831 = vmatprep.subr.bf16.mxu0 0
          %4832 = vmatpush1.bf16.msra.mxu0 %v4810
          %4833 = vmatprep.subr.bf16.mxu0 0
          %4834 = vmatpush1.bf16.msra.mxu0 %v4811
          %4835 = vmatprep.subr.bf16.mxu0 0
          %4836 = vmatpush1.bf16.msra.mxu0 %v4812
          %4837 = vmatprep.subr.bf16.mxu0 0
          %4838 = vmatpush1.bf16.msra.mxu0 0
          %4839 = vmatprep.subr.bf16.mxu0 0
          %4840 = vmatpush1.bf16.msra.mxu0 0
          %4841 = vmatprep.subr.bf16.mxu0 0
          %4842 = vmatpush1.bf16.msra.mxu0 0
          %4843 = vmatprep.subr.bf16.mxu0 0
          %4844 = vmatpush1.bf16.msra.mxu0 0
          %4845 = vmatprep.subr.bf16.mxu0 0
          %4846 = vmatpush1.bf16.msra.mxu0 0
          %4847 = vmatprep.subr.bf16.mxu0 0
          %4848 = vmatpush1.bf16.msra.mxu0 0
          %4849 = vmatprep.subr.bf16.mxu0 0
          %4850 = vmatpush1.bf16.msra.mxu0 0
          %4851 = vmatprep.subr.bf16.mxu0 0
          %4852 = vmatpush1.bf16.msra.mxu0 0
          %4853 = vmatprep.mubr.bf16.mxu0 0
          %4854 = vmatmul.mubr.bf16.gmra.mrb[0].mxu0 %v4755
          %v4855 = vpop.f32.mrb[0].mxu0
          %v4856 = vadd.f32 0.0, %v4855
          %v4857 = vpop.f32.mrb[0].mxu0
          %v4858 = vpop.f32.mrb[0].mxu0
          %v4859 = vpop.f32.mrb[0].mxu0
          %4860 = vdwg.mxu0
          %v4861 = vadd.f32 %v4752, %v4856
          %s4862 = scalar_lea.vmem [#allocation5], 16
          %v4863 = vld [vmem:[%s4862] sm:$0x3]
          %v4864 = vpack.c.bf16 %v4863, %v4863
          %s4865 = scalar_lea.vmem %s4, 512
          %v4866 = vld [vmem:[%s4865] sm:$0xf]
          %v4867 = vld [vmem:[%s4865 + $0x4] sm:$0xf]
          %v4868 = vld [vmem:[%s4865 + $0x8] sm:$0xf]
          %v4869 = vld [vmem:[%s4865 + $0xc] sm:$0xf]
          %v4870 = vld [vmem:[%s4865 + $0x10] sm:$0xf]
          %v4871 = vld [vmem:[%s4865 + $0x14] sm:$0xf]
          %v4872 = vld [vmem:[%s4865 + $0x18] sm:$0xf]
          %v4873 = vld [vmem:[%s4865 + $0x1c] sm:$0xf]
          %v4874 = vld [vmem:[%s4865 + $0x20] sm:$0xf]
          %v4875 = vld [vmem:[%s4865 + $0x24] sm:$0xf]
          %v4876 = vld [vmem:[%s4865 + $0x28] sm:$0xf]
          %v4877 = vld [vmem:[%s4865 + $0x2c] sm:$0xf]
          %v4878 = vld [vmem:[%s4865 + $0x30] sm:$0xf]
          %v4879 = vld [vmem:[%s4865 + $0x34] sm:$0xf]
          %v4880 = vld [vmem:[%s4865 + $0x38] sm:$0xf]
          %v4881 = vld [vmem:[%s4865 + $0x3c] sm:$0xf]
          %v4898 = vunpack.c.l.b16 %v4866
          %v4899 = vunpack.c.l.b16 %v4867
          %v4900 = vunpack.c.l.b16 %v4868
          %v4901 = vunpack.c.l.b16 %v4869
          %v4902 = vunpack.c.l.b16 %v4870
          %v4903 = vunpack.c.l.b16 %v4871
          %v4904 = vunpack.c.l.b16 %v4872
          %v4905 = vunpack.c.l.b16 %v4873
          %v4906 = vunpack.c.l.b16 %v4874
          %v4907 = vunpack.c.l.b16 %v4875
          %v4908 = vunpack.c.l.b16 %v4876
          %v4909 = vunpack.c.l.b16 %v4877
          %v4910 = vunpack.c.l.b16 %v4878
          %v4911 = vunpack.c.l.b16 %v4879
          %v4912 = vunpack.c.l.b16 %v4880
          %v4913 = vunpack.c.l.b16 %v4881
          %v4914 = vpack.c.b16 %v4899, %v4898
          %v4915 = vpack.c.b16 %v4901, %v4900
          %v4916 = vpack.c.b16 %v4903, %v4902
          %v4917 = vpack.c.b16 %v4905, %v4904
          %v4918 = vpack.c.b16 %v4907, %v4906
          %v4919 = vpack.c.b16 %v4909, %v4908
          %v4920 = vpack.c.b16 %v4911, %v4910
          %v4921 = vpack.c.b16 %v4913, %v4912
          %4930 = vmatprep.subr.bf16.mxu0 0
          %4931 = vmatpush1.bf16.msra.mxu0 %v4914
          %4932 = vmatprep.subr.bf16.mxu0 0
          %4933 = vmatpush1.bf16.msra.mxu0 %v4915
          %4934 = vmatprep.subr.bf16.mxu0 0
          %4935 = vmatpush1.bf16.msra.mxu0 %v4916
          %4936 = vmatprep.subr.bf16.mxu0 0
          %4937 = vmatpush1.bf16.msra.mxu0 %v4917
          %4938 = vmatprep.subr.bf16.mxu0 0
          %4939 = vmatpush1.bf16.msra.mxu0 %v4918
          %4940 = vmatprep.subr.bf16.mxu0 0
          %4941 = vmatpush1.bf16.msra.mxu0 %v4919
          %4942 = vmatprep.subr.bf16.mxu0 0
          %4943 = vmatpush1.bf16.msra.mxu0 %v4920
          %4944 = vmatprep.subr.bf16.mxu0 0
          %4945 = vmatpush1.bf16.msra.mxu0 %v4921
          %4946 = vmatprep.subr.bf16.mxu0 0
          %4947 = vmatpush1.bf16.msra.mxu0 0
          %4948 = vmatprep.subr.bf16.mxu0 0
          %4949 = vmatpush1.bf16.msra.mxu0 0
          %4950 = vmatprep.subr.bf16.mxu0 0
          %4951 = vmatpush1.bf16.msra.mxu0 0
          %4952 = vmatprep.subr.bf16.mxu0 0
          %4953 = vmatpush1.bf16.msra.mxu0 0
          %4954 = vmatprep.subr.bf16.mxu0 0
          %4955 = vmatpush1.bf16.msra.mxu0 0
          %4956 = vmatprep.subr.bf16.mxu0 0
          %4957 = vmatpush1.bf16.msra.mxu0 0
          %4958 = vmatprep.subr.bf16.mxu0 0
          %4959 = vmatpush1.bf16.msra.mxu0 0
          %4960 = vmatprep.subr.bf16.mxu0 0
          %4961 = vmatpush1.bf16.msra.mxu0 0
          %4962 = vmatprep.mubr.bf16.mxu0 0
          %4963 = vmatmul.mubr.bf16.gmra.mrb[0].mxu0 %v4864
          %v4964 = vpop.f32.mrb[0].mxu0
          %v4965 = vadd.f32 0.0, %v4964
          %v4966 = vpop.f32.mrb[0].mxu0
          %v4967 = vpop.f32.mrb[0].mxu0
          %v4968 = vpop.f32.mrb[0].mxu0
          %4969 = vdwg.mxu0
          %v4970 = vadd.f32 %v4861, %v4965
          %s4971 = scalar_lea.vmem [#allocation5], 18
          %v4972 = vld [vmem:[%s4971] sm:$0x3]
          %v4973 = vpack.c.bf16 %v4972, %v4972
          %s4974 = scalar_lea.vmem %s4, 576
          %v4975 = vld [vmem:[%s4974] sm:$0xf]
          %v4976 = vld [vmem:[%s4974 + $0x4] sm:$0xf]
          %v4977 = vld [vmem:[%s4974 + $0x8] sm:$0xf]
          %v4978 = vld [vmem:[%s4974 + $0xc] sm:$0xf]
          %v4979 = vld [vmem:[%s4974 + $0x10] sm:$0xf]
          %v4980 = vld [vmem:[%s4974 + $0x14] sm:$0xf]
          %v4981 = vld [vmem:[%s4974 + $0x18] sm:$0xf]
          %v4982 = vld [vmem:[%s4974 + $0x1c] sm:$0xf]
          %v4983 = vld [vmem:[%s4974 + $0x20] sm:$0xf]
          %v4984 = vld [vmem:[%s4974 + $0x24] sm:$0xf]
          %v4985 = vld [vmem:[%s4974 + $0x28] sm:$0xf]
          %v4986 = vld [vmem:[%s4974 + $0x2c] sm:$0xf]
          %v4987 = vld [vmem:[%s4974 + $0x30] sm:$0xf]
          %v4988 = vld [vmem:[%s4974 + $0x34] sm:$0xf]
          %v4989 = vld [vmem:[%s4974 + $0x38] sm:$0xf]
          %v4990 = vld [vmem:[%s4974 + $0x3c] sm:$0xf]
          %v5007 = vunpack.c.l.b16 %v4975
          %v5008 = vunpack.c.l.b16 %v4976
          %v5009 = vunpack.c.l.b16 %v4977
          %v5010 = vunpack.c.l.b16 %v4978
          %v5011 = vunpack.c.l.b16 %v4979
          %v5012 = vunpack.c.l.b16 %v4980
          %v5013 = vunpack.c.l.b16 %v4981
          %v5014 = vunpack.c.l.b16 %v4982
          %v5015 = vunpack.c.l.b16 %v4983
          %v5016 = vunpack.c.l.b16 %v4984
          %v5017 = vunpack.c.l.b16 %v4985
          %v5018 = vunpack.c.l.b16 %v4986
          %v5019 = vunpack.c.l.b16 %v4987
          %v5020 = vunpack.c.l.b16 %v4988
          %v5021 = vunpack.c.l.b16 %v4989
          %v5022 = vunpack.c.l.b16 %v4990
          %v5023 = vpack.c.b16 %v5008, %v5007
          %v5024 = vpack.c.b16 %v5010, %v5009
          %v5025 = vpack.c.b16 %v5012, %v5011
          %v5026 = vpack.c.b16 %v5014, %v5013
          %v5027 = vpack.c.b16 %v5016, %v5015
          %v5028 = vpack.c.b16 %v5018, %v5017
          %v5029 = vpack.c.b16 %v5020, %v5019
          %v5030 = vpack.c.b16 %v5022, %v5021
          %5039 = vmatprep.subr.bf16.mxu0 0
          %5040 = vmatpush1.bf16.msra.mxu0 %v5023
          %5041 = vmatprep.subr.bf16.mxu0 0
          %5042 = vmatpush1.bf16.msra.mxu0 %v5024
          %5043 = vmatprep.subr.bf16.mxu0 0
          %5044 = vmatpush1.bf16.msra.mxu0 %v5025
          %5045 = vmatprep.subr.bf16.mxu0 0
          %5046 = vmatpush1.bf16.msra.mxu0 %v5026
          %5047 = vmatprep.subr.bf16.mxu0 0
          %5048 = vmatpush1.bf16.msra.mxu0 %v5027
          %5049 = vmatprep.subr.bf16.mxu0 0
          %5050 = vmatpush1.bf16.msra.mxu0 %v5028
          %5051 = vmatprep.subr.bf16.mxu0 0
          %5052 = vmatpush1.bf16.msra.mxu0 %v5029
          %5053 = vmatprep.subr.bf16.mxu0 0
          %5054 = vmatpush1.bf16.msra.mxu0 %v5030
          %5055 = vmatprep.subr.bf16.mxu0 0
          %5056 = vmatpush1.bf16.msra.mxu0 0
          %5057 = vmatprep.subr.bf16.mxu0 0
          %5058 = vmatpush1.bf16.msra.mxu0 0
          %5059 = vmatprep.subr.bf16.mxu0 0
          %5060 = vmatpush1.bf16.msra.mxu0 0
          %5061 = vmatprep.subr.bf16.mxu0 0
          %5062 = vmatpush1.bf16.msra.mxu0 0
          %5063 = vmatprep.subr.bf16.mxu0 0
          %5064 = vmatpush1.bf16.msra.mxu0 0
          %5065 = vmatprep.subr.bf16.mxu0 0
          %5066 = vmatpush1.bf16.msra.mxu0 0
          %5067 = vmatprep.subr.bf16.mxu0 0
          %5068 = vmatpush1.bf16.msra.mxu0 0
          %5069 = vmatprep.subr.bf16.mxu0 0
          %5070 = vmatpush1.bf16.msra.mxu0 0
          %5071 = vmatprep.mubr.bf16.mxu0 0
          %5072 = vmatmul.mubr.bf16.gmra.mrb[0].mxu0 %v4973
          %v5073 = vpop.f32.mrb[0].mxu0
          %v5074 = vadd.f32 0.0, %v5073
          %v5075 = vpop.f32.mrb[0].mxu0
          %v5076 = vpop.f32.mrb[0].mxu0
          %v5077 = vpop.f32.mrb[0].mxu0
          %5078 = vdwg.mxu0
          %v5079 = vadd.f32 %v4970, %v5074
          %s5080 = scalar_lea.vmem [#allocation5], 20
          %v5081 = vld [vmem:[%s5080] sm:$0x3]
          %v5082 = vpack.c.bf16 %v5081, %v5081
          %s5083 = scalar_lea.vmem %s4, 640
          %v5084 = vld [vmem:[%s5083] sm:$0xf]
          %v5085 = vld [vmem:[%s5083 + $0x4] sm:$0xf]
          %v5086 = vld [vmem:[%s5083 + $0x8] sm:$0xf]
          %v5087 = vld [vmem:[%s5083 + $0xc] sm:$0xf]
          %v5088 = vld [vmem:[%s5083 + $0x10] sm:$0xf]
          %v5089 = vld [vmem:[%s5083 + $0x14] sm:$0xf]
          %v5090 = vld [vmem:[%s5083 + $0x18] sm:$0xf]
          %v5091 = vld [vmem:[%s5083 + $0x1c] sm:$0xf]
          %v5092 = vld [vmem:[%s5083 + $0x20] sm:$0xf]
          %v5093 = vld [vmem:[%s5083 + $0x24] sm:$0xf]
          %v5094 = vld [vmem:[%s5083 + $0x28] sm:$0xf]
          %v5095 = vld [vmem:[%s5083 + $0x2c] sm:$0xf]
          %v5096 = vld [vmem:[%s5083 + $0x30] sm:$0xf]
          %v5097 = vld [vmem:[%s5083 + $0x34] sm:$0xf]
          %v5098 = vld [vmem:[%s5083 + $0x38] sm:$0xf]
          %v5099 = vld [vmem:[%s5083 + $0x3c] sm:$0xf]
          %v5116 = vunpack.c.l.b16 %v5084
          %v5117 = vunpack.c.l.b16 %v5085
          %v5118 = vunpack.c.l.b16 %v5086
          %v5119 = vunpack.c.l.b16 %v5087
          %v5120 = vunpack.c.l.b16 %v5088
          %v5121 = vunpack.c.l.b16 %v5089
          %v5122 = vunpack.c.l.b16 %v5090
          %v5123 = vunpack.c.l.b16 %v5091
          %v5124 = vunpack.c.l.b16 %v5092
          %v5125 = vunpack.c.l.b16 %v5093
          %v5126 = vunpack.c.l.b16 %v5094
          %v5127 = vunpack.c.l.b16 %v5095
          %v5128 = vunpack.c.l.b16 %v5096
          %v5129 = vunpack.c.l.b16 %v5097
          %v5130 = vunpack.c.l.b16 %v5098
          %v5131 = vunpack.c.l.b16 %v5099
          %v5132 = vpack.c.b16 %v5117, %v5116
          %v5133 = vpack.c.b16 %v5119, %v5118
          %v5134 = vpack.c.b16 %v5121, %v5120
          %v5135 = vpack.c.b16 %v5123, %v5122
          %v5136 = vpack.c.b16 %v5125, %v5124
          %v5137 = vpack.c.b16 %v5127, %v5126
          %v5138 = vpack.c.b16 %v5129, %v5128
          %v5139 = vpack.c.b16 %v5131, %v5130
          %5148 = vmatprep.subr.bf16.mxu0 0
          %5149 = vmatpush1.bf16.msra.mxu0 %v5132
          %5150 = vmatprep.subr.bf16.mxu0 0
          %5151 = vmatpush1.bf16.msra.mxu0 %v5133
          %5152 = vmatprep.subr.bf16.mxu0 0
          %5153 = vmatpush1.bf16.msra.mxu0 %v5134
          %5154 = vmatprep.subr.bf16.mxu0 0
          %5155 = vmatpush1.bf16.msra.mxu0 %v5135
          %5156 = vmatprep.subr.bf16.mxu0 0
          %5157 = vmatpush1.bf16.msra.mxu0 %v5136
          %5158 = vmatprep.subr.bf16.mxu0 0
          %5159 = vmatpush1.bf16.msra.mxu0 %v5137
          %5160 = vmatprep.subr.bf16.mxu0 0
          %5161 = vmatpush1.bf16.msra.mxu0 %v5138
          %5162 = vmatprep.subr.bf16.mxu0 0
          %5163 = vmatpush1.bf16.msra.mxu0 %v5139
          %5164 = vmatprep.subr.bf16.mxu0 0
          %5165 = vmatpush1.bf16.msra.mxu0 0
          %5166 = vmatprep.subr.bf16.mxu0 0
          %5167 = vmatpush1.bf16.msra.mxu0 0
          %5168 = vmatprep.subr.bf16.mxu0 0
          %5169 = vmatpush1.bf16.msra.mxu0 0
          %5170 = vmatprep.subr.bf16.mxu0 0
          %5171 = vmatpush1.bf16.msra.mxu0 0
          %5172 = vmatprep.subr.bf16.mxu0 0
          %5173 = vmatpush1.bf16.msra.mxu0 0
          %5174 = vmatprep.subr.bf16.mxu0 0
          %5175 = vmatpush1.bf16.msra.mxu0 0
          %5176 = vmatprep.subr.bf16.mxu0 0
          %5177 = vmatpush1.bf16.msra.mxu0 0
          %5178 = vmatprep.subr.bf16.mxu0 0
          %5179 = vmatpush1.bf16.msra.mxu0 0
          %5180 = vmatprep.mubr.bf16.mxu0 0
          %5181 = vmatmul.mubr.bf16.gmra.mrb[0].mxu0 %v5082
          %v5182 = vpop.f32.mrb[0].mxu0
          %v5183 = vadd.f32 0.0, %v5182
          %v5184 = vpop.f32.mrb[0].mxu0
          %v5185 = vpop.f32.mrb[0].mxu0
          %v5186 = vpop.f32.mrb[0].mxu0
          %5187 = vdwg.mxu0
          %v5188 = vadd.f32 %v5079, %v5183
          %s5189 = scalar_lea.vmem [#allocation5], 22
          %v5190 = vld [vmem:[%s5189] sm:$0x3]
          %v5191 = vpack.c.bf16 %v5190, %v5190
          %s5192 = scalar_lea.vmem %s4, 704
          %v5193 = vld [vmem:[%s5192] sm:$0xf]
          %v5194 = vld [vmem:[%s5192 + $0x4] sm:$0xf]
          %v5195 = vld [vmem:[%s5192 + $0x8] sm:$0xf]
          %v5196 = vld [vmem:[%s5192 + $0xc] sm:$0xf]
          %v5197 = vld [vmem:[%s5192 + $0x10] sm:$0xf]
          %v5198 = vld [vmem:[%s5192 + $0x14] sm:$0xf]
          %v5199 = vld [vmem:[%s5192 + $0x18] sm:$0xf]
          %v5200 = vld [vmem:[%s5192 + $0x1c] sm:$0xf]
          %v5201 = vld [vmem:[%s5192 + $0x20] sm:$0xf]
          %v5202 = vld [vmem:[%s5192 + $0x24] sm:$0xf]
          %v5203 = vld [vmem:[%s5192 + $0x28] sm:$0xf]
          %v5204 = vld [vmem:[%s5192 + $0x2c] sm:$0xf]
          %v5205 = vld [vmem:[%s5192 + $0x30] sm:$0xf]
          %v5206 = vld [vmem:[%s5192 + $0x34] sm:$0xf]
          %v5207 = vld [vmem:[%s5192 + $0x38] sm:$0xf]
          %v5208 = vld [vmem:[%s5192 + $0x3c] sm:$0xf]
          %v5225 = vunpack.c.l.b16 %v5193
          %v5226 = vunpack.c.l.b16 %v5194
          %v5227 = vunpack.c.l.b16 %v5195
          %v5228 = vunpack.c.l.b16 %v5196
          %v5229 = vunpack.c.l.b16 %v5197
          %v5230 = vunpack.c.l.b16 %v5198
          %v5231 = vunpack.c.l.b16 %v5199
          %v5232 = vunpack.c.l.b16 %v5200
          %v5233 = vunpack.c.l.b16 %v5201
          %v5234 = vunpack.c.l.b16 %v5202
          %v5235 = vunpack.c.l.b16 %v5203
          %v5236 = vunpack.c.l.b16 %v5204
          %v5237 = vunpack.c.l.b16 %v5205
          %v5238 = vunpack.c.l.b16 %v5206
          %v5239 = vunpack.c.l.b16 %v5207
          %v5240 = vunpack.c.l.b16 %v5208
          %v5241 = vpack.c.b16 %v5226, %v5225
          %v5242 = vpack.c.b16 %v5228, %v5227
          %v5243 = vpack.c.b16 %v5230, %v5229
          %v5244 = vpack.c.b16 %v5232, %v5231
          %v5245 = vpack.c.b16 %v5234, %v5233
          %v5246 = vpack.c.b16 %v5236, %v5235
          %v5247 = vpack.c.b16 %v5238, %v5237
          %v5248 = vpack.c.b16 %v5240, %v5239
          %5257 = vmatprep.subr.bf16.mxu0 0
          %5258 = vmatpush1.bf16.msra.mxu0 %v5241
          %5259 = vmatprep.subr.bf16.mxu0 0
          %5260 = vmatpush1.bf16.msra.mxu0 %v5242
          %5261 = vmatprep.subr.bf16.mxu0 0
          %5262 = vmatpush1.bf16.msra.mxu0 %v5243
          %5263 = vmatprep.subr.bf16.mxu0 0
          %5264 = vmatpush1.bf16.msra.mxu0 %v5244
          %5265 = vmatprep.subr.bf16.mxu0 0
          %5266 = vmatpush1.bf16.msra.mxu0 %v5245
          %5267 = vmatprep.subr.bf16.mxu0 0
          %5268 = vmatpush1.bf16.msra.mxu0 %v5246
          %5269 = vmatprep.subr.bf16.mxu0 0
          %5270 = vmatpush1.bf16.msra.mxu0 %v5247
          %5271 = vmatprep.subr.bf16.mxu0 0
          %5272 = vmatpush1.bf16.msra.mxu0 %v5248
          %5273 = vmatprep.subr.bf16.mxu0 0
          %5274 = vmatpush1.bf16.msra.mxu0 0
          %5275 = vmatprep.subr.bf16.mxu0 0
          %5276 = vmatpush1.bf16.msra.mxu0 0
          %5277 = vmatprep.subr.bf16.mxu0 0
          %5278 = vmatpush1.bf16.msra.mxu0 0
          %5279 = vmatprep.subr.bf16.mxu0 0
          %5280 = vmatpush1.bf16.msra.mxu0 0
          %5281 = vmatprep.subr.bf16.mxu0 0
          %5282 = vmatpush1.bf16.msra.mxu0 0
          %5283 = vmatprep.subr.bf16.mxu0 0
          %5284 = vmatpush1.bf16.msra.mxu0 0
          %5285 = vmatprep.subr.bf16.mxu0 0
          %5286 = vmatpush1.bf16.msra.mxu0 0
          %5287 = vmatprep.subr.bf16.mxu0 0
          %5288 = vmatpush1.bf16.msra.mxu0 0
          %5289 = vmatprep.mubr.bf16.mxu0 0
          %5290 = vmatmul.mubr.bf16.gmra.mrb[0].mxu0 %v5191
          %v5291 = vpop.f32.mrb[0].mxu0
          %v5292 = vadd.f32 0.0, %v5291
          %v5293 = vpop.f32.mrb[0].mxu0
          %v5294 = vpop.f32.mrb[0].mxu0
          %v5295 = vpop.f32.mrb[0].mxu0
          %5296 = vdwg.mxu0
          %v5297 = vadd.f32 %v5188, %v5292
          %vm5298 = vcmask 50176
          %v5299 = vsel %vm5298, %v5297, -inf
          %5300 = vmax.xlane.f32.xlu0 %v5299
          %v5301 = vpop.xlane.xlu0 %5300
          %v5302 = vsub.f32 %v5297, %v5301
          %v5303 = vmul.f32 %v5302, 1.442695
          %v5304 = vpow.pop %v5303
          %v5305 = vsel %vm5298, %v5304, 0.0
          %5306 = vadd.xlane.f32.xlu0 %v5305
          %v5307 = vpop.xlane.xlu0 %5306
          %v5308 = vrcp.pop %v5307
          %v5309 = vmul.f32 %v5304, %v5308
          %5310 = vst.msk [vmem:[#allocation14] sm:$0x3] %vm5298, %v5309
        $region64: #{lstm_model_forward.1} parent=39 // pred_fallthru
          _
        // Predicated region
        $region65: #{lstm_model_forward.1} parent=39 // pred_check
          %p5311 = pneg %p157
        $region66: #{lstm_model_forward.1} parent=39 // pred_check_branch
          %5313 = sbr.rel (%p5311) target = $region68
        $region67: #{lstm_model_forward.1} parent=39 // pred_region
          %s5315 = ssub.s32 32, 32
          %5316 = vsyncadd [#allocation8], %s5315
          %s5318 = sshll.u32 [#allocation14], 4
          %s5319 = int_to_ptr.vmem [resolvable:$true] %s5318
          %5321 = dma.vmem_to_hbm [thread:$0]  %s5319, 32, %s5, [#allocation8]
        $region68: #{lstm_model_forward.1} parent=39 // pred_fallthru
          _
        // Predicated region
        $region69: #{lstm_model_forward.1} parent=39 // pred_check
          %p5322 = pneg %p157
        $region70: #{lstm_model_forward.1} parent=39 // pred_check_branch
          %5324 = sbr.rel (%p5322) target = $region72
        $region71: #{lstm_model_forward.1} parent=39 // pred_region
          %5325 = dma.done [#allocation8], 32
        $region72: #{lstm_model_forward.1} parent=39 // pred_fallthru
          _
      $region40: #{lstm_model_forward.1} parent=5 // pred_fallthru
        _
      %p5326 = scmp.le.s32.totalorder 2, %s19
      // Predicated region
      $region73: #{lstm_model_forward.1} parent=5 // pred_check
        %p5327 = pneg %p5326
      $region74: #{lstm_model_forward.1} parent=5 // pred_check_branch
        %5329 = sbr.rel (%p5327) target = $region76
      $region75: #{lstm_model_forward.1} parent=5 // pred_region
        %s5330 = ssub.s32 %s19, 2
      $region76: #{lstm_model_forward.1} parent=5 // pred_fallthru
        _
    $region6: #{lstm_model_forward.1} parent=1 // loop_footer
      %s23 = sadd.s32 1, %s19
    $region7: #{lstm_model_forward.1} parent=1 // loop_footer_branch
      %18 = sbr.rel target = $region3
    $region8: #{lstm_model_forward.1} parent=1 // loop_exit
      _
    %5331 = vsyncpa [#allocation7], 1
    %s5332 = scalar_lea.sflag [#allocation7], 1
    %5333 = vsyncpa %s5332, 1
    %5334 = vsyncpa [#allocation10], 1
    %s5335 = scalar_lea.sflag [#allocation10], 1
    %5336 = vsyncpa %s5335, 1
    %5337 = vsyncpa [#allocation13], 1
    %s5338 = scalar_lea.sflag [#allocation13], 1
    %5339 = vsyncpa %s5338, 1
    %5340 = vsyncpa [#allocation8], 1
    %s5341 = scalar_lea.sflag [#allocation8], 1
    %5342 = vsyncpa %s5341, 1

</llo_original>
